<compile_context>
chip_gen: v6e
topology: v6e:2x2x1
jax: 0.10.0
libtpu: 0.0.40
codegen_flags: <defaults>
</compile_context>

<pallas_src>
import functools

import jax
import jax.numpy as jnp
from jax.experimental import pallas as pl
from jax.experimental.pallas import tpu as pltpu

# ----------------------------- config (small) -----------------------------
VOCAB = 100
HIDDEN = 128
N_LAYERS = 2
N_HEADS = 2
HEAD_DIM = HIDDEN // N_HEADS
INTER = 256
MAX_POS = 64
Y_NUM = 5
Y_PAD = 128  # classifier output padded to a full lane width (pad cols masked via -1e9 bias)


# ----------------------------- kernel helpers -----------------------------
def _layer_norm(x, g, b):
    mu = jnp.mean(x, axis=-1, keepdims=True)
    var = jnp.mean((x - mu) * (x - mu), axis=-1, keepdims=True)
    return (x - mu) * jax.lax.rsqrt(var + 1e-12) * g + b


def _gelu(x):
    # TODO(synk): HF BERT uses exact erf-GELU; tanh approximation used here for TPU lowering.
    c = 0.7978845608028654  # sqrt(2/pi)
    return 0.5 * x * (1.0 + jnp.tanh(c * (x + 0.044715 * x * x * x)))


# ----------------------------- fused Pallas kernel -----------------------------
def bert_ner_kernel(
    emb_ref, addmask_ref, emb_ln_g_ref, emb_ln_b_ref,
    wqkv_ref, bqkv_ref, wo_ref, bo_ref, ln1_g_ref, ln1_b_ref,
    w1_ref, b1_ref, w2_ref, b2_ref, ln2_g_ref, ln2_b_ref,
    span_sel_ref, fc_w_ref, fc_b_ref, labels_ref,
    loss_ref,
    *, batch, seq, n_heads, head_dim, n_layers, scale,
):
    hidden = n_heads * head_dim

    # ---- embedding LayerNorm (no dummy zero residual -> no wasted DMA) ----
    x = _layer_norm(emb_ref[...], emb_ln_g_ref[...], emb_ln_b_ref[...])      # (B*S, H)
    addmask = addmask_ref[...]                                               # (B, S), precomputed

    # ---- transformer layers: unrolled, weights + activations stay resident ----
    for l in range(n_layers):
        # fused QKV projection: (B*S, H) @ (H, 3H)
        qkv = jnp.dot(x, wqkv_ref[l], preferred_element_type=jnp.float32) + bqkv_ref[l]
        q = qkv[:, 0 * hidden:1 * hidden]
        k = qkv[:, 1 * hidden:2 * hidden]
        v = qkv[:, 2 * hidden:3 * hidden]

        ctx_rows = []
        for bi in range(batch):
            rows = slice(bi * seq, (bi + 1) * seq)
            qb, kb, vb = q[rows, :], k[rows, :], v[rows, :]                  # (S, H) lane-dense
            mb = addmask[bi:bi + 1, :]                                       # (1, S)
            heads = []
            for h in range(n_heads):
                lanes = slice(h * head_dim, (h + 1) * head_dim)
                qh, kh, vh = qb[:, lanes], kb[:, lanes], vb[:, lanes]        # (S, Dh)
                sc = jax.lax.dot_general(
                    qh, kh, (((1,), (1,)), ((), ())),
                    preferred_element_type=jnp.float32) * scale + mb         # (S, S)
                mx = jnp.max(sc, axis=-1, keepdims=True)
                p = jnp.exp(sc - mx)
                p = p / jnp.sum(p, axis=-1, keepdims=True)
                heads.append(jnp.dot(p, vh, preferred_element_type=jnp.float32))
            ctx_rows.append(jnp.concatenate(heads, axis=-1))                 # (S, H)
        ctx = jnp.concatenate(ctx_rows, axis=0)                              # (B*S, H)

        attn_out = jnp.dot(ctx, wo_ref[l], preferred_element_type=jnp.float32) + bo_ref[l]
        x = _layer_norm(attn_out + x, ln1_g_ref[l], ln1_b_ref[l])

        h1 = jnp.dot(x, w1_ref[l], preferred_element_type=jnp.float32) + b1_ref[l]
        h1 = _gelu(h1)
        ffn = jnp.dot(h1, w2_ref[l], preferred_element_type=jnp.float32) + b2_ref[l]
        x = _layer_norm(ffn + x, ln2_g_ref[l], ln2_b_ref[l])

    # ---- EndpointSpanExtractor(combination='x'): span-start gather via one-hot matmul ----
    temp = jnp.dot(span_sel_ref[...], x, preferred_element_type=jnp.float32)  # (B*n_spans, H)

    # ---- classifier (padded to 128 lanes; pad columns carry -1e9 bias) ----
    logits = jnp.dot(temp, fc_w_ref[...], preferred_element_type=jnp.float32) + fc_b_ref[...]

    # ---- CrossEntropyLoss(ignore_index=-1), mean over valid rows; logits never hit HBM ----
    labels = labels_ref[...]                                                 # (N, 1) int32
    n, cdim = logits.shape
    mx = jnp.max(logits, axis=-1, keepdims=True)
    lse = jnp.log(jnp.sum(jnp.exp(logits - mx), axis=-1, keepdims=True)) + mx
    col = jax.lax.broadcasted_iota(jnp.int32, (n, cdim), dimension=1)
    onehot = (col == labels).astype(jnp.float32)
    picked = jnp.sum(onehot * logits, axis=-1, keepdims=True)
    valid = (labels != -1).astype(jnp.float32)
    loss_ref[0, 0] = jnp.sum((lse - picked) * valid) / jnp.sum(valid)


# ----------------------------- parameters -----------------------------
def init_params(key):
    scale = 0.02
    n_keys = 8 + N_LAYERS * 8
    keys = iter(jax.random.split(key, n_keys))

    def nrm(shape):
        return scale * jax.random.normal(next(keys), shape, dtype=jnp.float32)

    params = {
        "word_emb": nrm((VOCAB, HIDDEN)),
        "pos_emb": nrm((MAX_POS, HIDDEN)),
        "type_emb": nrm((2, HIDDEN)),
        "emb_ln_g": jnp.ones((HIDDEN,), jnp.float32),
        "emb_ln_b": jnp.zeros((HIDDEN,), jnp.float32),
        "fc_w": nrm((HIDDEN, Y_NUM)),
        "fc_b": jnp.zeros((Y_NUM,), jnp.float32),
        "layers": [],
    }
    for _ in range(N_LAYERS):
        params["layers"].append({
            "wq": nrm((HIDDEN, HIDDEN)), "bq": jnp.zeros((HIDDEN,), jnp.float32),
            "wk": nrm((HIDDEN, HIDDEN)), "bk": jnp.zeros((HIDDEN,), jnp.float32),
            "wv": nrm((HIDDEN, HIDDEN)), "bv": jnp.zeros((HIDDEN,), jnp.float32),
            "wo": nrm((HIDDEN, HIDDEN)), "bo": jnp.zeros((HIDDEN,), jnp.float32),
            "ln1_g": jnp.ones((HIDDEN,), jnp.float32), "ln1_b": jnp.zeros((HIDDEN,), jnp.float32),
            "w1": nrm((HIDDEN, INTER)), "b1": jnp.zeros((INTER,), jnp.float32),
            "w2": nrm((INTER, HIDDEN)), "b2": jnp.zeros((HIDDEN,), jnp.float32),
            "ln2_g": jnp.ones((HIDDEN,), jnp.float32), "ln2_b": jnp.zeros((HIDDEN,), jnp.float32),
        })
    return params


def pack_params(params):
    """Stack per-layer weights as (N_LAYERS, ...) and pre-fuse QKV; pad the classifier."""
    L = params["layers"]
    stk = lambda name: jnp.stack([l[name] for l in L])
    row = lambda name: jnp.stack([l[name][None, :] for l in L])
    fc_w = jnp.zeros((HIDDEN, Y_PAD), jnp.float32).at[:, :Y_NUM].set(params["fc_w"])
    fc_b = jnp.full((1, Y_PAD), -1e9, jnp.float32).at[0, :Y_NUM].set(params["fc_b"])
    return {
        "word_emb": params["word_emb"],
        "pos_emb": params["pos_emb"],
        "type_emb": params["type_emb"],
        "emb_ln_g": params["emb_ln_g"].reshape(1, HIDDEN),
        "emb_ln_b": params["emb_ln_b"].reshape(1, HIDDEN),
        "wqkv": jnp.stack([jnp.concatenate([l["wq"], l["wk"], l["wv"]], axis=1) for l in L]),
        "bqkv": jnp.stack([jnp.concatenate([l["bq"], l["bk"], l["bv"]])[None, :] for l in L]),
        "wo": stk("wo"), "bo": row("bo"),
        "ln1_g": row("ln1_g"), "ln1_b": row("ln1_b"),
        "w1": stk("w1"), "b1": row("b1"),
        "w2": stk("w2"), "b2": row("b2"),
        "ln2_g": row("ln2_g"), "ln2_b": row("ln2_b"),
        "fc_w": fc_w, "fc_b": fc_b,
    }


# ----------------------------- forward (BertNER.forward) -----------------------------
@jax.jit
def bert_ner_forward(packed, data_x, bert_mask, data_span, sequence_mask, data_y):
    # sequence_mask is unused in the PyTorch forward (only used in predict) — kept for parity.
    del sequence_mask
    b, s = data_x.shape

    # Embeddings (gather is glue; LayerNorm runs inside the fused kernel).
    we = packed["word_emb"][data_x]                       # (B, S, H)
    pe = packed["pos_emb"][jnp.arange(s)]                 # (S, H)
    te = packed["type_emb"][0]                            # (H,)
    emb = (we + pe[None, :, :] + te[None, None, :]).reshape(b * s, HIDDEN)

    # Additive attention mask precomputed once (HF-style).
    addmask = (1.0 - bert_mask.astype(jnp.float32)) * -10000.0            # (B, S)

    # Span-start one-hot selector (EndpointSpanExtractor combination='x').
    starts = data_span[..., 0]                                            # (B, n_spans)
    flat = (jnp.arange(b)[:, None] * s + starts).reshape(-1)              # (B*n_spans,)
    span_sel = (flat[:, None] == jnp.arange(b * s)[None, :]).astype(jnp.float32)

    labels = data_y.reshape(-1, 1).astype(jnp.int32)                      # (B*n_spans, 1)

    kernel = functools.partial(
        bert_ner_kernel, batch=b, seq=s, n_heads=N_HEADS, head_dim=HEAD_DIM,
        n_layers=N_LAYERS, scale=1.0 / (HEAD_DIM ** 0.5))

    loss = pl.pallas_call(
        kernel,
        out_shape=jax.ShapeDtypeStruct((1, 1), jnp.float32),
        out_specs=pl.BlockSpec(memory_space=pltpu.MemorySpace.SMEM),
        compiler_params=pltpu.CompilerParams(vmem_limit_bytes=32 * 1024 * 1024),
    )(emb, addmask, packed["emb_ln_g"], packed["emb_ln_b"],
      packed["wqkv"], packed["bqkv"], packed["wo"], packed["bo"],
      packed["ln1_g"], packed["ln1_b"],
      packed["w1"], packed["b1"], packed["w2"], packed["b2"],
      packed["ln2_g"], packed["ln2_b"],
      span_sel, packed["fc_w"], packed["fc_b"], labels)
    return loss[0, 0]


# ----------------------------- main -----------------------------
if __name__ == "__main__":
    key = jax.random.PRNGKey(0)
    kp, kx, kspan, ky = jax.random.split(key, 4)

    params = init_params(kp)
    packed = pack_params(params)

    B, S, N_SPANS = 2, 8, 4
    data_x = jax.random.randint(kx, (B, S), 0, VOCAB, dtype=jnp.int32)
    bert_mask = jnp.array([[1] * S, [1] * (S - 2) + [0] * 2], dtype=jnp.int32)

    span_start = jax.random.randint(kspan, (B, N_SPANS), 0, S - 2, dtype=jnp.int32)
    span_end = span_start + 1
    data_span = jnp.stack([span_start, span_end], axis=-1)                # (B, n_spans, 2)

    sequence_mask = jnp.ones((B, N_SPANS), dtype=jnp.int32)
    data_y = jax.random.randint(ky, (B, N_SPANS), 0, Y_NUM, dtype=jnp.int32)
    data_y = data_y.at[1, -1].set(-1)                                     # exercise ignore_index=-1

    loss = bert_ner_forward(packed, data_x, bert_mask, data_span, sequence_mask, data_y)
    loss = jax.block_until_ready(loss)
    assert jnp.isfinite(loss)
    print("KERNEL_OK")
</pallas_src>

<mosaic_0001>
module attributes {stable_mosaic.version = 11 : i64} {
  func.func @bert_ner_kernel(%arg0: memref<16x128xf32, #tpu.memory_space<vmem>>, %arg1: memref<2x8xf32, #tpu.memory_space<vmem>>, %arg2: memref<1x128xf32, #tpu.memory_space<vmem>>, %arg3: memref<1x128xf32, #tpu.memory_space<vmem>>, %arg4: memref<2x128x384xf32, #tpu.memory_space<vmem>>, %arg5: memref<2x1x384xf32, #tpu.memory_space<vmem>>, %arg6: memref<2x128x128xf32, #tpu.memory_space<vmem>>, %arg7: memref<2x1x128xf32, #tpu.memory_space<vmem>>, %arg8: memref<2x1x128xf32, #tpu.memory_space<vmem>>, %arg9: memref<2x1x128xf32, #tpu.memory_space<vmem>>, %arg10: memref<2x128x256xf32, #tpu.memory_space<vmem>>, %arg11: memref<2x1x256xf32, #tpu.memory_space<vmem>>, %arg12: memref<2x256x128xf32, #tpu.memory_space<vmem>>, %arg13: memref<2x1x128xf32, #tpu.memory_space<vmem>>, %arg14: memref<2x1x128xf32, #tpu.memory_space<vmem>>, %arg15: memref<2x1x128xf32, #tpu.memory_space<vmem>>, %arg16: memref<8x16xf32, #tpu.memory_space<vmem>>, %arg17: memref<128x128xf32, #tpu.memory_space<vmem>>, %arg18: memref<1x128xf32, #tpu.memory_space<vmem>>, %arg19: memref<8x1xi32, #tpu.memory_space<vmem>>, %arg20: memref<1x1xf32, #tpu.memory_space<smem>>) attributes {dimension_semantics = [], scalar_prefetch = 0 : i64, scratch_operands = 0 : i64, tpu.core_type = #tpu.core_type<tc>} {
    %c0 = arith.constant 0 : index
    %c0_0 = arith.constant 0 : index
    %0 = vector.load %arg0[%c0, %c0_0] : memref<16x128xf32, #tpu.memory_space<vmem>>, vector<16x128xf32>
    %c0_1 = arith.constant 0 : index
    %c0_2 = arith.constant 0 : index
    %1 = vector.load %arg2[%c0_1, %c0_2] : memref<1x128xf32, #tpu.memory_space<vmem>>, vector<1x128xf32>
    %c0_3 = arith.constant 0 : index
    %c0_4 = arith.constant 0 : index
    %2 = vector.load %arg3[%c0_3, %c0_4] : memref<1x128xf32, #tpu.memory_space<vmem>>, vector<1x128xf32>
    %cst = arith.constant dense<0.000000e+00> : vector<16xf32>
    %3 = vector.multi_reduction <add>, %0, %cst [1] : vector<16x128xf32> to vector<16xf32>
    %4 = vector.shape_cast %3 : vector<16xf32> to vector<16x1xf32>
    %cst_5 = arith.constant 1.280000e+02 : f32
    %5 = vector.broadcast %cst_5 : f32 to vector<16x1xf32>
    %6 = arith.divf %4, %5 : vector<16x1xf32>
    %7 = vector.broadcast %6 : vector<16x1xf32> to vector<16x128xf32>
    %8 = arith.subf %0, %7 : vector<16x128xf32>
    %9 = vector.broadcast %6 : vector<16x1xf32> to vector<16x128xf32>
    %10 = arith.subf %0, %9 : vector<16x128xf32>
    %11 = arith.mulf %8, %10 : vector<16x128xf32>
    %cst_6 = arith.constant dense<0.000000e+00> : vector<16xf32>
    %12 = vector.multi_reduction <add>, %11, %cst_6 [1] : vector<16x128xf32> to vector<16xf32>
    %13 = vector.shape_cast %12 : vector<16xf32> to vector<16x1xf32>
    %cst_7 = arith.constant 1.280000e+02 : f32
    %14 = vector.broadcast %cst_7 : f32 to vector<16x1xf32>
    %15 = arith.divf %13, %14 : vector<16x1xf32>
    %16 = vector.broadcast %6 : vector<16x1xf32> to vector<16x128xf32>
    %17 = arith.subf %0, %16 : vector<16x128xf32>
    %cst_8 = arith.constant 9.99999996E-13 : f32
    %18 = vector.broadcast %cst_8 : f32 to vector<16x1xf32>
    %19 = arith.addf %15, %18 : vector<16x1xf32>
    %20 = math.rsqrt %19 : vector<16x1xf32>
    %21 = vector.broadcast %20 : vector<16x1xf32> to vector<16x128xf32>
    %22 = arith.mulf %17, %21 : vector<16x128xf32>
    %23 = vector.broadcast %1 : vector<1x128xf32> to vector<16x128xf32>
    %24 = arith.mulf %22, %23 : vector<16x128xf32>
    %25 = vector.broadcast %2 : vector<1x128xf32> to vector<16x128xf32>
    %26 = arith.addf %24, %25 : vector<16x128xf32>
    %c0_9 = arith.constant 0 : index
    %c0_10 = arith.constant 0 : index
    %27 = vector.load %arg1[%c0_9, %c0_10] : memref<2x8xf32, #tpu.memory_space<vmem>>, vector<2x8xf32>
    %c0_11 = arith.constant 0 : index
    %c0_12 = arith.constant 0 : index
    %c0_13 = arith.constant 0 : index
    %28 = vector.load %arg4[%c0_11, %c0_12, %c0_13] : memref<2x128x384xf32, #tpu.memory_space<vmem>>, vector<1x128x384xf32>
    %29 = vector.shape_cast %28 : vector<1x128x384xf32> to vector<128x384xf32>
    %cst_14 = arith.constant dense<0.000000e+00> : vector<16x384xf32>
    %30 = tpu.matmul %26, %29, %cst_14 {dimension_numbers = #tpu.dot_dimension_numbers<[1], [0], [0], [1], [0, 0, 1, 1], [], []>} : vector<16x128xf32>, vector<128x384xf32>, vector<16x384xf32> -> vector<16x384xf32>
    %c0_15 = arith.constant 0 : index
    %c0_16 = arith.constant 0 : index
    %c0_17 = arith.constant 0 : index
    %31 = vector.load %arg5[%c0_15, %c0_16, %c0_17] : memref<2x1x384xf32, #tpu.memory_space<vmem>>, vector<1x1x384xf32>
    %32 = vector.shape_cast %31 : vector<1x1x384xf32> to vector<1x384xf32>
    %33 = vector.broadcast %32 : vector<1x384xf32> to vector<16x384xf32>
    %34 = arith.addf %30, %33 : vector<16x384xf32>
    %35 = vector.extract_strided_slice %34 {offsets = [0, 0], sizes = [16, 128], strides = [1, 1]} : vector<16x384xf32> to vector<16x128xf32>
    %36 = vector.extract_strided_slice %34 {offsets = [0, 128], sizes = [16, 128], strides = [1, 1]} : vector<16x384xf32> to vector<16x128xf32>
    %37 = vector.extract_strided_slice %34 {offsets = [0, 256], sizes = [16, 128], strides = [1, 1]} : vector<16x384xf32> to vector<16x128xf32>
    %38 = vector.extract_strided_slice %35 {offsets = [0, 0], sizes = [8, 128], strides = [1, 1]} : vector<16x128xf32> to vector<8x128xf32>
    %39 = vector.extract_strided_slice %36 {offsets = [0, 0], sizes = [8, 128], strides = [1, 1]} : vector<16x128xf32> to vector<8x128xf32>
    %40 = vector.extract_strided_slice %37 {offsets = [0, 0], sizes = [8, 128], strides = [1, 1]} : vector<16x128xf32> to vector<8x128xf32>
    %41 = vector.extract_strided_slice %27 {offsets = [0, 0], sizes = [1, 8], strides = [1, 1]} : vector<2x8xf32> to vector<1x8xf32>
    %42 = vector.extract_strided_slice %38 {offsets = [0, 0], sizes = [8, 64], strides = [1, 1]} : vector<8x128xf32> to vector<8x64xf32>
    %43 = vector.extract_strided_slice %39 {offsets = [0, 0], sizes = [8, 64], strides = [1, 1]} : vector<8x128xf32> to vector<8x64xf32>
    %44 = vector.extract_strided_slice %40 {offsets = [0, 0], sizes = [8, 64], strides = [1, 1]} : vector<8x128xf32> to vector<8x64xf32>
    %cst_18 = arith.constant dense<0.000000e+00> : vector<8x8xf32>
    %45 = tpu.matmul %42, %43, %cst_18 {dimension_numbers = #tpu.dot_dimension_numbers<[1], [1], [0], [0], [0, 0, 1, 0], [], []>} : vector<8x64xf32>, vector<8x64xf32>, vector<8x8xf32> -> vector<8x8xf32>
    %cst_19 = arith.constant 1.250000e-01 : f32
    %46 = vector.broadcast %cst_19 : f32 to vector<8x8xf32>
    %47 = arith.mulf %45, %46 : vector<8x8xf32>
    %48 = vector.broadcast %41 : vector<1x8xf32> to vector<8x8xf32>
    %49 = arith.addf %47, %48 : vector<8x8xf32>
    %cst_20 = arith.constant dense<0xFF800000> : vector<8xf32>
    %50 = vector.multi_reduction <maximumf>, %49, %cst_20 [1] : vector<8x8xf32> to vector<8xf32>
    %51 = vector.shape_cast %50 : vector<8xf32> to vector<8x1xf32>
    %52 = vector.broadcast %51 : vector<8x1xf32> to vector<8x8xf32>
    %53 = arith.subf %49, %52 : vector<8x8xf32>
    %54 = math.exp %53 : vector<8x8xf32>
    %cst_21 = arith.constant dense<0.000000e+00> : vector<8xf32>
    %55 = vector.multi_reduction <add>, %54, %cst_21 [1] : vector<8x8xf32> to vector<8xf32>
    %56 = vector.shape_cast %55 : vector<8xf32> to vector<8x1xf32>
    %57 = vector.broadcast %56 : vector<8x1xf32> to vector<8x8xf32>
    %58 = arith.divf %54, %57 : vector<8x8xf32>
    %cst_22 = arith.constant dense<0.000000e+00> : vector<8x64xf32>
    %59 = tpu.matmul %58, %44, %cst_22 {dimension_numbers = #tpu.dot_dimension_numbers<[1], [0], [0], [1], [0, 0, 1, 1], [], []>} : vector<8x8xf32>, vector<8x64xf32>, vector<8x64xf32> -> vector<8x64xf32>
    %60 = vector.extract_strided_slice %38 {offsets = [0, 64], sizes = [8, 64], strides = [1, 1]} : vector<8x128xf32> to vector<8x64xf32>
    %61 = vector.extract_strided_slice %39 {offsets = [0, 64], sizes = [8, 64], strides = [1, 1]} : vector<8x128xf32> to vector<8x64xf32>
    %62 = vector.extract_strided_slice %40 {offsets = [0, 64], sizes = [8, 64], strides = [1, 1]} : vector<8x128xf32> to vector<8x64xf32>
    %cst_23 = arith.constant dense<0.000000e+00> : vector<8x8xf32>
    %63 = tpu.matmul %60, %61, %cst_23 {dimension_numbers = #tpu.dot_dimension_numbers<[1], [1], [0], [0], [0, 0, 1, 0], [], []>} : vector<8x64xf32>, vector<8x64xf32>, vector<8x8xf32> -> vector<8x8xf32>
    %cst_24 = arith.constant 1.250000e-01 : f32
    %64 = vector.broadcast %cst_24 : f32 to vector<8x8xf32>
    %65 = arith.mulf %63, %64 : vector<8x8xf32>
    %66 = vector.broadcast %41 : vector<1x8xf32> to vector<8x8xf32>
    %67 = arith.addf %65, %66 : vector<8x8xf32>
    %cst_25 = arith.constant dense<0xFF800000> : vector<8xf32>
    %68 = vector.multi_reduction <maximumf>, %67, %cst_25 [1] : vector<8x8xf32> to vector<8xf32>
    %69 = vector.shape_cast %68 : vector<8xf32> to vector<8x1xf32>
    %70 = vector.broadcast %69 : vector<8x1xf32> to vector<8x8xf32>
    %71 = arith.subf %67, %70 : vector<8x8xf32>
    %72 = math.exp %71 : vector<8x8xf32>
    %cst_26 = arith.constant dense<0.000000e+00> : vector<8xf32>
    %73 = vector.multi_reduction <add>, %72, %cst_26 [1] : vector<8x8xf32> to vector<8xf32>
    %74 = vector.shape_cast %73 : vector<8xf32> to vector<8x1xf32>
    %75 = vector.broadcast %74 : vector<8x1xf32> to vector<8x8xf32>
    %76 = arith.divf %72, %75 : vector<8x8xf32>
    %cst_27 = arith.constant dense<0.000000e+00> : vector<8x64xf32>
    %77 = tpu.matmul %76, %62, %cst_27 {dimension_numbers = #tpu.dot_dimension_numbers<[1], [0], [0], [1], [0, 0, 1, 1], [], []>} : vector<8x8xf32>, vector<8x64xf32>, vector<8x64xf32> -> vector<8x64xf32>
    %78 = tpu.concatenate %59, %77 in 1 : vector<8x64xf32>, vector<8x64xf32> -> vector<8x128xf32>
    %79 = vector.extract_strided_slice %35 {offsets = [8, 0], sizes = [8, 128], strides = [1, 1]} : vector<16x128xf32> to vector<8x128xf32>
    %80 = vector.extract_strided_slice %36 {offsets = [8, 0], sizes = [8, 128], strides = [1, 1]} : vector<16x128xf32> to vector<8x128xf32>
    %81 = vector.extract_strided_slice %37 {offsets = [8, 0], sizes = [8, 128], strides = [1, 1]} : vector<16x128xf32> to vector<8x128xf32>
    %82 = vector.extract_strided_slice %27 {offsets = [1, 0], sizes = [1, 8], strides = [1, 1]} : vector<2x8xf32> to vector<1x8xf32>
    %83 = vector.extract_strided_slice %79 {offsets = [0, 0], sizes = [8, 64], strides = [1, 1]} : vector<8x128xf32> to vector<8x64xf32>
    %84 = vector.extract_strided_slice %80 {offsets = [0, 0], sizes = [8, 64], strides = [1, 1]} : vector<8x128xf32> to vector<8x64xf32>
    %85 = vector.extract_strided_slice %81 {offsets = [0, 0], sizes = [8, 64], strides = [1, 1]} : vector<8x128xf32> to vector<8x64xf32>
    %cst_28 = arith.constant dense<0.000000e+00> : vector<8x8xf32>
    %86 = tpu.matmul %83, %84, %cst_28 {dimension_numbers = #tpu.dot_dimension_numbers<[1], [1], [0], [0], [0, 0, 1, 0], [], []>} : vector<8x64xf32>, vector<8x64xf32>, vector<8x8xf32> -> vector<8x8xf32>
    %cst_29 = arith.constant 1.250000e-01 : f32
    %87 = vector.broadcast %cst_29 : f32 to vector<8x8xf32>
    %88 = arith.mulf %86, %87 : vector<8x8xf32>
    %89 = vector.broadcast %82 : vector<1x8xf32> to vector<8x8xf32>
    %90 = arith.addf %88, %89 : vector<8x8xf32>
    %cst_30 = arith.constant dense<0xFF800000> : vector<8xf32>
    %91 = vector.multi_reduction <maximumf>, %90, %cst_30 [1] : vector<8x8xf32> to vector<8xf32>
    %92 = vector.shape_cast %91 : vector<8xf32> to vector<8x1xf32>
    %93 = vector.broadcast %92 : vector<8x1xf32> to vector<8x8xf32>
    %94 = arith.subf %90, %93 : vector<8x8xf32>
    %95 = math.exp %94 : vector<8x8xf32>
    %cst_31 = arith.constant dense<0.000000e+00> : vector<8xf32>
    %96 = vector.multi_reduction <add>, %95, %cst_31 [1] : vector<8x8xf32> to vector<8xf32>
    %97 = vector.shape_cast %96 : vector<8xf32> to vector<8x1xf32>
    %98 = vector.broadcast %97 : vector<8x1xf32> to vector<8x8xf32>
    %99 = arith.divf %95, %98 : vector<8x8xf32>
    %cst_32 = arith.constant dense<0.000000e+00> : vector<8x64xf32>
    %100 = tpu.matmul %99, %85, %cst_32 {dimension_numbers = #tpu.dot_dimension_numbers<[1], [0], [0], [1], [0, 0, 1, 1], [], []>} : vector<8x8xf32>, vector<8x64xf32>, vector<8x64xf32> -> vector<8x64xf32>
    %101 = vector.extract_strided_slice %79 {offsets = [0, 64], sizes = [8, 64], strides = [1, 1]} : vector<8x128xf32> to vector<8x64xf32>
    %102 = vector.extract_strided_slice %80 {offsets = [0, 64], sizes = [8, 64], strides = [1, 1]} : vector<8x128xf32> to vector<8x64xf32>
    %103 = vector.extract_strided_slice %81 {offsets = [0, 64], sizes = [8, 64], strides = [1, 1]} : vector<8x128xf32> to vector<8x64xf32>
    %cst_33 = arith.constant dense<0.000000e+00> : vector<8x8xf32>
    %104 = tpu.matmul %101, %102, %cst_33 {dimension_numbers = #tpu.dot_dimension_numbers<[1], [1], [0], [0], [0, 0, 1, 0], [], []>} : vector<8x64xf32>, vector<8x64xf32>, vector<8x8xf32> -> vector<8x8xf32>
    %cst_34 = arith.constant 1.250000e-01 : f32
    %105 = vector.broadcast %cst_34 : f32 to vector<8x8xf32>
    %106 = arith.mulf %104, %105 : vector<8x8xf32>
    %107 = vector.broadcast %82 : vector<1x8xf32> to vector<8x8xf32>
    %108 = arith.addf %106, %107 : vector<8x8xf32>
    %cst_35 = arith.constant dense<0xFF800000> : vector<8xf32>
    %109 = vector.multi_reduction <maximumf>, %108, %cst_35 [1] : vector<8x8xf32> to vector<8xf32>
    %110 = vector.shape_cast %109 : vector<8xf32> to vector<8x1xf32>
    %111 = vector.broadcast %110 : vector<8x1xf32> to vector<8x8xf32>
    %112 = arith.subf %108, %111 : vector<8x8xf32>
    %113 = math.exp %112 : vector<8x8xf32>
    %cst_36 = arith.constant dense<0.000000e+00> : vector<8xf32>
    %114 = vector.multi_reduction <add>, %113, %cst_36 [1] : vector<8x8xf32> to vector<8xf32>
    %115 = vector.shape_cast %114 : vector<8xf32> to vector<8x1xf32>
    %116 = vector.broadcast %115 : vector<8x1xf32> to vector<8x8xf32>
    %117 = arith.divf %113, %116 : vector<8x8xf32>
    %cst_37 = arith.constant dense<0.000000e+00> : vector<8x64xf32>
    %118 = tpu.matmul %117, %103, %cst_37 {dimension_numbers = #tpu.dot_dimension_numbers<[1], [0], [0], [1], [0, 0, 1, 1], [], []>} : vector<8x8xf32>, vector<8x64xf32>, vector<8x64xf32> -> vector<8x64xf32>
    %119 = tpu.concatenate %100, %118 in 1 : vector<8x64xf32>, vector<8x64xf32> -> vector<8x128xf32>
    %120 = tpu.concatenate %78, %119 in 0 : vector<8x128xf32>, vector<8x128xf32> -> vector<16x128xf32>
    %c0_38 = arith.constant 0 : index
    %c0_39 = arith.constant 0 : index
    %c0_40 = arith.constant 0 : index
    %121 = vector.load %arg6[%c0_38, %c0_39, %c0_40] : memref<2x128x128xf32, #tpu.memory_space<vmem>>, vector<1x128x128xf32>
    %122 = vector.shape_cast %121 : vector<1x128x128xf32> to vector<128x128xf32>
    %cst_41 = arith.constant dense<0.000000e+00> : vector<16x128xf32>
    %123 = tpu.matmul %120, %122, %cst_41 {dimension_numbers = #tpu.dot_dimension_numbers<[1], [0], [0], [1], [0, 0, 1, 1], [], []>} : vector<16x128xf32>, vector<128x128xf32>, vector<16x128xf32> -> vector<16x128xf32>
    %c0_42 = arith.constant 0 : index
    %c0_43 = arith.constant 0 : index
    %c0_44 = arith.constant 0 : index
    %124 = vector.load %arg7[%c0_42, %c0_43, %c0_44] : memref<2x1x128xf32, #tpu.memory_space<vmem>>, vector<1x1x128xf32>
    %125 = vector.shape_cast %124 : vector<1x1x128xf32> to vector<1x128xf32>
    %126 = vector.broadcast %125 : vector<1x128xf32> to vector<16x128xf32>
    %127 = arith.addf %123, %126 : vector<16x128xf32>
    %128 = arith.addf %127, %26 : vector<16x128xf32>
    %c0_45 = arith.constant 0 : index
    %c0_46 = arith.constant 0 : index
    %c0_47 = arith.constant 0 : index
    %129 = vector.load %arg8[%c0_45, %c0_46, %c0_47] : memref<2x1x128xf32, #tpu.memory_space<vmem>>, vector<1x1x128xf32>
    %130 = vector.shape_cast %129 : vector<1x1x128xf32> to vector<1x128xf32>
    %c0_48 = arith.constant 0 : index
    %c0_49 = arith.constant 0 : index
    %c0_50 = arith.constant 0 : index
    %131 = vector.load %arg9[%c0_48, %c0_49, %c0_50] : memref<2x1x128xf32, #tpu.memory_space<vmem>>, vector<1x1x128xf32>
    %132 = vector.shape_cast %131 : vector<1x1x128xf32> to vector<1x128xf32>
    %cst_51 = arith.constant dense<0.000000e+00> : vector<16xf32>
    %133 = vector.multi_reduction <add>, %128, %cst_51 [1] : vector<16x128xf32> to vector<16xf32>
    %134 = vector.shape_cast %133 : vector<16xf32> to vector<16x1xf32>
    %cst_52 = arith.constant 1.280000e+02 : f32
    %135 = vector.broadcast %cst_52 : f32 to vector<16x1xf32>
    %136 = arith.divf %134, %135 : vector<16x1xf32>
    %137 = vector.broadcast %136 : vector<16x1xf32> to vector<16x128xf32>
    %138 = arith.subf %128, %137 : vector<16x128xf32>
    %139 = vector.broadcast %136 : vector<16x1xf32> to vector<16x128xf32>
    %140 = arith.subf %128, %139 : vector<16x128xf32>
    %141 = arith.mulf %138, %140 : vector<16x128xf32>
    %cst_53 = arith.constant dense<0.000000e+00> : vector<16xf32>
    %142 = vector.multi_reduction <add>, %141, %cst_53 [1] : vector<16x128xf32> to vector<16xf32>
    %143 = vector.shape_cast %142 : vector<16xf32> to vector<16x1xf32>
    %cst_54 = arith.constant 1.280000e+02 : f32
    %144 = vector.broadcast %cst_54 : f32 to vector<16x1xf32>
    %145 = arith.divf %143, %144 : vector<16x1xf32>
    %146 = vector.broadcast %136 : vector<16x1xf32> to vector<16x128xf32>
    %147 = arith.subf %128, %146 : vector<16x128xf32>
    %cst_55 = arith.constant 9.99999996E-13 : f32
    %148 = vector.broadcast %cst_55 : f32 to vector<16x1xf32>
    %149 = arith.addf %145, %148 : vector<16x1xf32>
    %150 = math.rsqrt %149 : vector<16x1xf32>
    %151 = vector.broadcast %150 : vector<16x1xf32> to vector<16x128xf32>
    %152 = arith.mulf %147, %151 : vector<16x128xf32>
    %153 = vector.broadcast %130 : vector<1x128xf32> to vector<16x128xf32>
    %154 = arith.mulf %152, %153 : vector<16x128xf32>
    %155 = vector.broadcast %132 : vector<1x128xf32> to vector<16x128xf32>
    %156 = arith.addf %154, %155 : vector<16x128xf32>
    %c0_56 = arith.constant 0 : index
    %c0_57 = arith.constant 0 : index
    %c0_58 = arith.constant 0 : index
    %157 = vector.load %arg10[%c0_56, %c0_57, %c0_58] : memref<2x128x256xf32, #tpu.memory_space<vmem>>, vector<1x128x256xf32>
    %158 = vector.shape_cast %157 : vector<1x128x256xf32> to vector<128x256xf32>
    %cst_59 = arith.constant dense<0.000000e+00> : vector<16x256xf32>
    %159 = tpu.matmul %156, %158, %cst_59 {dimension_numbers = #tpu.dot_dimension_numbers<[1], [0], [0], [1], [0, 0, 1, 1], [], []>} : vector<16x128xf32>, vector<128x256xf32>, vector<16x256xf32> -> vector<16x256xf32>
    %c0_60 = arith.constant 0 : index
    %c0_61 = arith.constant 0 : index
    %c0_62 = arith.constant 0 : index
    %160 = vector.load %arg11[%c0_60, %c0_61, %c0_62] : memref<2x1x256xf32, #tpu.memory_space<vmem>>, vector<1x1x256xf32>
    %161 = vector.shape_cast %160 : vector<1x1x256xf32> to vector<1x256xf32>
    %162 = vector.broadcast %161 : vector<1x256xf32> to vector<16x256xf32>
    %163 = arith.addf %159, %162 : vector<16x256xf32>
    %cst_63 = arith.constant 5.000000e-01 : f32
    %164 = vector.broadcast %cst_63 : f32 to vector<16x256xf32>
    %165 = arith.mulf %164, %163 : vector<16x256xf32>
    %cst_64 = arith.constant 4.471500e-02 : f32
    %166 = vector.broadcast %cst_64 : f32 to vector<16x256xf32>
    %167 = arith.mulf %166, %163 : vector<16x256xf32>
    %168 = arith.mulf %167, %163 : vector<16x256xf32>
    %169 = arith.mulf %168, %163 : vector<16x256xf32>
    %170 = arith.addf %163, %169 : vector<16x256xf32>
    %cst_65 = arith.constant 0.797884583 : f32
    %171 = vector.broadcast %cst_65 : f32 to vector<16x256xf32>
    %172 = arith.mulf %171, %170 : vector<16x256xf32>
    %173 = math.tanh %172 : vector<16x256xf32>
    %cst_66 = arith.constant 1.000000e+00 : f32
    %174 = vector.broadcast %cst_66 : f32 to vector<16x256xf32>
    %175 = arith.addf %174, %173 : vector<16x256xf32>
    %176 = arith.mulf %165, %175 : vector<16x256xf32>
    %c0_67 = arith.constant 0 : index
    %c0_68 = arith.constant 0 : index
    %c0_69 = arith.constant 0 : index
    %177 = vector.load %arg12[%c0_67, %c0_68, %c0_69] : memref<2x256x128xf32, #tpu.memory_space<vmem>>, vector<1x256x128xf32>
    %178 = vector.shape_cast %177 : vector<1x256x128xf32> to vector<256x128xf32>
    %cst_70 = arith.constant dense<0.000000e+00> : vector<16x128xf32>
    %179 = tpu.matmul %176, %178, %cst_70 {dimension_numbers = #tpu.dot_dimension_numbers<[1], [0], [0], [1], [0, 0, 1, 1], [], []>} : vector<16x256xf32>, vector<256x128xf32>, vector<16x128xf32> -> vector<16x128xf32>
    %c0_71 = arith.constant 0 : index
    %c0_72 = arith.constant 0 : index
    %c0_73 = arith.constant 0 : index
    %180 = vector.load %arg13[%c0_71, %c0_72, %c0_73] : memref<2x1x128xf32, #tpu.memory_space<vmem>>, vector<1x1x128xf32>
    %181 = vector.shape_cast %180 : vector<1x1x128xf32> to vector<1x128xf32>
    %182 = vector.broadcast %181 : vector<1x128xf32> to vector<16x128xf32>
    %183 = arith.addf %179, %182 : vector<16x128xf32>
    %184 = arith.addf %183, %156 : vector<16x128xf32>
    %c0_74 = arith.constant 0 : index
    %c0_75 = arith.constant 0 : index
    %c0_76 = arith.constant 0 : index
    %185 = vector.load %arg14[%c0_74, %c0_75, %c0_76] : memref<2x1x128xf32, #tpu.memory_space<vmem>>, vector<1x1x128xf32>
    %186 = vector.shape_cast %185 : vector<1x1x128xf32> to vector<1x128xf32>
    %c0_77 = arith.constant 0 : index
    %c0_78 = arith.constant 0 : index
    %c0_79 = arith.constant 0 : index
    %187 = vector.load %arg15[%c0_77, %c0_78, %c0_79] : memref<2x1x128xf32, #tpu.memory_space<vmem>>, vector<1x1x128xf32>
    %188 = vector.shape_cast %187 : vector<1x1x128xf32> to vector<1x128xf32>
    %cst_80 = arith.constant dense<0.000000e+00> : vector<16xf32>
    %189 = vector.multi_reduction <add>, %184, %cst_80 [1] : vector<16x128xf32> to vector<16xf32>
    %190 = vector.shape_cast %189 : vector<16xf32> to vector<16x1xf32>
    %cst_81 = arith.constant 1.280000e+02 : f32
    %191 = vector.broadcast %cst_81 : f32 to vector<16x1xf32>
    %192 = arith.divf %190, %191 : vector<16x1xf32>
    %193 = vector.broadcast %192 : vector<16x1xf32> to vector<16x128xf32>
    %194 = arith.subf %184, %193 : vector<16x128xf32>
    %195 = vector.broadcast %192 : vector<16x1xf32> to vector<16x128xf32>
    %196 = arith.subf %184, %195 : vector<16x128xf32>
    %197 = arith.mulf %194, %196 : vector<16x128xf32>
    %cst_82 = arith.constant dense<0.000000e+00> : vector<16xf32>
    %198 = vector.multi_reduction <add>, %197, %cst_82 [1] : vector<16x128xf32> to vector<16xf32>
    %199 = vector.shape_cast %198 : vector<16xf32> to vector<16x1xf32>
    %cst_83 = arith.constant 1.280000e+02 : f32
    %200 = vector.broadcast %cst_83 : f32 to vector<16x1xf32>
    %201 = arith.divf %199, %200 : vector<16x1xf32>
    %202 = vector.broadcast %192 : vector<16x1xf32> to vector<16x128xf32>
    %203 = arith.subf %184, %202 : vector<16x128xf32>
    %cst_84 = arith.constant 9.99999996E-13 : f32
    %204 = vector.broadcast %cst_84 : f32 to vector<16x1xf32>
    %205 = arith.addf %201, %204 : vector<16x1xf32>
    %206 = math.rsqrt %205 : vector<16x1xf32>
    %207 = vector.broadcast %206 : vector<16x1xf32> to vector<16x128xf32>
    %208 = arith.mulf %203, %207 : vector<16x128xf32>
    %209 = vector.broadcast %186 : vector<1x128xf32> to vector<16x128xf32>
    %210 = arith.mulf %208, %209 : vector<16x128xf32>
    %211 = vector.broadcast %188 : vector<1x128xf32> to vector<16x128xf32>
    %212 = arith.addf %210, %211 : vector<16x128xf32>
    %c1 = arith.constant 1 : index
    %c0_85 = arith.constant 0 : index
    %c0_86 = arith.constant 0 : index
    %213 = vector.load %arg4[%c1, %c0_85, %c0_86] : memref<2x128x384xf32, #tpu.memory_space<vmem>>, vector<1x128x384xf32>
    %214 = vector.shape_cast %213 : vector<1x128x384xf32> to vector<128x384xf32>
    %cst_87 = arith.constant dense<0.000000e+00> : vector<16x384xf32>
    %215 = tpu.matmul %212, %214, %cst_87 {dimension_numbers = #tpu.dot_dimension_numbers<[1], [0], [0], [1], [0, 0, 1, 1], [], []>} : vector<16x128xf32>, vector<128x384xf32>, vector<16x384xf32> -> vector<16x384xf32>
    %c1_88 = arith.constant 1 : index
    %c0_89 = arith.constant 0 : index
    %c0_90 = arith.constant 0 : index
    %216 = vector.load %arg5[%c1_88, %c0_89, %c0_90] : memref<2x1x384xf32, #tpu.memory_space<vmem>>, vector<1x1x384xf32>
    %217 = vector.shape_cast %216 : vector<1x1x384xf32> to vector<1x384xf32>
    %218 = vector.broadcast %217 : vector<1x384xf32> to vector<16x384xf32>
    %219 = arith.addf %215, %218 : vector<16x384xf32>
    %220 = vector.extract_strided_slice %219 {offsets = [0, 0], sizes = [16, 128], strides = [1, 1]} : vector<16x384xf32> to vector<16x128xf32>
    %221 = vector.extract_strided_slice %219 {offsets = [0, 128], sizes = [16, 128], strides = [1, 1]} : vector<16x384xf32> to vector<16x128xf32>
    %222 = vector.extract_strided_slice %219 {offsets = [0, 256], sizes = [16, 128], strides = [1, 1]} : vector<16x384xf32> to vector<16x128xf32>
    %223 = vector.extract_strided_slice %220 {offsets = [0, 0], sizes = [8, 128], strides = [1, 1]} : vector<16x128xf32> to vector<8x128xf32>
    %224 = vector.extract_strided_slice %221 {offsets = [0, 0], sizes = [8, 128], strides = [1, 1]} : vector<16x128xf32> to vector<8x128xf32>
    %225 = vector.extract_strided_slice %222 {offsets = [0, 0], sizes = [8, 128], strides = [1, 1]} : vector<16x128xf32> to vector<8x128xf32>
    %226 = vector.extract_strided_slice %27 {offsets = [0, 0], sizes = [1, 8], strides = [1, 1]} : vector<2x8xf32> to vector<1x8xf32>
    %227 = vector.extract_strided_slice %223 {offsets = [0, 0], sizes = [8, 64], strides = [1, 1]} : vector<8x128xf32> to vector<8x64xf32>
    %228 = vector.extract_strided_slice %224 {offsets = [0, 0], sizes = [8, 64], strides = [1, 1]} : vector<8x128xf32> to vector<8x64xf32>
    %229 = vector.extract_strided_slice %225 {offsets = [0, 0], sizes = [8, 64], strides = [1, 1]} : vector<8x128xf32> to vector<8x64xf32>
    %cst_91 = arith.constant dense<0.000000e+00> : vector<8x8xf32>
    %230 = tpu.matmul %227, %228, %cst_91 {dimension_numbers = #tpu.dot_dimension_numbers<[1], [1], [0], [0], [0, 0, 1, 0], [], []>} : vector<8x64xf32>, vector<8x64xf32>, vector<8x8xf32> -> vector<8x8xf32>
    %cst_92 = arith.constant 1.250000e-01 : f32
    %231 = vector.broadcast %cst_92 : f32 to vector<8x8xf32>
    %232 = arith.mulf %230, %231 : vector<8x8xf32>
    %233 = vector.broadcast %226 : vector<1x8xf32> to vector<8x8xf32>
    %234 = arith.addf %232, %233 : vector<8x8xf32>
    %cst_93 = arith.constant dense<0xFF800000> : vector<8xf32>
    %235 = vector.multi_reduction <maximumf>, %234, %cst_93 [1] : vector<8x8xf32> to vector<8xf32>
    %236 = vector.shape_cast %235 : vector<8xf32> to vector<8x1xf32>
    %237 = vector.broadcast %236 : vector<8x1xf32> to vector<8x8xf32>
    %238 = arith.subf %234, %237 : vector<8x8xf32>
    %239 = math.exp %238 : vector<8x8xf32>
    %cst_94 = arith.constant dense<0.000000e+00> : vector<8xf32>
    %240 = vector.multi_reduction <add>, %239, %cst_94 [1] : vector<8x8xf32> to vector<8xf32>
    %241 = vector.shape_cast %240 : vector<8xf32> to vector<8x1xf32>
    %242 = vector.broadcast %241 : vector<8x1xf32> to vector<8x8xf32>
    %243 = arith.divf %239, %242 : vector<8x8xf32>
    %cst_95 = arith.constant dense<0.000000e+00> : vector<8x64xf32>
    %244 = tpu.matmul %243, %229, %cst_95 {dimension_numbers = #tpu.dot_dimension_numbers<[1], [0], [0], [1], [0, 0, 1, 1], [], []>} : vector<8x8xf32>, vector<8x64xf32>, vector<8x64xf32> -> vector<8x64xf32>
    %245 = vector.extract_strided_slice %223 {offsets = [0, 64], sizes = [8, 64], strides = [1, 1]} : vector<8x128xf32> to vector<8x64xf32>
    %246 = vector.extract_strided_slice %224 {offsets = [0, 64], sizes = [8, 64], strides = [1, 1]} : vector<8x128xf32> to vector<8x64xf32>
    %247 = vector.extract_strided_slice %225 {offsets = [0, 64], sizes = [8, 64], strides = [1, 1]} : vector<8x128xf32> to vector<8x64xf32>
    %cst_96 = arith.constant dense<0.000000e+00> : vector<8x8xf32>
    %248 = tpu.matmul %245, %246, %cst_96 {dimension_numbers = #tpu.dot_dimension_numbers<[1], [1], [0], [0], [0, 0, 1, 0], [], []>} : vector<8x64xf32>, vector<8x64xf32>, vector<8x8xf32> -> vector<8x8xf32>
    %cst_97 = arith.constant 1.250000e-01 : f32
    %249 = vector.broadcast %cst_97 : f32 to vector<8x8xf32>
    %250 = arith.mulf %248, %249 : vector<8x8xf32>
    %251 = vector.broadcast %226 : vector<1x8xf32> to vector<8x8xf32>
    %252 = arith.addf %250, %251 : vector<8x8xf32>
    %cst_98 = arith.constant dense<0xFF800000> : vector<8xf32>
    %253 = vector.multi_reduction <maximumf>, %252, %cst_98 [1] : vector<8x8xf32> to vector<8xf32>
    %254 = vector.shape_cast %253 : vector<8xf32> to vector<8x1xf32>
    %255 = vector.broadcast %254 : vector<8x1xf32> to vector<8x8xf32>
    %256 = arith.subf %252, %255 : vector<8x8xf32>
    %257 = math.exp %256 : vector<8x8xf32>
    %cst_99 = arith.constant dense<0.000000e+00> : vector<8xf32>
    %258 = vector.multi_reduction <add>, %257, %cst_99 [1] : vector<8x8xf32> to vector<8xf32>
    %259 = vector.shape_cast %258 : vector<8xf32> to vector<8x1xf32>
    %260 = vector.broadcast %259 : vector<8x1xf32> to vector<8x8xf32>
    %261 = arith.divf %257, %260 : vector<8x8xf32>
    %cst_100 = arith.constant dense<0.000000e+00> : vector<8x64xf32>
    %262 = tpu.matmul %261, %247, %cst_100 {dimension_numbers = #tpu.dot_dimension_numbers<[1], [0], [0], [1], [0, 0, 1, 1], [], []>} : vector<8x8xf32>, vector<8x64xf32>, vector<8x64xf32> -> vector<8x64xf32>
    %263 = tpu.concatenate %244, %262 in 1 : vector<8x64xf32>, vector<8x64xf32> -> vector<8x128xf32>
    %264 = vector.extract_strided_slice %220 {offsets = [8, 0], sizes = [8, 128], strides = [1, 1]} : vector<16x128xf32> to vector<8x128xf32>
    %265 = vector.extract_strided_slice %221 {offsets = [8, 0], sizes = [8, 128], strides = [1, 1]} : vector<16x128xf32> to vector<8x128xf32>
    %266 = vector.extract_strided_slice %222 {offsets = [8, 0], sizes = [8, 128], strides = [1, 1]} : vector<16x128xf32> to vector<8x128xf32>
    %267 = vector.extract_strided_slice %27 {offsets = [1, 0], sizes = [1, 8], strides = [1, 1]} : vector<2x8xf32> to vector<1x8xf32>
    %268 = vector.extract_strided_slice %264 {offsets = [0, 0], sizes = [8, 64], strides = [1, 1]} : vector<8x128xf32> to vector<8x64xf32>
    %269 = vector.extract_strided_slice %265 {offsets = [0, 0], sizes = [8, 64], strides = [1, 1]} : vector<8x128xf32> to vector<8x64xf32>
    %270 = vector.extract_strided_slice %266 {offsets = [0, 0], sizes = [8, 64], strides = [1, 1]} : vector<8x128xf32> to vector<8x64xf32>
    %cst_101 = arith.constant dense<0.000000e+00> : vector<8x8xf32>
    %271 = tpu.matmul %268, %269, %cst_101 {dimension_numbers = #tpu.dot_dimension_numbers<[1], [1], [0], [0], [0, 0, 1, 0], [], []>} : vector<8x64xf32>, vector<8x64xf32>, vector<8x8xf32> -> vector<8x8xf32>
    %cst_102 = arith.constant 1.250000e-01 : f32
    %272 = vector.broadcast %cst_102 : f32 to vector<8x8xf32>
    %273 = arith.mulf %271, %272 : vector<8x8xf32>
    %274 = vector.broadcast %267 : vector<1x8xf32> to vector<8x8xf32>
    %275 = arith.addf %273, %274 : vector<8x8xf32>
    %cst_103 = arith.constant dense<0xFF800000> : vector<8xf32>
    %276 = vector.multi_reduction <maximumf>, %275, %cst_103 [1] : vector<8x8xf32> to vector<8xf32>
    %277 = vector.shape_cast %276 : vector<8xf32> to vector<8x1xf32>
    %278 = vector.broadcast %277 : vector<8x1xf32> to vector<8x8xf32>
    %279 = arith.subf %275, %278 : vector<8x8xf32>
    %280 = math.exp %279 : vector<8x8xf32>
    %cst_104 = arith.constant dense<0.000000e+00> : vector<8xf32>
    %281 = vector.multi_reduction <add>, %280, %cst_104 [1] : vector<8x8xf32> to vector<8xf32>
    %282 = vector.shape_cast %281 : vector<8xf32> to vector<8x1xf32>
    %283 = vector.broadcast %282 : vector<8x1xf32> to vector<8x8xf32>
    %284 = arith.divf %280, %283 : vector<8x8xf32>
    %cst_105 = arith.constant dense<0.000000e+00> : vector<8x64xf32>
    %285 = tpu.matmul %284, %270, %cst_105 {dimension_numbers = #tpu.dot_dimension_numbers<[1], [0], [0], [1], [0, 0, 1, 1], [], []>} : vector<8x8xf32>, vector<8x64xf32>, vector<8x64xf32> -> vector<8x64xf32>
    %286 = vector.extract_strided_slice %264 {offsets = [0, 64], sizes = [8, 64], strides = [1, 1]} : vector<8x128xf32> to vector<8x64xf32>
    %287 = vector.extract_strided_slice %265 {offsets = [0, 64], sizes = [8, 64], strides = [1, 1]} : vector<8x128xf32> to vector<8x64xf32>
    %288 = vector.extract_strided_slice %266 {offsets = [0, 64], sizes = [8, 64], strides = [1, 1]} : vector<8x128xf32> to vector<8x64xf32>
    %cst_106 = arith.constant dense<0.000000e+00> : vector<8x8xf32>
    %289 = tpu.matmul %286, %287, %cst_106 {dimension_numbers = #tpu.dot_dimension_numbers<[1], [1], [0], [0], [0, 0, 1, 0], [], []>} : vector<8x64xf32>, vector<8x64xf32>, vector<8x8xf32> -> vector<8x8xf32>
    %cst_107 = arith.constant 1.250000e-01 : f32
    %290 = vector.broadcast %cst_107 : f32 to vector<8x8xf32>
    %291 = arith.mulf %289, %290 : vector<8x8xf32>
    %292 = vector.broadcast %267 : vector<1x8xf32> to vector<8x8xf32>
    %293 = arith.addf %291, %292 : vector<8x8xf32>
    %cst_108 = arith.constant dense<0xFF800000> : vector<8xf32>
    %294 = vector.multi_reduction <maximumf>, %293, %cst_108 [1] : vector<8x8xf32> to vector<8xf32>
    %295 = vector.shape_cast %294 : vector<8xf32> to vector<8x1xf32>
    %296 = vector.broadcast %295 : vector<8x1xf32> to vector<8x8xf32>
    %297 = arith.subf %293, %296 : vector<8x8xf32>
    %298 = math.exp %297 : vector<8x8xf32>
    %cst_109 = arith.constant dense<0.000000e+00> : vector<8xf32>
    %299 = vector.multi_reduction <add>, %298, %cst_109 [1] : vector<8x8xf32> to vector<8xf32>
    %300 = vector.shape_cast %299 : vector<8xf32> to vector<8x1xf32>
    %301 = vector.broadcast %300 : vector<8x1xf32> to vector<8x8xf32>
    %302 = arith.divf %298, %301 : vector<8x8xf32>
    %cst_110 = arith.constant dense<0.000000e+00> : vector<8x64xf32>
    %303 = tpu.matmul %302, %288, %cst_110 {dimension_numbers = #tpu.dot_dimension_numbers<[1], [0], [0], [1], [0, 0, 1, 1], [], []>} : vector<8x8xf32>, vector<8x64xf32>, vector<8x64xf32> -> vector<8x64xf32>
    %304 = tpu.concatenate %285, %303 in 1 : vector<8x64xf32>, vector<8x64xf32> -> vector<8x128xf32>
    %305 = tpu.concatenate %263, %304 in 0 : vector<8x128xf32>, vector<8x128xf32> -> vector<16x128xf32>
    %c1_111 = arith.constant 1 : index
    %c0_112 = arith.constant 0 : index
    %c0_113 = arith.constant 0 : index
    %306 = vector.load %arg6[%c1_111, %c0_112, %c0_113] : memref<2x128x128xf32, #tpu.memory_space<vmem>>, vector<1x128x128xf32>
    %307 = vector.shape_cast %306 : vector<1x128x128xf32> to vector<128x128xf32>
    %cst_114 = arith.constant dense<0.000000e+00> : vector<16x128xf32>
    %308 = tpu.matmul %305, %307, %cst_114 {dimension_numbers = #tpu.dot_dimension_numbers<[1], [0], [0], [1], [0, 0, 1, 1], [], []>} : vector<16x128xf32>, vector<128x128xf32>, vector<16x128xf32> -> vector<16x128xf32>
    %c1_115 = arith.constant 1 : index
    %c0_116 = arith.constant 0 : index
    %c0_117 = arith.constant 0 : index
    %309 = vector.load %arg7[%c1_115, %c0_116, %c0_117] : memref<2x1x128xf32, #tpu.memory_space<vmem>>, vector<1x1x128xf32>
    %310 = vector.shape_cast %309 : vector<1x1x128xf32> to vector<1x128xf32>
    %311 = vector.broadcast %310 : vector<1x128xf32> to vector<16x128xf32>
    %312 = arith.addf %308, %311 : vector<16x128xf32>
    %313 = arith.addf %312, %212 : vector<16x128xf32>
    %c1_118 = arith.constant 1 : index
    %c0_119 = arith.constant 0 : index
    %c0_120 = arith.constant 0 : index
    %314 = vector.load %arg8[%c1_118, %c0_119, %c0_120] : memref<2x1x128xf32, #tpu.memory_space<vmem>>, vector<1x1x128xf32>
    %315 = vector.shape_cast %314 : vector<1x1x128xf32> to vector<1x128xf32>
    %c1_121 = arith.constant 1 : index
    %c0_122 = arith.constant 0 : index
    %c0_123 = arith.constant 0 : index
    %316 = vector.load %arg9[%c1_121, %c0_122, %c0_123] : memref<2x1x128xf32, #tpu.memory_space<vmem>>, vector<1x1x128xf32>
    %317 = vector.shape_cast %316 : vector<1x1x128xf32> to vector<1x128xf32>
    %cst_124 = arith.constant dense<0.000000e+00> : vector<16xf32>
    %318 = vector.multi_reduction <add>, %313, %cst_124 [1] : vector<16x128xf32> to vector<16xf32>
    %319 = vector.shape_cast %318 : vector<16xf32> to vector<16x1xf32>
    %cst_125 = arith.constant 1.280000e+02 : f32
    %320 = vector.broadcast %cst_125 : f32 to vector<16x1xf32>
    %321 = arith.divf %319, %320 : vector<16x1xf32>
    %322 = vector.broadcast %321 : vector<16x1xf32> to vector<16x128xf32>
    %323 = arith.subf %313, %322 : vector<16x128xf32>
    %324 = vector.broadcast %321 : vector<16x1xf32> to vector<16x128xf32>
    %325 = arith.subf %313, %324 : vector<16x128xf32>
    %326 = arith.mulf %323, %325 : vector<16x128xf32>
    %cst_126 = arith.constant dense<0.000000e+00> : vector<16xf32>
    %327 = vector.multi_reduction <add>, %326, %cst_126 [1] : vector<16x128xf32> to vector<16xf32>
    %328 = vector.shape_cast %327 : vector<16xf32> to vector<16x1xf32>
    %cst_127 = arith.constant 1.280000e+02 : f32
    %329 = vector.broadcast %cst_127 : f32 to vector<16x1xf32>
    %330 = arith.divf %328, %329 : vector<16x1xf32>
    %331 = vector.broadcast %321 : vector<16x1xf32> to vector<16x128xf32>
    %332 = arith.subf %313, %331 : vector<16x128xf32>
    %cst_128 = arith.constant 9.99999996E-13 : f32
    %333 = vector.broadcast %cst_128 : f32 to vector<16x1xf32>
    %334 = arith.addf %330, %333 : vector<16x1xf32>
    %335 = math.rsqrt %334 : vector<16x1xf32>
    %336 = vector.broadcast %335 : vector<16x1xf32> to vector<16x128xf32>
    %337 = arith.mulf %332, %336 : vector<16x128xf32>
    %338 = vector.broadcast %315 : vector<1x128xf32> to vector<16x128xf32>
    %339 = arith.mulf %337, %338 : vector<16x128xf32>
    %340 = vector.broadcast %317 : vector<1x128xf32> to vector<16x128xf32>
    %341 = arith.addf %339, %340 : vector<16x128xf32>
    %c1_129 = arith.constant 1 : index
    %c0_130 = arith.constant 0 : index
    %c0_131 = arith.constant 0 : index
    %342 = vector.load %arg10[%c1_129, %c0_130, %c0_131] : memref<2x128x256xf32, #tpu.memory_space<vmem>>, vector<1x128x256xf32>
    %343 = vector.shape_cast %342 : vector<1x128x256xf32> to vector<128x256xf32>
    %cst_132 = arith.constant dense<0.000000e+00> : vector<16x256xf32>
    %344 = tpu.matmul %341, %343, %cst_132 {dimension_numbers = #tpu.dot_dimension_numbers<[1], [0], [0], [1], [0, 0, 1, 1], [], []>} : vector<16x128xf32>, vector<128x256xf32>, vector<16x256xf32> -> vector<16x256xf32>
    %c1_133 = arith.constant 1 : index
    %c0_134 = arith.constant 0 : index
    %c0_135 = arith.constant 0 : index
    %345 = vector.load %arg11[%c1_133, %c0_134, %c0_135] : memref<2x1x256xf32, #tpu.memory_space<vmem>>, vector<1x1x256xf32>
    %346 = vector.shape_cast %345 : vector<1x1x256xf32> to vector<1x256xf32>
    %347 = vector.broadcast %346 : vector<1x256xf32> to vector<16x256xf32>
    %348 = arith.addf %344, %347 : vector<16x256xf32>
    %cst_136 = arith.constant 5.000000e-01 : f32
    %349 = vector.broadcast %cst_136 : f32 to vector<16x256xf32>
    %350 = arith.mulf %349, %348 : vector<16x256xf32>
    %cst_137 = arith.constant 4.471500e-02 : f32
    %351 = vector.broadcast %cst_137 : f32 to vector<16x256xf32>
    %352 = arith.mulf %351, %348 : vector<16x256xf32>
    %353 = arith.mulf %352, %348 : vector<16x256xf32>
    %354 = arith.mulf %353, %348 : vector<16x256xf32>
    %355 = arith.addf %348, %354 : vector<16x256xf32>
    %cst_138 = arith.constant 0.797884583 : f32
    %356 = vector.broadcast %cst_138 : f32 to vector<16x256xf32>
    %357 = arith.mulf %356, %355 : vector<16x256xf32>
    %358 = math.tanh %357 : vector<16x256xf32>
    %cst_139 = arith.constant 1.000000e+00 : f32
    %359 = vector.broadcast %cst_139 : f32 to vector<16x256xf32>
    %360 = arith.addf %359, %358 : vector<16x256xf32>
    %361 = arith.mulf %350, %360 : vector<16x256xf32>
    %c1_140 = arith.constant 1 : index
    %c0_141 = arith.constant 0 : index
    %c0_142 = arith.constant 0 : index
    %362 = vector.load %arg12[%c1_140, %c0_141, %c0_142] : memref<2x256x128xf32, #tpu.memory_space<vmem>>, vector<1x256x128xf32>
    %363 = vector.shape_cast %362 : vector<1x256x128xf32> to vector<256x128xf32>
    %cst_143 = arith.constant dense<0.000000e+00> : vector<16x128xf32>
    %364 = tpu.matmul %361, %363, %cst_143 {dimension_numbers = #tpu.dot_dimension_numbers<[1], [0], [0], [1], [0, 0, 1, 1], [], []>} : vector<16x256xf32>, vector<256x128xf32>, vector<16x128xf32> -> vector<16x128xf32>
    %c1_144 = arith.constant 1 : index
    %c0_145 = arith.constant 0 : index
    %c0_146 = arith.constant 0 : index
    %365 = vector.load %arg13[%c1_144, %c0_145, %c0_146] : memref<2x1x128xf32, #tpu.memory_space<vmem>>, vector<1x1x128xf32>
    %366 = vector.shape_cast %365 : vector<1x1x128xf32> to vector<1x128xf32>
    %367 = vector.broadcast %366 : vector<1x128xf32> to vector<16x128xf32>
    %368 = arith.addf %364, %367 : vector<16x128xf32>
    %369 = arith.addf %368, %341 : vector<16x128xf32>
    %c1_147 = arith.constant 1 : index
    %c0_148 = arith.constant 0 : index
    %c0_149 = arith.constant 0 : index
    %370 = vector.load %arg14[%c1_147, %c0_148, %c0_149] : memref<2x1x128xf32, #tpu.memory_space<vmem>>, vector<1x1x128xf32>
    %371 = vector.shape_cast %370 : vector<1x1x128xf32> to vector<1x128xf32>
    %c1_150 = arith.constant 1 : index
    %c0_151 = arith.constant 0 : index
    %c0_152 = arith.constant 0 : index
    %372 = vector.load %arg15[%c1_150, %c0_151, %c0_152] : memref<2x1x128xf32, #tpu.memory_space<vmem>>, vector<1x1x128xf32>
    %373 = vector.shape_cast %372 : vector<1x1x128xf32> to vector<1x128xf32>
    %cst_153 = arith.constant dense<0.000000e+00> : vector<16xf32>
    %374 = vector.multi_reduction <add>, %369, %cst_153 [1] : vector<16x128xf32> to vector<16xf32>
    %375 = vector.shape_cast %374 : vector<16xf32> to vector<16x1xf32>
    %cst_154 = arith.constant 1.280000e+02 : f32
    %376 = vector.broadcast %cst_154 : f32 to vector<16x1xf32>
    %377 = arith.divf %375, %376 : vector<16x1xf32>
    %378 = vector.broadcast %377 : vector<16x1xf32> to vector<16x128xf32>
    %379 = arith.subf %369, %378 : vector<16x128xf32>
    %380 = vector.broadcast %377 : vector<16x1xf32> to vector<16x128xf32>
    %381 = arith.subf %369, %380 : vector<16x128xf32>
    %382 = arith.mulf %379, %381 : vector<16x128xf32>
    %cst_155 = arith.constant dense<0.000000e+00> : vector<16xf32>
    %383 = vector.multi_reduction <add>, %382, %cst_155 [1] : vector<16x128xf32> to vector<16xf32>
    %384 = vector.shape_cast %383 : vector<16xf32> to vector<16x1xf32>
    %cst_156 = arith.constant 1.280000e+02 : f32
    %385 = vector.broadcast %cst_156 : f32 to vector<16x1xf32>
    %386 = arith.divf %384, %385 : vector<16x1xf32>
    %387 = vector.broadcast %377 : vector<16x1xf32> to vector<16x128xf32>
    %388 = arith.subf %369, %387 : vector<16x128xf32>
    %cst_157 = arith.constant 9.99999996E-13 : f32
    %389 = vector.broadcast %cst_157 : f32 to vector<16x1xf32>
    %390 = arith.addf %386, %389 : vector<16x1xf32>
    %391 = math.rsqrt %390 : vector<16x1xf32>
    %392 = vector.broadcast %391 : vector<16x1xf32> to vector<16x128xf32>
    %393 = arith.mulf %388, %392 : vector<16x128xf32>
    %394 = vector.broadcast %371 : vector<1x128xf32> to vector<16x128xf32>
    %395 = arith.mulf %393, %394 : vector<16x128xf32>
    %396 = vector.broadcast %373 : vector<1x128xf32> to vector<16x128xf32>
    %397 = arith.addf %395, %396 : vector<16x128xf32>
    %c0_158 = arith.constant 0 : index
    %c0_159 = arith.constant 0 : index
    %398 = vector.load %arg16[%c0_158, %c0_159] : memref<8x16xf32, #tpu.memory_space<vmem>>, vector<8x16xf32>
    %cst_160 = arith.constant dense<0.000000e+00> : vector<8x128xf32>
    %399 = tpu.matmul %398, %397, %cst_160 {dimension_numbers = #tpu.dot_dimension_numbers<[1], [0], [0], [1], [0, 0, 1, 1], [], []>} : vector<8x16xf32>, vector<16x128xf32>, vector<8x128xf32> -> vector<8x128xf32>
    %c0_161 = arith.constant 0 : index
    %c0_162 = arith.constant 0 : index
    %400 = vector.load %arg17[%c0_161, %c0_162] : memref<128x128xf32, #tpu.memory_space<vmem>>, vector<128x128xf32>
    %cst_163 = arith.constant dense<0.000000e+00> : vector<8x128xf32>
    %401 = tpu.matmul %399, %400, %cst_163 {dimension_numbers = #tpu.dot_dimension_numbers<[1], [0], [0], [1], [0, 0, 1, 1], [], []>} : vector<8x128xf32>, vector<128x128xf32>, vector<8x128xf32> -> vector<8x128xf32>
    %c0_164 = arith.constant 0 : index
    %c0_165 = arith.constant 0 : index
    %402 = vector.load %arg18[%c0_164, %c0_165] : memref<1x128xf32, #tpu.memory_space<vmem>>, vector<1x128xf32>
    %403 = vector.broadcast %402 : vector<1x128xf32> to vector<8x128xf32>
    %404 = arith.addf %401, %403 : vector<8x128xf32>
    %c0_166 = arith.constant 0 : index
    %c0_167 = arith.constant 0 : index
    %405 = vector.load %arg19[%c0_166, %c0_167] : memref<8x1xi32, #tpu.memory_space<vmem>>, vector<8x1xi32>
    %cst_168 = arith.constant dense<0xFF800000> : vector<8xf32>
    %406 = vector.multi_reduction <maximumf>, %404, %cst_168 [1] : vector<8x128xf32> to vector<8xf32>
    %407 = vector.shape_cast %406 : vector<8xf32> to vector<8x1xf32>
    %408 = vector.broadcast %407 : vector<8x1xf32> to vector<8x128xf32>
    %409 = arith.subf %404, %408 : vector<8x128xf32>
    %410 = math.exp %409 : vector<8x128xf32>
    %cst_169 = arith.constant dense<0.000000e+00> : vector<8xf32>
    %411 = vector.multi_reduction <add>, %410, %cst_169 [1] : vector<8x128xf32> to vector<8xf32>
    %412 = vector.shape_cast %411 : vector<8xf32> to vector<8x1xf32>
    %413 = math.log %412 : vector<8x1xf32>
    %414 = arith.addf %413, %407 : vector<8x1xf32>
    %415 = tpu.iota {dimensions = array<i32: 1>} : vector<8x128xi32>
    %416 = vector.broadcast %405 : vector<8x1xi32> to vector<8x128xi32>
    %417 = arith.cmpi eq, %415, %416 : vector<8x128xi32>
    %418 = arith.extui %417 : vector<8x128xi1> to vector<8x128xi32>
    %419 = arith.sitofp %418 : vector<8x128xi32> to vector<8x128xf32>
    %420 = arith.mulf %419, %404 : vector<8x128xf32>
    %cst_170 = arith.constant dense<0.000000e+00> : vector<8xf32>
    %421 = vector.multi_reduction <add>, %420, %cst_170 [1] : vector<8x128xf32> to vector<8xf32>
    %422 = vector.shape_cast %421 : vector<8xf32> to vector<8x1xf32>
    %c-1_i32 = arith.constant -1 : i32
    %423 = vector.broadcast %c-1_i32 : i32 to vector<8x1xi32>
    %424 = arith.cmpi ne, %405, %423 : vector<8x1xi32>
    %425 = arith.extui %424 : vector<8x1xi1> to vector<8x1xi32>
    %426 = arith.sitofp %425 : vector<8x1xi32> to vector<8x1xf32>
    %427 = arith.subf %414, %422 : vector<8x1xf32>
    %428 = arith.mulf %427, %426 : vector<8x1xf32>
    %429 = vector.shape_cast %428 : vector<8x1xf32> to vector<1x8x1xf32>
    %cst_171 = arith.constant dense<0.000000e+00> : vector<1xf32>
    %430 = vector.multi_reduction <add>, %429, %cst_171 [1, 2] : vector<1x8x1xf32> to vector<1xf32>
    %431 = vector.shape_cast %430 : vector<1xf32> to vector<1x1x1xf32>
    %432 = vector.extract %431[0, 0, 0] : f32 from vector<1x1x1xf32>
    %433 = vector.shape_cast %426 : vector<8x1xf32> to vector<1x8x1xf32>
    %cst_172 = arith.constant dense<0.000000e+00> : vector<1xf32>
    %434 = vector.multi_reduction <add>, %433, %cst_172 [1, 2] : vector<1x8x1xf32> to vector<1xf32>
    %435 = vector.shape_cast %434 : vector<1xf32> to vector<1x1x1xf32>
    %436 = vector.extract %435[0, 0, 0] : f32 from vector<1x1x1xf32>
    %437 = arith.divf %432, %436 : f32
    %c0_173 = arith.constant 0 : index
    %c0_174 = arith.constant 0 : index
    %438 = memref.load %arg20[%c0_173, %c0_174] : memref<1x1xf32, #tpu.memory_space<smem>>
    memref.store %437, %arg20[%c0_173, %c0_174] : memref<1x1xf32, #tpu.memory_space<smem>>
    return
  }
}

</mosaic_0001>

<llo_original>
// kernel: bert_ner_forward.1
$region0: #{bert_ner_forward.1}
  #allocation0 [shape = 'u32[]', space=smem, size = 0x4, offset = 0x4, fixed_abs, tag = 'smem constant byte address 0x4 - core index']
  #allocation1 [shape = 'u32[144,128]{1,0:T(1,128)}', space=vmem, size = 0x12000, scoped, tag = 'internal scratch']
  %s0 = inlined_call_operand.vmem [shape: f32[16,128], index: 0, kind: input, shape index: {}]
  %s1 = inlined_call_operand.vmem [shape: f32[2,8], index: 1, kind: input, shape index: {}]
  %s2 = inlined_call_operand.vmem [shape: f32[1,128], index: 2, kind: input, shape index: {}]
  %s3 = inlined_call_operand.vmem [shape: f32[1,128], index: 3, kind: input, shape index: {}]
  %s4 = inlined_call_operand.hbm [shape: f32[2,128,384], index: 4, kind: input, shape index: {}]
  %s5 = inlined_call_operand.vmem [shape: f32[2,1,384], index: 5, kind: input, shape index: {}]
  %s6 = inlined_call_operand.vmem [shape: f32[2,128,128], index: 6, kind: input, shape index: {}]
  %s7 = inlined_call_operand.vmem [shape: f32[2,1,128], index: 7, kind: input, shape index: {}]
  %s8 = inlined_call_operand.vmem [shape: f32[2,1,128], index: 8, kind: input, shape index: {}]
  %s9 = inlined_call_operand.vmem [shape: f32[2,1,128], index: 9, kind: input, shape index: {}]
  %s10 = inlined_call_operand.hbm [shape: f32[2,128,256], index: 10, kind: input, shape index: {}]
  %s11 = inlined_call_operand.vmem [shape: f32[2,1,256], index: 11, kind: input, shape index: {}]
  %s12 = inlined_call_operand.hbm [shape: f32[2,256,128], index: 12, kind: input, shape index: {}]
  %s13 = inlined_call_operand.vmem [shape: f32[2,1,128], index: 13, kind: input, shape index: {}]
  %s14 = inlined_call_operand.hbm [shape: f32[2,1,128], index: 14, kind: input, shape index: {}]
  %s15 = inlined_call_operand.hbm [shape: f32[2,1,128], index: 15, kind: input, shape index: {}]
  %s16 = inlined_call_operand.vmem [shape: f32[8,16], index: 16, kind: input, shape index: {}]
  %s17 = inlined_call_operand.hbm [shape: f32[128,128], index: 17, kind: input, shape index: {}]
  %s18 = inlined_call_operand.hbm [shape: f32[1,128], index: 18, kind: input, shape index: {}]
  %s19 = inlined_call_operand.vmem [shape: s32[8,1], index: 19, kind: input, shape index: {}]
  %s20 = inlined_call_operand.hbm [shape: f32[1,1], index: 20, kind: output, shape index: {}]
  %s21 = sld [smem:[#allocation0]]
  $region118: #{bert_ner_forward.1} parent=0
    _
  %s23 = ssub.s32 1, %s21
  %s24 = scalar_select 0, %s23, %s21
  $region1: #{bert_ner_forward.1} parent=0
    #allocation2 [shape = 'u8[393216]{0}', space=vmem, size = 0x60000, scoped, tag = 'input window, operand 4, single buffered']
    #allocation3 [shape = 's32[1]{0}', space=sflag, size = 0x4, scoped, tag = 'scoped memory for bert_ner_forward.1']
    #allocation4 [shape = 's32[1]{0}', space=sflag, size = 0x4, scoped, tag = 'scoped memory for bert_ner_forward.1']
    #allocation5 [shape = 'u8[262144]{0}', space=vmem, size = 0x40000, scoped, tag = 'input window, operand 10, single buffered']
    #allocation6 [shape = 's32[1]{0}', space=sflag, size = 0x4, scoped, tag = 'scoped memory for bert_ner_forward.1']
    #allocation7 [shape = 'u8[262144]{0}', space=vmem, size = 0x40000, scoped, tag = 'input window, operand 12, single buffered']
    #allocation8 [shape = 'u8[1024]{0}', space=vmem, size = 0x400, scoped, tag = 'input window, operand 14, single buffered']
    #allocation9 [shape = 's32[1]{0}', space=sflag, size = 0x4, scoped, tag = 'scoped memory for bert_ner_forward.1']
    #allocation10 [shape = 'u8[1024]{0}', space=vmem, size = 0x400, scoped, tag = 'input window, operand 15, single buffered']
    #allocation11 [shape = 'u8[65536]{0}', space=vmem, size = 0x10000, scoped, tag = 'input window, operand 17, single buffered']
    #allocation12 [shape = 's32[1]{0}', space=sflag, size = 0x4, scoped, tag = 'scoped memory for bert_ner_forward.1']
    #allocation13 [shape = 'u8[512]{0}', space=vmem, size = 0x400, scoped, tag = 'input window, operand 18, single buffered']
    #allocation14 [shape = 'u8[512]{0}', space=smem, size = 0x200, scoped, tag = 'output window, operand 0, single buffered']
    %25 = vsyncpa [#allocation3], 0
    %26 = vsyncpa [#allocation6], 0
    %27 = vsyncpa [#allocation9], 0
    %28 = vsyncpa [#allocation12], 0
    %29 = vsyncpa [#allocation4], 0
    // Predicated region
    $region2: #{bert_ner_forward.1} parent=1 // pred_check
      _
    $region3: #{bert_ner_forward.1} parent=1 // pred_check_branch
      %31 = sbr.rel (0) target = $region5
    $region4: #{bert_ner_forward.1} parent=1 // pred_region
      _
    $region5: #{bert_ner_forward.1} parent=1 // pred_fallthru
      _
    // Predicated region
    $region6: #{bert_ner_forward.1} parent=1 // pred_check
      _
    $region7: #{bert_ner_forward.1} parent=1 // pred_check_branch
      %33 = sbr.rel (0) target = $region9
    $region8: #{bert_ner_forward.1} parent=1 // pred_region
      _
    $region9: #{bert_ner_forward.1} parent=1 // pred_fallthru
      _
    // Predicated region
    $region10: #{bert_ner_forward.1} parent=1 // pred_check
      _
    $region11: #{bert_ner_forward.1} parent=1 // pred_check_branch
      %35 = sbr.rel (0) target = $region13
    $region12: #{bert_ner_forward.1} parent=1 // pred_region
      _
    $region13: #{bert_ner_forward.1} parent=1 // pred_fallthru
      _
    // Predicated region
    $region14: #{bert_ner_forward.1} parent=1 // pred_check
      _
    $region15: #{bert_ner_forward.1} parent=1 // pred_check_branch
      %37 = sbr.rel (0) target = $region17
    $region16: #{bert_ner_forward.1} parent=1 // pred_region
      _
    $region17: #{bert_ner_forward.1} parent=1 // pred_fallthru
      _
    // Predicated region
    $region18: #{bert_ner_forward.1} parent=1 // pred_check
      _
    $region19: #{bert_ner_forward.1} parent=1 // pred_check_branch
      %39 = sbr.rel (0) target = $region21
    $region20: #{bert_ner_forward.1} parent=1 // pred_region
      %s41 = ssub.s32 12288, 12288
      %42 = vsyncadd [#allocation3], %s41
      %s43 = sshll.u32 [#allocation2], 4
      %s44 = int_to_ptr.vmem [resolvable:$true] %s43
      %49 = dma.hbm_to_vmem [thread:$0]  %s4, 12288, %s44, [#allocation3], 384, 384, 24
    $region21: #{bert_ner_forward.1} parent=1 // pred_fallthru
      _
    // Predicated region
    $region22: #{bert_ner_forward.1} parent=1 // pred_check
      _
    $region23: #{bert_ner_forward.1} parent=1 // pred_check_branch
      %51 = sbr.rel (0) target = $region25
    $region24: #{bert_ner_forward.1} parent=1 // pred_region
      _
    $region25: #{bert_ner_forward.1} parent=1 // pred_fallthru
      _
    // Predicated region
    $region26: #{bert_ner_forward.1} parent=1 // pred_check
      _
    $region27: #{bert_ner_forward.1} parent=1 // pred_check_branch
      %53 = sbr.rel (0) target = $region29
    $region28: #{bert_ner_forward.1} parent=1 // pred_region
      _
    $region29: #{bert_ner_forward.1} parent=1 // pred_fallthru
      _
    // Predicated region
    $region30: #{bert_ner_forward.1} parent=1 // pred_check
      _
    $region31: #{bert_ner_forward.1} parent=1 // pred_check_branch
      %55 = sbr.rel (0) target = $region33
    $region32: #{bert_ner_forward.1} parent=1 // pred_region
      _
    $region33: #{bert_ner_forward.1} parent=1 // pred_fallthru
      _
    // Predicated region
    $region34: #{bert_ner_forward.1} parent=1 // pred_check
      _
    $region35: #{bert_ner_forward.1} parent=1 // pred_check_branch
      %57 = sbr.rel (0) target = $region37
    $region36: #{bert_ner_forward.1} parent=1 // pred_region
      _
    $region37: #{bert_ner_forward.1} parent=1 // pred_fallthru
      _
    // Predicated region
    $region38: #{bert_ner_forward.1} parent=1 // pred_check
      _
    $region39: #{bert_ner_forward.1} parent=1 // pred_check_branch
      %59 = sbr.rel (0) target = $region41
    $region40: #{bert_ner_forward.1} parent=1 // pred_region
      _
    $region41: #{bert_ner_forward.1} parent=1 // pred_fallthru
      _
    // Predicated region
    $region42: #{bert_ner_forward.1} parent=1 // pred_check
      _
    $region43: #{bert_ner_forward.1} parent=1 // pred_check_branch
      %61 = sbr.rel (0) target = $region45
    $region44: #{bert_ner_forward.1} parent=1 // pred_region
      %s63 = ssub.s32 8192, 8192
      %64 = vsyncadd [#allocation6], %s63
      %s65 = sshll.u32 [#allocation5], 4
      %s66 = int_to_ptr.vmem [resolvable:$true] %s65
      %71 = dma.hbm_to_vmem [thread:$0]  %s10, 8192, %s66, [#allocation6], 256, 256, 16
    $region45: #{bert_ner_forward.1} parent=1 // pred_fallthru
      _
    // Predicated region
    $region46: #{bert_ner_forward.1} parent=1 // pred_check
      _
    $region47: #{bert_ner_forward.1} parent=1 // pred_check_branch
      %73 = sbr.rel (0) target = $region49
    $region48: #{bert_ner_forward.1} parent=1 // pred_region
      _
    $region49: #{bert_ner_forward.1} parent=1 // pred_fallthru
      _
    // Predicated region
    $region50: #{bert_ner_forward.1} parent=1 // pred_check
      _
    $region51: #{bert_ner_forward.1} parent=1 // pred_check_branch
      %75 = sbr.rel (0) target = $region53
    $region52: #{bert_ner_forward.1} parent=1 // pred_region
      %s77 = ssub.s32 8192, 8192
      %78 = vsyncadd [#allocation6], %s77
      %s79 = sshll.u32 [#allocation7], 4
      %s80 = int_to_ptr.vmem [resolvable:$true] %s79
      %85 = dma.hbm_to_vmem [thread:$0]  %s12, 8192, %s80, [#allocation6], 128, 128, 8
    $region53: #{bert_ner_forward.1} parent=1 // pred_fallthru
      _
    // Predicated region
    $region54: #{bert_ner_forward.1} parent=1 // pred_check
      _
    $region55: #{bert_ner_forward.1} parent=1 // pred_check_branch
      %87 = sbr.rel (0) target = $region57
    $region56: #{bert_ner_forward.1} parent=1 // pred_region
      _
    $region57: #{bert_ner_forward.1} parent=1 // pred_fallthru
      _
    // Predicated region
    $region58: #{bert_ner_forward.1} parent=1 // pred_check
      _
    $region59: #{bert_ner_forward.1} parent=1 // pred_check_branch
      %89 = sbr.rel (0) target = $region61
    $region60: #{bert_ner_forward.1} parent=1 // pred_region
      %s91 = ssub.s32 32, 32
      %92 = vsyncadd [#allocation9], %s91
      %s93 = sshll.u32 [#allocation8], 4
      %s94 = int_to_ptr.vmem [resolvable:$true] %s93
      %99 = dma.hbm_to_vmem [thread:$0]  %s14, 32, %s94, [#allocation9], 16, 16, 1
    $region61: #{bert_ner_forward.1} parent=1 // pred_fallthru
      _
    // Predicated region
    $region62: #{bert_ner_forward.1} parent=1 // pred_check
      _
    $region63: #{bert_ner_forward.1} parent=1 // pred_check_branch
      %101 = sbr.rel (0) target = $region65
    $region64: #{bert_ner_forward.1} parent=1 // pred_region
      %s103 = ssub.s32 32, 32
      %104 = vsyncadd [#allocation9], %s103
      %s105 = sshll.u32 [#allocation10], 4
      %s106 = int_to_ptr.vmem [resolvable:$true] %s105
      %111 = dma.hbm_to_vmem [thread:$0]  %s15, 32, %s106, [#allocation9], 16, 16, 1
    $region65: #{bert_ner_forward.1} parent=1 // pred_fallthru
      _
    // Predicated region
    $region66: #{bert_ner_forward.1} parent=1 // pred_check
      _
    $region67: #{bert_ner_forward.1} parent=1 // pred_check_branch
      %113 = sbr.rel (0) target = $region69
    $region68: #{bert_ner_forward.1} parent=1 // pred_region
      _
    $region69: #{bert_ner_forward.1} parent=1 // pred_fallthru
      _
    // Predicated region
    $region70: #{bert_ner_forward.1} parent=1 // pred_check
      _
    $region71: #{bert_ner_forward.1} parent=1 // pred_check_branch
      %115 = sbr.rel (0) target = $region73
    $region72: #{bert_ner_forward.1} parent=1 // pred_region
      %s117 = ssub.s32 2048, 2048
      %118 = vsyncadd [#allocation12], %s117
      %s119 = sshll.u32 [#allocation11], 4
      %s120 = int_to_ptr.vmem [resolvable:$true] %s119
      %125 = dma.hbm_to_vmem [thread:$0]  %s17, 2048, %s120, [#allocation12], 128, 128, 8
    $region73: #{bert_ner_forward.1} parent=1 // pred_fallthru
      _
    // Predicated region
    $region74: #{bert_ner_forward.1} parent=1 // pred_check
      _
    $region75: #{bert_ner_forward.1} parent=1 // pred_check_branch
      %127 = sbr.rel (0) target = $region77
    $region76: #{bert_ner_forward.1} parent=1 // pred_region
      %s129 = ssub.s32 16, 16
      %130 = vsyncadd [#allocation12], %s129
      %s132 = sshll.u32 [#allocation13], 4
      %s133 = int_to_ptr.vmem [resolvable:$true] %s132
      %135 = dma.hbm_to_vmem [thread:$0]  %s18, 16, %s133, [#allocation12]
    $region77: #{bert_ner_forward.1} parent=1 // pred_fallthru
      _
    // Predicated region
    $region78: #{bert_ner_forward.1} parent=1 // pred_check
      _
    $region79: #{bert_ner_forward.1} parent=1 // pred_check_branch
      %137 = sbr.rel (0) target = $region81
    $region80: #{bert_ner_forward.1} parent=1 // pred_region
      _
    $region81: #{bert_ner_forward.1} parent=1 // pred_fallthru
      _
    // Predicated region
    $region82: #{bert_ner_forward.1} parent=1 // pred_check
      _
    $region83: #{bert_ner_forward.1} parent=1 // pred_check_branch
      %139 = sbr.rel (0) target = $region85
    $region84: #{bert_ner_forward.1} parent=1 // pred_region
      %140 = dma.done [#allocation3], 12288
    $region85: #{bert_ner_forward.1} parent=1 // pred_fallthru
      _
    // Predicated region
    $region86: #{bert_ner_forward.1} parent=1 // pred_check
      _
    $region87: #{bert_ner_forward.1} parent=1 // pred_check_branch
      %142 = sbr.rel (0) target = $region89
    $region88: #{bert_ner_forward.1} parent=1 // pred_region
      %143 = dma.done [#allocation6], 8192
    $region89: #{bert_ner_forward.1} parent=1 // pred_fallthru
      _
    // Predicated region
    $region90: #{bert_ner_forward.1} parent=1 // pred_check
      _
    $region91: #{bert_ner_forward.1} parent=1 // pred_check_branch
      %145 = sbr.rel (0) target = $region93
    $region92: #{bert_ner_forward.1} parent=1 // pred_region
      %146 = dma.done [#allocation6], 8192
    $region93: #{bert_ner_forward.1} parent=1 // pred_fallthru
      _
    // Predicated region
    $region94: #{bert_ner_forward.1} parent=1 // pred_check
      _
    $region95: #{bert_ner_forward.1} parent=1 // pred_check_branch
      %148 = sbr.rel (0) target = $region97
    $region96: #{bert_ner_forward.1} parent=1 // pred_region
      %149 = dma.done [#allocation9], 32
    $region97: #{bert_ner_forward.1} parent=1 // pred_fallthru
      _
    // Predicated region
    $region98: #{bert_ner_forward.1} parent=1 // pred_check
      _
    $region99: #{bert_ner_forward.1} parent=1 // pred_check_branch
      %151 = sbr.rel (0) target = $region101
    $region100: #{bert_ner_forward.1} parent=1 // pred_region
      %152 = dma.done [#allocation9], 32
    $region101: #{bert_ner_forward.1} parent=1 // pred_fallthru
      _
    // Predicated region
    $region102: #{bert_ner_forward.1} parent=1 // pred_check
      _
    $region103: #{bert_ner_forward.1} parent=1 // pred_check_branch
      %154 = sbr.rel (0) target = $region105
    $region104: #{bert_ner_forward.1} parent=1 // pred_region
      %155 = dma.done [#allocation12], 2048
    $region105: #{bert_ner_forward.1} parent=1 // pred_fallthru
      _
    // Predicated region
    $region106: #{bert_ner_forward.1} parent=1 // pred_check
      _
    $region107: #{bert_ner_forward.1} parent=1 // pred_check_branch
      %157 = sbr.rel (0) target = $region109
    $region108: #{bert_ner_forward.1} parent=1 // pred_region
      %158 = dma.done [#allocation12], 16
    $region109: #{bert_ner_forward.1} parent=1 // pred_fallthru
      _
    %v159 = vld [vmem:[%s0] sm:$0xff]
    %v160 = vld [vmem:[%s0 + $0x8] sm:$0xff]
    %v161 = vld [vmem:[%s2] sm:$0x1]
    %v162 = vld [vmem:[%s3] sm:$0x1]
    %163 = vadd.xlane.f32.xlu0 %v159
    %v164 = vpop.xlane.xlu0 %163
    %165 = vadd.xlane.f32.xlu0 %v160
    %v166 = vpop.xlane.xlu0 %165
    %v167 = vrcp.pop 128.0
    %v168 = vmul.f32 %v164, %v167
    %v169 = vmul.f32 %v166, %v167
    %v170 = vsub.f32 %v159, %v168
    %v171 = vsub.f32 %v160, %v169
    %v172 = vmul.f32 %v170, %v170
    %v173 = vmul.f32 %v171, %v171
    %174 = vadd.xlane.f32.xlu0 %v172
    %v175 = vpop.xlane.xlu0 %174
    %176 = vadd.xlane.f32.xlu0 %v173
    %v177 = vpop.xlane.xlu0 %176
    %v178 = vmul.f32 %v175, %v167
    %v179 = vmul.f32 %v177, %v167
    %v180 = vadd.f32 %v178, 1e-12
    %v181 = vadd.f32 %v179, 1e-12
    %v182 = vrsqrt.pop %v180
    %v183 = vrsqrt.pop %v181
    %v184 = vmul.f32 %v170, %v182
    %v185 = vmul.f32 %v171, %v183
    %v187 = vlaneseq
    %v188 = vshrl.u32 %v187, 7
    %v189 = vsub.s32 0, %v188
    %v190 = vrot.slane %v161, %v189
    %v192 = vmul.f32 %v184, %v190
    %v193 = vmul.f32 %v185, %v190
    %v195 = vlaneseq
    %v196 = vshrl.u32 %v195, 7
    %v197 = vsub.s32 0, %v196
    %v198 = vrot.slane %v162, %v197
    %v200 = vadd.f32 %v192, %v198
    %v201 = vadd.f32 %v193, %v198
    %v202 = vld [vmem:[%s1] sm:$0x3]
    %v203 = vld [vmem:[#allocation2] sm:$0xff]
    %v204 = vld [vmem:[#allocation2 + $0x8] sm:$0xff]
    %v205 = vld [vmem:[#allocation2 + $0x10] sm:$0xff]
    %v206 = vld [vmem:[#allocation2 + $0x18] sm:$0xff]
    %v207 = vld [vmem:[#allocation2 + $0x20] sm:$0xff]
    %v208 = vld [vmem:[#allocation2 + $0x28] sm:$0xff]
    %v209 = vld [vmem:[#allocation2 + $0x30] sm:$0xff]
    %v210 = vld [vmem:[#allocation2 + $0x38] sm:$0xff]
    %v211 = vld [vmem:[#allocation2 + $0x40] sm:$0xff]
    %v212 = vld [vmem:[#allocation2 + $0x48] sm:$0xff]
    %v213 = vld [vmem:[#allocation2 + $0x50] sm:$0xff]
    %v214 = vld [vmem:[#allocation2 + $0x58] sm:$0xff]
    %v215 = vld [vmem:[#allocation2 + $0x60] sm:$0xff]
    %v216 = vld [vmem:[#allocation2 + $0x68] sm:$0xff]
    %v217 = vld [vmem:[#allocation2 + $0x70] sm:$0xff]
    %v218 = vld [vmem:[#allocation2 + $0x78] sm:$0xff]
    %v219 = vld [vmem:[#allocation2 + $0x80] sm:$0xff]
    %v220 = vld [vmem:[#allocation2 + $0x88] sm:$0xff]
    %v221 = vld [vmem:[#allocation2 + $0x90] sm:$0xff]
    %v222 = vld [vmem:[#allocation2 + $0x98] sm:$0xff]
    %v223 = vld [vmem:[#allocation2 + $0xa0] sm:$0xff]
    %v224 = vld [vmem:[#allocation2 + $0xa8] sm:$0xff]
    %v225 = vld [vmem:[#allocation2 + $0xb0] sm:$0xff]
    %v226 = vld [vmem:[#allocation2 + $0xb8] sm:$0xff]
    %v227 = vld [vmem:[#allocation2 + $0xc0] sm:$0xff]
    %v228 = vld [vmem:[#allocation2 + $0xc8] sm:$0xff]
    %v229 = vld [vmem:[#allocation2 + $0xd0] sm:$0xff]
    %v230 = vld [vmem:[#allocation2 + $0xd8] sm:$0xff]
    %v231 = vld [vmem:[#allocation2 + $0xe0] sm:$0xff]
    %v232 = vld [vmem:[#allocation2 + $0xe8] sm:$0xff]
    %v233 = vld [vmem:[#allocation2 + $0xf0] sm:$0xff]
    %v234 = vld [vmem:[#allocation2 + $0xf8] sm:$0xff]
    %v235 = vld [vmem:[#allocation2 + $0x100] sm:$0xff]
    %v236 = vld [vmem:[#allocation2 + $0x108] sm:$0xff]
    %v237 = vld [vmem:[#allocation2 + $0x110] sm:$0xff]
    %v238 = vld [vmem:[#allocation2 + $0x118] sm:$0xff]
    %v239 = vld [vmem:[#allocation2 + $0x120] sm:$0xff]
    %v240 = vld [vmem:[#allocation2 + $0x128] sm:$0xff]
    %v241 = vld [vmem:[#allocation2 + $0x130] sm:$0xff]
    %v242 = vld [vmem:[#allocation2 + $0x138] sm:$0xff]
    %v243 = vld [vmem:[#allocation2 + $0x140] sm:$0xff]
    %v244 = vld [vmem:[#allocation2 + $0x148] sm:$0xff]
    %v245 = vld [vmem:[#allocation2 + $0x150] sm:$0xff]
    %v246 = vld [vmem:[#allocation2 + $0x158] sm:$0xff]
    %v247 = vld [vmem:[#allocation2 + $0x160] sm:$0xff]
    %v248 = vld [vmem:[#allocation2 + $0x168] sm:$0xff]
    %v249 = vld [vmem:[#allocation2 + $0x170] sm:$0xff]
    %v250 = vld [vmem:[#allocation2 + $0x178] sm:$0xff]
    %v251 = vld [vmem:[%s5] sm:$0x7]
    %v253 = vlaneseq
    %v254 = vshrl.u32 %v253, 7
    %v255 = vsub.s32 0, %v254
    %v256 = vrot.slane %v251, %v255
    %v257 = vlaneseq
    %v258 = vshrl.u32 %v257, 7
    %v259 = vsub.s32 1, %v258
    %v260 = vrot.slane %v251, %v259
    %v261 = vlaneseq
    %v262 = vshrl.u32 %v261, 7
    %v263 = vsub.s32 2, %v262
    %v264 = vrot.slane %v251, %v263
    %268 = vmatprep.subr.mxu0 %v249
    %269 = vmatpush1.msra.mxu0 %v248
    %270 = vmatprep.subr.mxu0 %v246
    %271 = vmatpush1.msra.mxu0 %v245
    %272 = vmatprep.subr.mxu0 %v243
    %273 = vmatpush1.msra.mxu0 %v242
    %274 = vmatprep.subr.mxu0 %v240
    %275 = vmatpush1.msra.mxu0 %v239
    %276 = vmatprep.subr.mxu0 %v237
    %277 = vmatpush1.msra.mxu0 %v236
    %278 = vmatprep.subr.mxu0 %v234
    %279 = vmatpush1.msra.mxu0 %v233
    %280 = vmatprep.subr.mxu0 %v231
    %281 = vmatpush1.msra.mxu0 %v230
    %282 = vmatprep.subr.mxu0 %v228
    %283 = vmatpush1.msra.mxu0 %v227
    %284 = vmatprep.subr.mxu0 %v225
    %285 = vmatpush1.msra.mxu0 %v224
    %286 = vmatprep.subr.mxu0 %v222
    %287 = vmatpush1.msra.mxu0 %v221
    %288 = vmatprep.subr.mxu0 %v219
    %289 = vmatpush1.msra.mxu0 %v218
    %290 = vmatprep.subr.mxu0 %v216
    %291 = vmatpush1.msra.mxu0 %v215
    %292 = vmatprep.subr.mxu0 %v213
    %293 = vmatpush1.msra.mxu0 %v212
    %294 = vmatprep.subr.mxu0 %v210
    %295 = vmatpush1.msra.mxu0 %v209
    %296 = vmatprep.subr.mxu0 %v207
    %297 = vmatpush1.msra.mxu0 %v206
    %298 = vmatprep.subr.mxu0 %v204
    %299 = vmatpush1.msra.mxu0 %v203
    %300 = vmatprep.subr.mxu0 0.0
    %301 = vmatpush2.msra.mxu0 0.0
    %302 = vmatprep.subr.mxu0 0.0
    %303 = vmatpush2.msra.mxu0 0.0
    %304 = vmatprep.subr.mxu0 0.0
    %305 = vmatpush2.msra.mxu0 0.0
    %306 = vmatprep.subr.mxu0 0.0
    %307 = vmatpush2.msra.mxu0 0.0
    %308 = vmatprep.subr.mxu0 0.0
    %309 = vmatpush2.msra.mxu0 0.0
    %310 = vmatprep.subr.mxu0 0.0
    %311 = vmatpush2.msra.mxu0 0.0
    %312 = vmatprep.subr.mxu0 0.0
    %313 = vmatpush2.msra.mxu0 0.0
    %314 = vmatprep.subr.mxu0 0.0
    %315 = vmatpush2.msra.mxu0 0.0
    %316 = vmatprep.subr.mxu0 0.0
    %317 = vmatpush2.msra.mxu0 0.0
    %318 = vmatprep.subr.mxu0 0.0
    %319 = vmatpush2.msra.mxu0 0.0
    %320 = vmatprep.subr.mxu0 0.0
    %321 = vmatpush2.msra.mxu0 0.0
    %322 = vmatprep.subr.mxu0 0.0
    %323 = vmatpush2.msra.mxu0 0.0
    %324 = vmatprep.subr.mxu0 0.0
    %325 = vmatpush2.msra.mxu0 0.0
    %326 = vmatprep.subr.mxu0 0.0
    %327 = vmatpush2.msra.mxu0 0.0
    %328 = vmatprep.subr.mxu0 0.0
    %329 = vmatpush2.msra.mxu0 0.0
    %330 = vmatprep.subr.mxu0 0.0
    %331 = vmatpush2.msra.mxu0 0.0
    %332 = vmatprep.mubr.f32.mxu0 0.0
    %333 = vmatmul.mubr.f32.gmra.mxu0 %v200
    %v334 = vpop.f32.mrf.mxu0
    %v335 = vadd.f32 %v256, %v334
    %v336 = vpop.f32.mrf.mxu0
    %v337 = vadd.f32 %v260, %v336
    %338 = vmatprep.mubr.f32.mxu0 0.0
    %339 = vmatmul.mubr.f32.gmra.mxu0 %v201
    %v340 = vpop.f32.mrf.mxu0
    %v341 = vadd.f32 %v256, %v340
    %v342 = vpop.f32.mrf.mxu0
    %v343 = vadd.f32 %v260, %v342
    %344 = vdwg.mxu0
    %345 = vmatprep.subr.mxu0 0.0
    %346 = vmatpush1.msra.mxu0 %v250
    %347 = vmatprep.subr.mxu0 0.0
    %348 = vmatpush1.msra.mxu0 %v247
    %349 = vmatprep.subr.mxu0 0.0
    %350 = vmatpush1.msra.mxu0 %v244
    %351 = vmatprep.subr.mxu0 0.0
    %352 = vmatpush1.msra.mxu0 %v241
    %353 = vmatprep.subr.mxu0 0.0
    %354 = vmatpush1.msra.mxu0 %v238
    %355 = vmatprep.subr.mxu0 0.0
    %356 = vmatpush1.msra.mxu0 %v235
    %357 = vmatprep.subr.mxu0 0.0
    %358 = vmatpush1.msra.mxu0 %v232
    %359 = vmatprep.subr.mxu0 0.0
    %360 = vmatpush1.msra.mxu0 %v229
    %361 = vmatprep.subr.mxu0 0.0
    %362 = vmatpush1.msra.mxu0 %v226
    %363 = vmatprep.subr.mxu0 0.0
    %364 = vmatpush1.msra.mxu0 %v223
    %365 = vmatprep.subr.mxu0 0.0
    %366 = vmatpush1.msra.mxu0 %v220
    %367 = vmatprep.subr.mxu0 0.0
    %368 = vmatpush1.msra.mxu0 %v217
    %369 = vmatprep.subr.mxu0 0.0
    %370 = vmatpush1.msra.mxu0 %v214
    %371 = vmatprep.subr.mxu0 0.0
    %372 = vmatpush1.msra.mxu0 %v211
    %373 = vmatprep.subr.mxu0 0.0
    %374 = vmatpush1.msra.mxu0 %v208
    %375 = vmatprep.subr.mxu0 0.0
    %376 = vmatpush1.msra.mxu0 %v205
    %377 = vmatprep.subr.mxu0 0.0
    %378 = vmatpush2.msra.mxu0 0.0
    %379 = vmatprep.subr.mxu0 0.0
    %380 = vmatpush2.msra.mxu0 0.0
    %381 = vmatprep.subr.mxu0 0.0
    %382 = vmatpush2.msra.mxu0 0.0
    %383 = vmatprep.subr.mxu0 0.0
    %384 = vmatpush2.msra.mxu0 0.0
    %385 = vmatprep.subr.mxu0 0.0
    %386 = vmatpush2.msra.mxu0 0.0
    %387 = vmatprep.subr.mxu0 0.0
    %388 = vmatpush2.msra.mxu0 0.0
    %389 = vmatprep.subr.mxu0 0.0
    %390 = vmatpush2.msra.mxu0 0.0
    %391 = vmatprep.subr.mxu0 0.0
    %392 = vmatpush2.msra.mxu0 0.0
    %393 = vmatprep.subr.mxu0 0.0
    %394 = vmatpush2.msra.mxu0 0.0
    %395 = vmatprep.subr.mxu0 0.0
    %396 = vmatpush2.msra.mxu0 0.0
    %397 = vmatprep.subr.mxu0 0.0
    %398 = vmatpush2.msra.mxu0 0.0
    %399 = vmatprep.subr.mxu0 0.0
    %400 = vmatpush2.msra.mxu0 0.0
    %401 = vmatprep.subr.mxu0 0.0
    %402 = vmatpush2.msra.mxu0 0.0
    %403 = vmatprep.subr.mxu0 0.0
    %404 = vmatpush2.msra.mxu0 0.0
    %405 = vmatprep.subr.mxu0 0.0
    %406 = vmatpush2.msra.mxu0 0.0
    %407 = vmatprep.subr.mxu0 0.0
    %408 = vmatpush2.msra.mxu0 0.0
    %409 = vmatprep.mubr.f32.mxu0 0.0
    %410 = vmatmul.mubr.f32.gmra.mxu0 %v200
    %v411 = vpop.f32.mrf.mxu0
    %v412 = vadd.f32 %v264, %v411
    %v413 = vpop.f32.mrf.mxu0
    %414 = vmatprep.mubr.f32.mxu0 0.0
    %415 = vmatmul.mubr.f32.gmra.mxu0 %v201
    %v416 = vpop.f32.mrf.mxu0
    %v417 = vadd.f32 %v264, %v416
    %v418 = vpop.f32.mrf.mxu0
    %419 = vdwg.mxu0
    %vm420 = vcmask 523264
    %v422 = vsel %vm420, %v335, 0
    %v425 = vsel %vm420, %v337, 0
    %427 = vmatprep.subr.mxu0 0.0
    %428 = vmatpush1.xpose.msra.mxu0 0.0
    %429 = vmatprep.subr.mxu0 0.0
    %430 = vmatpush1.xpose.msra.mxu0 0.0
    %431 = vmatprep.subr.mxu0 0.0
    %432 = vmatpush1.xpose.msra.mxu0 0.0
    %433 = vmatprep.subr.mxu0 0.0
    %434 = vmatpush1.xpose.msra.mxu0 0.0
    %435 = vmatprep.subr.mxu0 0.0
    %436 = vmatpush1.xpose.msra.mxu0 0.0
    %437 = vmatprep.subr.mxu0 0.0
    %438 = vmatpush1.xpose.msra.mxu0 0.0
    %439 = vmatprep.subr.mxu0 0.0
    %440 = vmatpush1.xpose.msra.mxu0 0.0
    %441 = vmatprep.subr.mxu0 0.0
    %442 = vmatpush1.xpose.msra.mxu0 0.0
    %443 = vmatprep.subr.mxu0 0.0
    %444 = vmatpush1.xpose.msra.mxu0 0.0
    %445 = vmatprep.subr.mxu0 0.0
    %446 = vmatpush1.xpose.msra.mxu0 0.0
    %447 = vmatprep.subr.mxu0 0.0
    %448 = vmatpush1.xpose.msra.mxu0 0.0
    %449 = vmatprep.subr.mxu0 0.0
    %450 = vmatpush1.xpose.msra.mxu0 0.0
    %451 = vmatprep.subr.mxu0 0.0
    %452 = vmatpush1.xpose.msra.mxu0 0.0
    %453 = vmatprep.subr.mxu0 0.0
    %454 = vmatpush1.xpose.msra.mxu0 0.0
    %455 = vmatprep.subr.mxu0 0.0
    %456 = vmatpush1.xpose.msra.mxu0 0.0
    %457 = vmatprep.subr.mxu0 0.0
    %458 = vmatpush1.xpose.msra.mxu0 %v425
    %459 = vmatprep.subr.mxu0 0.0
    %460 = vmatpush2.xpose.msra.mxu0 0.0
    %461 = vmatprep.subr.mxu0 0.0
    %462 = vmatpush2.xpose.msra.mxu0 0.0
    %463 = vmatprep.subr.mxu0 0.0
    %464 = vmatpush2.xpose.msra.mxu0 0.0
    %465 = vmatprep.subr.mxu0 0.0
    %466 = vmatpush2.xpose.msra.mxu0 0.0
    %467 = vmatprep.subr.mxu0 0.0
    %468 = vmatpush2.xpose.msra.mxu0 0.0
    %469 = vmatprep.subr.mxu0 0.0
    %470 = vmatpush2.xpose.msra.mxu0 0.0
    %471 = vmatprep.subr.mxu0 0.0
    %472 = vmatpush2.xpose.msra.mxu0 0.0
    %473 = vmatprep.subr.mxu0 0.0
    %474 = vmatpush2.xpose.msra.mxu0 0.0
    %475 = vmatprep.subr.mxu0 0.0
    %476 = vmatpush2.xpose.msra.mxu0 0.0
    %477 = vmatprep.subr.mxu0 0.0
    %478 = vmatpush2.xpose.msra.mxu0 0.0
    %479 = vmatprep.subr.mxu0 0.0
    %480 = vmatpush2.xpose.msra.mxu0 0.0
    %481 = vmatprep.subr.mxu0 0.0
    %482 = vmatpush2.xpose.msra.mxu0 0.0
    %483 = vmatprep.subr.mxu0 0.0
    %484 = vmatpush2.xpose.msra.mxu0 0.0
    %485 = vmatprep.subr.mxu0 0.0
    %486 = vmatpush2.xpose.msra.mxu0 0.0
    %487 = vmatprep.subr.mxu0 0.0
    %488 = vmatpush2.xpose.msra.mxu0 0.0
    %489 = vmatprep.subr.mxu0 0.0
    %490 = vmatpush2.xpose.msra.mxu0 0.0
    %491 = vmatprep.mubr.f32.mxu0 0.0
    %492 = vmatmul.mubr.f32.gmra.mxu0 %v422
    %v493 = vpop.f32.mrf.mxu0
    %v494 = vadd.f32 0.0, %v493
    %v495 = vpop.f32.mrf.mxu0
    %496 = vdwg.mxu0
    %v497 = vmul.f32 %v494, 0.125
    %v498 = vlaneseq
    %v499 = vshrl.u32 %v498, 7
    %v500 = vsub.s32 0, %v499
    %v501 = vrot.slane %v202, %v500
    %v502 = vadd.f32 %v497, %v501
    %vm503 = vcmask 64512
    %v504 = vsel %vm503, %v502, -inf
    %505 = vmax.xlane.f32.xlu0 %v504
    %v506 = vpop.xlane.xlu0 %505
    %v507 = vsub.f32 %v502, %v506
    %v508 = vmul.f32 %v507, 1.442695
    %v509 = vpow.pop %v508
    %v510 = vsel %vm503, %v509, 0.0
    %511 = vadd.xlane.f32.xlu0 %v510
    %v512 = vpop.xlane.xlu0 %511
    %v513 = vrcp.pop %v512
    %v514 = vmul.f32 %v509, %v513
    %v516 = vsel %vm503, %v514, 0
    %518 = vmatprep.subr.mxu0 0.0
    %519 = vmatpush1.msra.mxu0 0.0
    %520 = vmatprep.subr.mxu0 0.0
    %521 = vmatpush1.msra.mxu0 0.0
    %522 = vmatprep.subr.mxu0 0.0
    %523 = vmatpush1.msra.mxu0 0.0
    %524 = vmatprep.subr.mxu0 0.0
    %525 = vmatpush1.msra.mxu0 0.0
    %526 = vmatprep.subr.mxu0 0.0
    %527 = vmatpush1.msra.mxu0 0.0
    %528 = vmatprep.subr.mxu0 0.0
    %529 = vmatpush1.msra.mxu0 0.0
    %530 = vmatprep.subr.mxu0 0.0
    %531 = vmatpush1.msra.mxu0 0.0
    %532 = vmatprep.subr.mxu0 0.0
    %533 = vmatpush1.msra.mxu0 0.0
    %534 = vmatprep.subr.mxu0 0.0
    %535 = vmatpush1.msra.mxu0 0.0
    %536 = vmatprep.subr.mxu0 0.0
    %537 = vmatpush1.msra.mxu0 0.0
    %538 = vmatprep.subr.mxu0 0.0
    %539 = vmatpush1.msra.mxu0 0.0
    %540 = vmatprep.subr.mxu0 0.0
    %541 = vmatpush1.msra.mxu0 0.0
    %542 = vmatprep.subr.mxu0 0.0
    %543 = vmatpush1.msra.mxu0 0.0
    %544 = vmatprep.subr.mxu0 0.0
    %545 = vmatpush1.msra.mxu0 0.0
    %546 = vmatprep.subr.mxu0 0.0
    %547 = vmatpush1.msra.mxu0 0.0
    %548 = vmatprep.subr.mxu0 0.0
    %549 = vmatpush1.msra.mxu0 %v412
    %550 = vmatprep.subr.mxu0 0.0
    %551 = vmatpush2.msra.mxu0 0.0
    %552 = vmatprep.subr.mxu0 0.0
    %553 = vmatpush2.msra.mxu0 0.0
    %554 = vmatprep.subr.mxu0 0.0
    %555 = vmatpush2.msra.mxu0 0.0
    %556 = vmatprep.subr.mxu0 0.0
    %557 = vmatpush2.msra.mxu0 0.0
    %558 = vmatprep.subr.mxu0 0.0
    %559 = vmatpush2.msra.mxu0 0.0
    %560 = vmatprep.subr.mxu0 0.0
    %561 = vmatpush2.msra.mxu0 0.0
    %562 = vmatprep.subr.mxu0 0.0
    %563 = vmatpush2.msra.mxu0 0.0
    %564 = vmatprep.subr.mxu0 0.0
    %565 = vmatpush2.msra.mxu0 0.0
    %566 = vmatprep.subr.mxu0 0.0
    %567 = vmatpush2.msra.mxu0 0.0
    %568 = vmatprep.subr.mxu0 0.0
    %569 = vmatpush2.msra.mxu0 0.0
    %570 = vmatprep.subr.mxu0 0.0
    %571 = vmatpush2.msra.mxu0 0.0
    %572 = vmatprep.subr.mxu0 0.0
    %573 = vmatpush2.msra.mxu0 0.0
    %574 = vmatprep.subr.mxu0 0.0
    %575 = vmatpush2.msra.mxu0 0.0
    %576 = vmatprep.subr.mxu0 0.0
    %577 = vmatpush2.msra.mxu0 0.0
    %578 = vmatprep.subr.mxu0 0.0
    %579 = vmatpush2.msra.mxu0 0.0
    %580 = vmatprep.subr.mxu0 0.0
    %581 = vmatpush2.msra.mxu0 0.0
    %582 = vmatprep.mubr.f32.mxu0 0.0
    %583 = vmatmul.mubr.f32.gmra.mxu0 %v516
    %v584 = vpop.f32.mrf.mxu0
    %v585 = vadd.f32 0.0, %v584
    %v586 = vpop.f32.mrf.mxu0
    %587 = vdwg.mxu0
    %588 = vrot.lane.b32.xlu0 %v335, 64
    %v589 = vpop.permute.xlu0 %588
    %590 = vrot.lane.b32.xlu0 %v337, 64
    %v591 = vpop.permute.xlu0 %590
    %v592 = vsel %vm420, %v589, 0
    %v594 = vsel %vm420, %v591, 0
    %596 = vmatprep.subr.mxu0 0.0
    %597 = vmatpush1.xpose.msra.mxu0 0.0
    %598 = vmatprep.subr.mxu0 0.0
    %599 = vmatpush1.xpose.msra.mxu0 0.0
    %600 = vmatprep.subr.mxu0 0.0
    %601 = vmatpush1.xpose.msra.mxu0 0.0
    %602 = vmatprep.subr.mxu0 0.0
    %603 = vmatpush1.xpose.msra.mxu0 0.0
    %604 = vmatprep.subr.mxu0 0.0
    %605 = vmatpush1.xpose.msra.mxu0 0.0
    %606 = vmatprep.subr.mxu0 0.0
    %607 = vmatpush1.xpose.msra.mxu0 0.0
    %608 = vmatprep.subr.mxu0 0.0
    %609 = vmatpush1.xpose.msra.mxu0 0.0
    %610 = vmatprep.subr.mxu0 0.0
    %611 = vmatpush1.xpose.msra.mxu0 0.0
    %612 = vmatprep.subr.mxu0 0.0
    %613 = vmatpush1.xpose.msra.mxu0 0.0
    %614 = vmatprep.subr.mxu0 0.0
    %615 = vmatpush1.xpose.msra.mxu0 0.0
    %616 = vmatprep.subr.mxu0 0.0
    %617 = vmatpush1.xpose.msra.mxu0 0.0
    %618 = vmatprep.subr.mxu0 0.0
    %619 = vmatpush1.xpose.msra.mxu0 0.0
    %620 = vmatprep.subr.mxu0 0.0
    %621 = vmatpush1.xpose.msra.mxu0 0.0
    %622 = vmatprep.subr.mxu0 0.0
    %623 = vmatpush1.xpose.msra.mxu0 0.0
    %624 = vmatprep.subr.mxu0 0.0
    %625 = vmatpush1.xpose.msra.mxu0 0.0
    %626 = vmatprep.subr.mxu0 0.0
    %627 = vmatpush1.xpose.msra.mxu0 %v594
    %628 = vmatprep.subr.mxu0 0.0
    %629 = vmatpush2.xpose.msra.mxu0 0.0
    %630 = vmatprep.subr.mxu0 0.0
    %631 = vmatpush2.xpose.msra.mxu0 0.0
    %632 = vmatprep.subr.mxu0 0.0
    %633 = vmatpush2.xpose.msra.mxu0 0.0
    %634 = vmatprep.subr.mxu0 0.0
    %635 = vmatpush2.xpose.msra.mxu0 0.0
    %636 = vmatprep.subr.mxu0 0.0
    %637 = vmatpush2.xpose.msra.mxu0 0.0
    %638 = vmatprep.subr.mxu0 0.0
    %639 = vmatpush2.xpose.msra.mxu0 0.0
    %640 = vmatprep.subr.mxu0 0.0
    %641 = vmatpush2.xpose.msra.mxu0 0.0
    %642 = vmatprep.subr.mxu0 0.0
    %643 = vmatpush2.xpose.msra.mxu0 0.0
    %644 = vmatprep.subr.mxu0 0.0
    %645 = vmatpush2.xpose.msra.mxu0 0.0
    %646 = vmatprep.subr.mxu0 0.0
    %647 = vmatpush2.xpose.msra.mxu0 0.0
    %648 = vmatprep.subr.mxu0 0.0
    %649 = vmatpush2.xpose.msra.mxu0 0.0
    %650 = vmatprep.subr.mxu0 0.0
    %651 = vmatpush2.xpose.msra.mxu0 0.0
    %652 = vmatprep.subr.mxu0 0.0
    %653 = vmatpush2.xpose.msra.mxu0 0.0
    %654 = vmatprep.subr.mxu0 0.0
    %655 = vmatpush2.xpose.msra.mxu0 0.0
    %656 = vmatprep.subr.mxu0 0.0
    %657 = vmatpush2.xpose.msra.mxu0 0.0
    %658 = vmatprep.subr.mxu0 0.0
    %659 = vmatpush2.xpose.msra.mxu0 0.0
    %660 = vmatprep.mubr.f32.mxu0 0.0
    %661 = vmatmul.mubr.f32.gmra.mxu0 %v592
    %v662 = vpop.f32.mrf.mxu0
    %v663 = vadd.f32 0.0, %v662
    %v664 = vpop.f32.mrf.mxu0
    %665 = vdwg.mxu0
    %v666 = vmul.f32 %v663, 0.125
    %v667 = vadd.f32 %v666, %v501
    %v668 = vsel %vm503, %v667, -inf
    %669 = vmax.xlane.f32.xlu0 %v668
    %v670 = vpop.xlane.xlu0 %669
    %v671 = vsub.f32 %v667, %v670
    %v672 = vmul.f32 %v671, 1.442695
    %v673 = vpow.pop %v672
    %v674 = vsel %vm503, %v673, 0.0
    %675 = vadd.xlane.f32.xlu0 %v674
    %v676 = vpop.xlane.xlu0 %675
    %v677 = vrcp.pop %v676
    %v678 = vmul.f32 %v673, %v677
    %680 = vrot.lane.b32.xlu0 %v412, 64
    %v681 = vpop.permute.xlu0 %680
    %v684 = vsel %vm503, %v678, 0
    %686 = vmatprep.subr.mxu0 0.0
    %687 = vmatpush1.msra.mxu0 0.0
    %688 = vmatprep.subr.mxu0 0.0
    %689 = vmatpush1.msra.mxu0 0.0
    %690 = vmatprep.subr.mxu0 0.0
    %691 = vmatpush1.msra.mxu0 0.0
    %692 = vmatprep.subr.mxu0 0.0
    %693 = vmatpush1.msra.mxu0 0.0
    %694 = vmatprep.subr.mxu0 0.0
    %695 = vmatpush1.msra.mxu0 0.0
    %696 = vmatprep.subr.mxu0 0.0
    %697 = vmatpush1.msra.mxu0 0.0
    %698 = vmatprep.subr.mxu0 0.0
    %699 = vmatpush1.msra.mxu0 0.0
    %700 = vmatprep.subr.mxu0 0.0
    %701 = vmatpush1.msra.mxu0 0.0
    %702 = vmatprep.subr.mxu0 0.0
    %703 = vmatpush1.msra.mxu0 0.0
    %704 = vmatprep.subr.mxu0 0.0
    %705 = vmatpush1.msra.mxu0 0.0
    %706 = vmatprep.subr.mxu0 0.0
    %707 = vmatpush1.msra.mxu0 0.0
    %708 = vmatprep.subr.mxu0 0.0
    %709 = vmatpush1.msra.mxu0 0.0
    %710 = vmatprep.subr.mxu0 0.0
    %711 = vmatpush1.msra.mxu0 0.0
    %712 = vmatprep.subr.mxu0 0.0
    %713 = vmatpush1.msra.mxu0 0.0
    %714 = vmatprep.subr.mxu0 0.0
    %715 = vmatpush1.msra.mxu0 0.0
    %716 = vmatprep.subr.mxu0 0.0
    %717 = vmatpush1.msra.mxu0 %v681
    %718 = vmatprep.subr.mxu0 0.0
    %719 = vmatpush2.msra.mxu0 0.0
    %720 = vmatprep.subr.mxu0 0.0
    %721 = vmatpush2.msra.mxu0 0.0
    %722 = vmatprep.subr.mxu0 0.0
    %723 = vmatpush2.msra.mxu0 0.0
    %724 = vmatprep.subr.mxu0 0.0
    %725 = vmatpush2.msra.mxu0 0.0
    %726 = vmatprep.subr.mxu0 0.0
    %727 = vmatpush2.msra.mxu0 0.0
    %728 = vmatprep.subr.mxu0 0.0
    %729 = vmatpush2.msra.mxu0 0.0
    %730 = vmatprep.subr.mxu0 0.0
    %731 = vmatpush2.msra.mxu0 0.0
    %732 = vmatprep.subr.mxu0 0.0
    %733 = vmatpush2.msra.mxu0 0.0
    %734 = vmatprep.subr.mxu0 0.0
    %735 = vmatpush2.msra.mxu0 0.0
    %736 = vmatprep.subr.mxu0 0.0
    %737 = vmatpush2.msra.mxu0 0.0
    %738 = vmatprep.subr.mxu0 0.0
    %739 = vmatpush2.msra.mxu0 0.0
    %740 = vmatprep.subr.mxu0 0.0
    %741 = vmatpush2.msra.mxu0 0.0
    %742 = vmatprep.subr.mxu0 0.0
    %743 = vmatpush2.msra.mxu0 0.0
    %744 = vmatprep.subr.mxu0 0.0
    %745 = vmatpush2.msra.mxu0 0.0
    %746 = vmatprep.subr.mxu0 0.0
    %747 = vmatpush2.msra.mxu0 0.0
    %748 = vmatprep.subr.mxu0 0.0
    %749 = vmatpush2.msra.mxu0 0.0
    %750 = vmatprep.mubr.f32.mxu0 0.0
    %751 = vmatmul.mubr.f32.gmra.mxu0 %v684
    %v752 = vpop.f32.mrf.mxu0
    %v753 = vadd.f32 0.0, %v752
    %v754 = vpop.f32.mrf.mxu0
    %755 = vdwg.mxu0
    %757 = vrot.lane.b32.xlu0 %v753, 64
    %v758 = vpop.permute.xlu0 %757
    %v760 = vsel %vm420, %v585, %v758
    %v762 = vsel %vm420, %v341, 0
    %v765 = vsel %vm420, %v343, 0
    %767 = vmatprep.subr.mxu0 0.0
    %768 = vmatpush1.xpose.msra.mxu0 0.0
    %769 = vmatprep.subr.mxu0 0.0
    %770 = vmatpush1.xpose.msra.mxu0 0.0
    %771 = vmatprep.subr.mxu0 0.0
    %772 = vmatpush1.xpose.msra.mxu0 0.0
    %773 = vmatprep.subr.mxu0 0.0
    %774 = vmatpush1.xpose.msra.mxu0 0.0
    %775 = vmatprep.subr.mxu0 0.0
    %776 = vmatpush1.xpose.msra.mxu0 0.0
    %777 = vmatprep.subr.mxu0 0.0
    %778 = vmatpush1.xpose.msra.mxu0 0.0
    %779 = vmatprep.subr.mxu0 0.0
    %780 = vmatpush1.xpose.msra.mxu0 0.0
    %781 = vmatprep.subr.mxu0 0.0
    %782 = vmatpush1.xpose.msra.mxu0 0.0
    %783 = vmatprep.subr.mxu0 0.0
    %784 = vmatpush1.xpose.msra.mxu0 0.0
    %785 = vmatprep.subr.mxu0 0.0
    %786 = vmatpush1.xpose.msra.mxu0 0.0
    %787 = vmatprep.subr.mxu0 0.0
    %788 = vmatpush1.xpose.msra.mxu0 0.0
    %789 = vmatprep.subr.mxu0 0.0
    %790 = vmatpush1.xpose.msra.mxu0 0.0
    %791 = vmatprep.subr.mxu0 0.0
    %792 = vmatpush1.xpose.msra.mxu0 0.0
    %793 = vmatprep.subr.mxu0 0.0
    %794 = vmatpush1.xpose.msra.mxu0 0.0
    %795 = vmatprep.subr.mxu0 0.0
    %796 = vmatpush1.xpose.msra.mxu0 0.0
    %797 = vmatprep.subr.mxu0 0.0
    %798 = vmatpush1.xpose.msra.mxu0 %v765
    %799 = vmatprep.subr.mxu0 0.0
    %800 = vmatpush2.xpose.msra.mxu0 0.0
    %801 = vmatprep.subr.mxu0 0.0
    %802 = vmatpush2.xpose.msra.mxu0 0.0
    %803 = vmatprep.subr.mxu0 0.0
    %804 = vmatpush2.xpose.msra.mxu0 0.0
    %805 = vmatprep.subr.mxu0 0.0
    %806 = vmatpush2.xpose.msra.mxu0 0.0
    %807 = vmatprep.subr.mxu0 0.0
    %808 = vmatpush2.xpose.msra.mxu0 0.0
    %809 = vmatprep.subr.mxu0 0.0
    %810 = vmatpush2.xpose.msra.mxu0 0.0
    %811 = vmatprep.subr.mxu0 0.0
    %812 = vmatpush2.xpose.msra.mxu0 0.0
    %813 = vmatprep.subr.mxu0 0.0
    %814 = vmatpush2.xpose.msra.mxu0 0.0
    %815 = vmatprep.subr.mxu0 0.0
    %816 = vmatpush2.xpose.msra.mxu0 0.0
    %817 = vmatprep.subr.mxu0 0.0
    %818 = vmatpush2.xpose.msra.mxu0 0.0
    %819 = vmatprep.subr.mxu0 0.0
    %820 = vmatpush2.xpose.msra.mxu0 0.0
    %821 = vmatprep.subr.mxu0 0.0
    %822 = vmatpush2.xpose.msra.mxu0 0.0
    %823 = vmatprep.subr.mxu0 0.0
    %824 = vmatpush2.xpose.msra.mxu0 0.0
    %825 = vmatprep.subr.mxu0 0.0
    %826 = vmatpush2.xpose.msra.mxu0 0.0
    %827 = vmatprep.subr.mxu0 0.0
    %828 = vmatpush2.xpose.msra.mxu0 0.0
    %829 = vmatprep.subr.mxu0 0.0
    %830 = vmatpush2.xpose.msra.mxu0 0.0
    %831 = vmatprep.mubr.f32.mxu0 0.0
    %832 = vmatmul.mubr.f32.gmra.mxu0 %v762
    %v833 = vpop.f32.mrf.mxu0
    %v834 = vadd.f32 0.0, %v833
    %v835 = vpop.f32.mrf.mxu0
    %836 = vdwg.mxu0
    %v837 = vmul.f32 %v834, 0.125
    %v838 = vlaneseq
    %v839 = vshrl.u32 %v838, 7
    %v840 = vsub.s32 1, %v839
    %v841 = vrot.slane %v202, %v840
    %v842 = vadd.f32 %v837, %v841
    %v843 = vsel %vm503, %v842, -inf
    %844 = vmax.xlane.f32.xlu0 %v843
    %v845 = vpop.xlane.xlu0 %844
    %v846 = vsub.f32 %v842, %v845
    %v847 = vmul.f32 %v846, 1.442695
    %v848 = vpow.pop %v847
    %v849 = vsel %vm503, %v848, 0.0
    %850 = vadd.xlane.f32.xlu0 %v849
    %v851 = vpop.xlane.xlu0 %850
    %v852 = vrcp.pop %v851
    %v853 = vmul.f32 %v848, %v852
    %v855 = vsel %vm503, %v853, 0
    %857 = vmatprep.subr.mxu0 0.0
    %858 = vmatpush1.msra.mxu0 0.0
    %859 = vmatprep.subr.mxu0 0.0
    %860 = vmatpush1.msra.mxu0 0.0
    %861 = vmatprep.subr.mxu0 0.0
    %862 = vmatpush1.msra.mxu0 0.0
    %863 = vmatprep.subr.mxu0 0.0
    %864 = vmatpush1.msra.mxu0 0.0
    %865 = vmatprep.subr.mxu0 0.0
    %866 = vmatpush1.msra.mxu0 0.0
    %867 = vmatprep.subr.mxu0 0.0
    %868 = vmatpush1.msra.mxu0 0.0
    %869 = vmatprep.subr.mxu0 0.0
    %870 = vmatpush1.msra.mxu0 0.0
    %871 = vmatprep.subr.mxu0 0.0
    %872 = vmatpush1.msra.mxu0 0.0
    %873 = vmatprep.subr.mxu0 0.0
    %874 = vmatpush1.msra.mxu0 0.0
    %875 = vmatprep.subr.mxu0 0.0
    %876 = vmatpush1.msra.mxu0 0.0
    %877 = vmatprep.subr.mxu0 0.0
    %878 = vmatpush1.msra.mxu0 0.0
    %879 = vmatprep.subr.mxu0 0.0
    %880 = vmatpush1.msra.mxu0 0.0
    %881 = vmatprep.subr.mxu0 0.0
    %882 = vmatpush1.msra.mxu0 0.0
    %883 = vmatprep.subr.mxu0 0.0
    %884 = vmatpush1.msra.mxu0 0.0
    %885 = vmatprep.subr.mxu0 0.0
    %886 = vmatpush1.msra.mxu0 0.0
    %887 = vmatprep.subr.mxu0 0.0
    %888 = vmatpush1.msra.mxu0 %v417
    %889 = vmatprep.subr.mxu0 0.0
    %890 = vmatpush2.msra.mxu0 0.0
    %891 = vmatprep.subr.mxu0 0.0
    %892 = vmatpush2.msra.mxu0 0.0
    %893 = vmatprep.subr.mxu0 0.0
    %894 = vmatpush2.msra.mxu0 0.0
    %895 = vmatprep.subr.mxu0 0.0
    %896 = vmatpush2.msra.mxu0 0.0
    %897 = vmatprep.subr.mxu0 0.0
    %898 = vmatpush2.msra.mxu0 0.0
    %899 = vmatprep.subr.mxu0 0.0
    %900 = vmatpush2.msra.mxu0 0.0
    %901 = vmatprep.subr.mxu0 0.0
    %902 = vmatpush2.msra.mxu0 0.0
    %903 = vmatprep.subr.mxu0 0.0
    %904 = vmatpush2.msra.mxu0 0.0
    %905 = vmatprep.subr.mxu0 0.0
    %906 = vmatpush2.msra.mxu0 0.0
    %907 = vmatprep.subr.mxu0 0.0
    %908 = vmatpush2.msra.mxu0 0.0
    %909 = vmatprep.subr.mxu0 0.0
    %910 = vmatpush2.msra.mxu0 0.0
    %911 = vmatprep.subr.mxu0 0.0
    %912 = vmatpush2.msra.mxu0 0.0
    %913 = vmatprep.subr.mxu0 0.0
    %914 = vmatpush2.msra.mxu0 0.0
    %915 = vmatprep.subr.mxu0 0.0
    %916 = vmatpush2.msra.mxu0 0.0
    %917 = vmatprep.subr.mxu0 0.0
    %918 = vmatpush2.msra.mxu0 0.0
    %919 = vmatprep.subr.mxu0 0.0
    %920 = vmatpush2.msra.mxu0 0.0
    %921 = vmatprep.mubr.f32.mxu0 0.0
    %922 = vmatmul.mubr.f32.gmra.mxu0 %v855
    %v923 = vpop.f32.mrf.mxu0
    %v924 = vadd.f32 0.0, %v923
    %v925 = vpop.f32.mrf.mxu0
    %926 = vdwg.mxu0
    %927 = vrot.lane.b32.xlu0 %v341, 64
    %v928 = vpop.permute.xlu0 %927
    %929 = vrot.lane.b32.xlu0 %v343, 64
    %v930 = vpop.permute.xlu0 %929
    %v931 = vsel %vm420, %v928, 0
    %v933 = vsel %vm420, %v930, 0
    %935 = vmatprep.subr.mxu0 0.0
    %936 = vmatpush1.xpose.msra.mxu0 0.0
    %937 = vmatprep.subr.mxu0 0.0
    %938 = vmatpush1.xpose.msra.mxu0 0.0
    %939 = vmatprep.subr.mxu0 0.0
    %940 = vmatpush1.xpose.msra.mxu0 0.0
    %941 = vmatprep.subr.mxu0 0.0
    %942 = vmatpush1.xpose.msra.mxu0 0.0
    %943 = vmatprep.subr.mxu0 0.0
    %944 = vmatpush1.xpose.msra.mxu0 0.0
    %945 = vmatprep.subr.mxu0 0.0
    %946 = vmatpush1.xpose.msra.mxu0 0.0
    %947 = vmatprep.subr.mxu0 0.0
    %948 = vmatpush1.xpose.msra.mxu0 0.0
    %949 = vmatprep.subr.mxu0 0.0
    %950 = vmatpush1.xpose.msra.mxu0 0.0
    %951 = vmatprep.subr.mxu0 0.0
    %952 = vmatpush1.xpose.msra.mxu0 0.0
    %953 = vmatprep.subr.mxu0 0.0
    %954 = vmatpush1.xpose.msra.mxu0 0.0
    %955 = vmatprep.subr.mxu0 0.0
    %956 = vmatpush1.xpose.msra.mxu0 0.0
    %957 = vmatprep.subr.mxu0 0.0
    %958 = vmatpush1.xpose.msra.mxu0 0.0
    %959 = vmatprep.subr.mxu0 0.0
    %960 = vmatpush1.xpose.msra.mxu0 0.0
    %961 = vmatprep.subr.mxu0 0.0
    %962 = vmatpush1.xpose.msra.mxu0 0.0
    %963 = vmatprep.subr.mxu0 0.0
    %964 = vmatpush1.xpose.msra.mxu0 0.0
    %965 = vmatprep.subr.mxu0 0.0
    %966 = vmatpush1.xpose.msra.mxu0 %v933
    %967 = vmatprep.subr.mxu0 0.0
    %968 = vmatpush2.xpose.msra.mxu0 0.0
    %969 = vmatprep.subr.mxu0 0.0
    %970 = vmatpush2.xpose.msra.mxu0 0.0
    %971 = vmatprep.subr.mxu0 0.0
    %972 = vmatpush2.xpose.msra.mxu0 0.0
    %973 = vmatprep.subr.mxu0 0.0
    %974 = vmatpush2.xpose.msra.mxu0 0.0
    %975 = vmatprep.subr.mxu0 0.0
    %976 = vmatpush2.xpose.msra.mxu0 0.0
    %977 = vmatprep.subr.mxu0 0.0
    %978 = vmatpush2.xpose.msra.mxu0 0.0
    %979 = vmatprep.subr.mxu0 0.0
    %980 = vmatpush2.xpose.msra.mxu0 0.0
    %981 = vmatprep.subr.mxu0 0.0
    %982 = vmatpush2.xpose.msra.mxu0 0.0
    %983 = vmatprep.subr.mxu0 0.0
    %984 = vmatpush2.xpose.msra.mxu0 0.0
    %985 = vmatprep.subr.mxu0 0.0
    %986 = vmatpush2.xpose.msra.mxu0 0.0
    %987 = vmatprep.subr.mxu0 0.0
    %988 = vmatpush2.xpose.msra.mxu0 0.0
    %989 = vmatprep.subr.mxu0 0.0
    %990 = vmatpush2.xpose.msra.mxu0 0.0
    %991 = vmatprep.subr.mxu0 0.0
    %992 = vmatpush2.xpose.msra.mxu0 0.0
    %993 = vmatprep.subr.mxu0 0.0
    %994 = vmatpush2.xpose.msra.mxu0 0.0
    %995 = vmatprep.subr.mxu0 0.0
    %996 = vmatpush2.xpose.msra.mxu0 0.0
    %997 = vmatprep.subr.mxu0 0.0
    %998 = vmatpush2.xpose.msra.mxu0 0.0
    %999 = vmatprep.mubr.f32.mxu0 0.0
    %1000 = vmatmul.mubr.f32.gmra.mxu0 %v931
    %v1001 = vpop.f32.mrf.mxu0
    %v1002 = vadd.f32 0.0, %v1001
    %v1003 = vpop.f32.mrf.mxu0
    %1004 = vdwg.mxu0
    %v1005 = vmul.f32 %v1002, 0.125
    %v1006 = vadd.f32 %v1005, %v841
    %v1007 = vsel %vm503, %v1006, -inf
    %1008 = vmax.xlane.f32.xlu0 %v1007
    %v1009 = vpop.xlane.xlu0 %1008
    %v1010 = vsub.f32 %v1006, %v1009
    %v1011 = vmul.f32 %v1010, 1.442695
    %v1012 = vpow.pop %v1011
    %v1013 = vsel %vm503, %v1012, 0.0
    %1014 = vadd.xlane.f32.xlu0 %v1013
    %v1015 = vpop.xlane.xlu0 %1014
    %v1016 = vrcp.pop %v1015
    %v1017 = vmul.f32 %v1012, %v1016
    %1019 = vrot.lane.b32.xlu0 %v417, 64
    %v1020 = vpop.permute.xlu0 %1019
    %v1023 = vsel %vm503, %v1017, 0
    %1025 = vmatprep.subr.mxu0 0.0
    %1026 = vmatpush1.msra.mxu0 0.0
    %1027 = vmatprep.subr.mxu0 0.0
    %1028 = vmatpush1.msra.mxu0 0.0
    %1029 = vmatprep.subr.mxu0 0.0
    %1030 = vmatpush1.msra.mxu0 0.0
    %1031 = vmatprep.subr.mxu0 0.0
    %1032 = vmatpush1.msra.mxu0 0.0
    %1033 = vmatprep.subr.mxu0 0.0
    %1034 = vmatpush1.msra.mxu0 0.0
    %1035 = vmatprep.subr.mxu0 0.0
    %1036 = vmatpush1.msra.mxu0 0.0
    %1037 = vmatprep.subr.mxu0 0.0
    %1038 = vmatpush1.msra.mxu0 0.0
    %1039 = vmatprep.subr.mxu0 0.0
    %1040 = vmatpush1.msra.mxu0 0.0
    %1041 = vmatprep.subr.mxu0 0.0
    %1042 = vmatpush1.msra.mxu0 0.0
    %1043 = vmatprep.subr.mxu0 0.0
    %1044 = vmatpush1.msra.mxu0 0.0
    %1045 = vmatprep.subr.mxu0 0.0
    %1046 = vmatpush1.msra.mxu0 0.0
    %1047 = vmatprep.subr.mxu0 0.0
    %1048 = vmatpush1.msra.mxu0 0.0
    %1049 = vmatprep.subr.mxu0 0.0
    %1050 = vmatpush1.msra.mxu0 0.0
    %1051 = vmatprep.subr.mxu0 0.0
    %1052 = vmatpush1.msra.mxu0 0.0
    %1053 = vmatprep.subr.mxu0 0.0
    %1054 = vmatpush1.msra.mxu0 0.0
    %1055 = vmatprep.subr.mxu0 0.0
    %1056 = vmatpush1.msra.mxu0 %v1020
    %1057 = vmatprep.subr.mxu0 0.0
    %1058 = vmatpush2.msra.mxu0 0.0
    %1059 = vmatprep.subr.mxu0 0.0
    %1060 = vmatpush2.msra.mxu0 0.0
    %1061 = vmatprep.subr.mxu0 0.0
    %1062 = vmatpush2.msra.mxu0 0.0
    %1063 = vmatprep.subr.mxu0 0.0
    %1064 = vmatpush2.msra.mxu0 0.0
    %1065 = vmatprep.subr.mxu0 0.0
    %1066 = vmatpush2.msra.mxu0 0.0
    %1067 = vmatprep.subr.mxu0 0.0
    %1068 = vmatpush2.msra.mxu0 0.0
    %1069 = vmatprep.subr.mxu0 0.0
    %1070 = vmatpush2.msra.mxu0 0.0
    %1071 = vmatprep.subr.mxu0 0.0
    %1072 = vmatpush2.msra.mxu0 0.0
    %1073 = vmatprep.subr.mxu0 0.0
    %1074 = vmatpush2.msra.mxu0 0.0
    %1075 = vmatprep.subr.mxu0 0.0
    %1076 = vmatpush2.msra.mxu0 0.0
    %1077 = vmatprep.subr.mxu0 0.0
    %1078 = vmatpush2.msra.mxu0 0.0
    %1079 = vmatprep.subr.mxu0 0.0
    %1080 = vmatpush2.msra.mxu0 0.0
    %1081 = vmatprep.subr.mxu0 0.0
    %1082 = vmatpush2.msra.mxu0 0.0
    %1083 = vmatprep.subr.mxu0 0.0
    %1084 = vmatpush2.msra.mxu0 0.0
    %1085 = vmatprep.subr.mxu0 0.0
    %1086 = vmatpush2.msra.mxu0 0.0
    %1087 = vmatprep.subr.mxu0 0.0
    %1088 = vmatpush2.msra.mxu0 0.0
    %1089 = vmatprep.mubr.f32.mxu0 0.0
    %1090 = vmatmul.mubr.f32.gmra.mxu0 %v1023
    %v1091 = vpop.f32.mrf.mxu0
    %v1092 = vadd.f32 0.0, %v1091
    %v1093 = vpop.f32.mrf.mxu0
    %1094 = vdwg.mxu0
    %1096 = vrot.lane.b32.xlu0 %v1092, 64
    %v1097 = vpop.permute.xlu0 %1096
    %v1099 = vsel %vm420, %v924, %v1097
    %v1100 = vld [vmem:[%s6] sm:$0xff]
    %v1101 = vld [vmem:[%s6 + $0x8] sm:$0xff]
    %v1102 = vld [vmem:[%s6 + $0x10] sm:$0xff]
    %v1103 = vld [vmem:[%s6 + $0x18] sm:$0xff]
    %v1104 = vld [vmem:[%s6 + $0x20] sm:$0xff]
    %v1105 = vld [vmem:[%s6 + $0x28] sm:$0xff]
    %v1106 = vld [vmem:[%s6 + $0x30] sm:$0xff]
    %v1107 = vld [vmem:[%s6 + $0x38] sm:$0xff]
    %v1108 = vld [vmem:[%s6 + $0x40] sm:$0xff]
    %v1109 = vld [vmem:[%s6 + $0x48] sm:$0xff]
    %v1110 = vld [vmem:[%s6 + $0x50] sm:$0xff]
    %v1111 = vld [vmem:[%s6 + $0x58] sm:$0xff]
    %v1112 = vld [vmem:[%s6 + $0x60] sm:$0xff]
    %v1113 = vld [vmem:[%s6 + $0x68] sm:$0xff]
    %v1114 = vld [vmem:[%s6 + $0x70] sm:$0xff]
    %v1115 = vld [vmem:[%s6 + $0x78] sm:$0xff]
    %v1116 = vld [vmem:[%s7] sm:$0x1]
    %v1118 = vlaneseq
    %v1119 = vshrl.u32 %v1118, 7
    %v1120 = vsub.s32 0, %v1119
    %v1121 = vrot.slane %v1116, %v1120
    %1123 = vmatprep.subr.mxu0 0.0
    %1124 = vmatpush1.msra.mxu0 %v1115
    %1125 = vmatprep.subr.mxu0 0.0
    %1126 = vmatpush1.msra.mxu0 %v1114
    %1127 = vmatprep.subr.mxu0 0.0
    %1128 = vmatpush1.msra.mxu0 %v1113
    %1129 = vmatprep.subr.mxu0 0.0
    %1130 = vmatpush1.msra.mxu0 %v1112
    %1131 = vmatprep.subr.mxu0 0.0
    %1132 = vmatpush1.msra.mxu0 %v1111
    %1133 = vmatprep.subr.mxu0 0.0
    %1134 = vmatpush1.msra.mxu0 %v1110
    %1135 = vmatprep.subr.mxu0 0.0
    %1136 = vmatpush1.msra.mxu0 %v1109
    %1137 = vmatprep.subr.mxu0 0.0
    %1138 = vmatpush1.msra.mxu0 %v1108
    %1139 = vmatprep.subr.mxu0 0.0
    %1140 = vmatpush1.msra.mxu0 %v1107
    %1141 = vmatprep.subr.mxu0 0.0
    %1142 = vmatpush1.msra.mxu0 %v1106
    %1143 = vmatprep.subr.mxu0 0.0
    %1144 = vmatpush1.msra.mxu0 %v1105
    %1145 = vmatprep.subr.mxu0 0.0
    %1146 = vmatpush1.msra.mxu0 %v1104
    %1147 = vmatprep.subr.mxu0 0.0
    %1148 = vmatpush1.msra.mxu0 %v1103
    %1149 = vmatprep.subr.mxu0 0.0
    %1150 = vmatpush1.msra.mxu0 %v1102
    %1151 = vmatprep.subr.mxu0 0.0
    %1152 = vmatpush1.msra.mxu0 %v1101
    %1153 = vmatprep.subr.mxu0 0.0
    %1154 = vmatpush1.msra.mxu0 %v1100
    %1155 = vmatprep.subr.mxu0 0.0
    %1156 = vmatpush2.msra.mxu0 0.0
    %1157 = vmatprep.subr.mxu0 0.0
    %1158 = vmatpush2.msra.mxu0 0.0
    %1159 = vmatprep.subr.mxu0 0.0
    %1160 = vmatpush2.msra.mxu0 0.0
    %1161 = vmatprep.subr.mxu0 0.0
    %1162 = vmatpush2.msra.mxu0 0.0
    %1163 = vmatprep.subr.mxu0 0.0
    %1164 = vmatpush2.msra.mxu0 0.0
    %1165 = vmatprep.subr.mxu0 0.0
    %1166 = vmatpush2.msra.mxu0 0.0
    %1167 = vmatprep.subr.mxu0 0.0
    %1168 = vmatpush2.msra.mxu0 0.0
    %1169 = vmatprep.subr.mxu0 0.0
    %1170 = vmatpush2.msra.mxu0 0.0
    %1171 = vmatprep.subr.mxu0 0.0
    %1172 = vmatpush2.msra.mxu0 0.0
    %1173 = vmatprep.subr.mxu0 0.0
    %1174 = vmatpush2.msra.mxu0 0.0
    %1175 = vmatprep.subr.mxu0 0.0
    %1176 = vmatpush2.msra.mxu0 0.0
    %1177 = vmatprep.subr.mxu0 0.0
    %1178 = vmatpush2.msra.mxu0 0.0
    %1179 = vmatprep.subr.mxu0 0.0
    %1180 = vmatpush2.msra.mxu0 0.0
    %1181 = vmatprep.subr.mxu0 0.0
    %1182 = vmatpush2.msra.mxu0 0.0
    %1183 = vmatprep.subr.mxu0 0.0
    %1184 = vmatpush2.msra.mxu0 0.0
    %1185 = vmatprep.subr.mxu0 0.0
    %1186 = vmatpush2.msra.mxu0 0.0
    %1187 = vmatprep.mubr.f32.mxu0 0.0
    %1188 = vmatmul.mubr.f32.gmra.mxu0 %v760
    %v1189 = vpop.f32.mrf.mxu0
    %v1190 = vadd.f32 %v1121, %v1189
    %v1191 = vpop.f32.mrf.mxu0
    %1192 = vmatprep.mubr.f32.mxu0 0.0
    %1193 = vmatmul.mubr.f32.gmra.mxu0 %v1099
    %v1194 = vpop.f32.mrf.mxu0
    %v1195 = vadd.f32 %v1121, %v1194
    %v1196 = vpop.f32.mrf.mxu0
    %1197 = vdwg.mxu0
    %v1198 = vadd.f32 %v1190, %v200
    %v1199 = vadd.f32 %v1195, %v201
    %v1200 = vld [vmem:[%s8] sm:$0x1]
    %v1201 = vld [vmem:[%s9] sm:$0x1]
    %1202 = vadd.xlane.f32.xlu0 %v1198
    %v1203 = vpop.xlane.xlu0 %1202
    %1204 = vadd.xlane.f32.xlu0 %v1199
    %v1205 = vpop.xlane.xlu0 %1204
    %v1206 = vmul.f32 %v1203, %v167
    %v1207 = vmul.f32 %v1205, %v167
    %v1208 = vsub.f32 %v1198, %v1206
    %v1209 = vsub.f32 %v1199, %v1207
    %v1210 = vmul.f32 %v1208, %v1208
    %v1211 = vmul.f32 %v1209, %v1209
    %1212 = vadd.xlane.f32.xlu0 %v1210
    %v1213 = vpop.xlane.xlu0 %1212
    %1214 = vadd.xlane.f32.xlu0 %v1211
    %v1215 = vpop.xlane.xlu0 %1214
    %v1216 = vmul.f32 %v1213, %v167
    %v1217 = vmul.f32 %v1215, %v167
    %v1218 = vadd.f32 %v1216, 1e-12
    %v1219 = vadd.f32 %v1217, 1e-12
    %v1220 = vrsqrt.pop %v1218
    %v1221 = vrsqrt.pop %v1219
    %v1222 = vmul.f32 %v1208, %v1220
    %v1223 = vmul.f32 %v1209, %v1221
    %v1225 = vlaneseq
    %v1226 = vshrl.u32 %v1225, 7
    %v1227 = vsub.s32 0, %v1226
    %v1228 = vrot.slane %v1200, %v1227
    %v1230 = vmul.f32 %v1222, %v1228
    %v1231 = vmul.f32 %v1223, %v1228
    %v1233 = vlaneseq
    %v1234 = vshrl.u32 %v1233, 7
    %v1235 = vsub.s32 0, %v1234
    %v1236 = vrot.slane %v1201, %v1235
    %v1238 = vadd.f32 %v1230, %v1236
    %v1239 = vadd.f32 %v1231, %v1236
    %v1240 = vld [vmem:[#allocation5] sm:$0xff]
    %v1241 = vld [vmem:[#allocation5 + $0x8] sm:$0xff]
    %v1242 = vld [vmem:[#allocation5 + $0x10] sm:$0xff]
    %v1243 = vld [vmem:[#allocation5 + $0x18] sm:$0xff]
    %v1244 = vld [vmem:[#allocation5 + $0x20] sm:$0xff]
    %v1245 = vld [vmem:[#allocation5 + $0x28] sm:$0xff]
    %v1246 = vld [vmem:[#allocation5 + $0x30] sm:$0xff]
    %v1247 = vld [vmem:[#allocation5 + $0x38] sm:$0xff]
    %v1248 = vld [vmem:[#allocation5 + $0x40] sm:$0xff]
    %v1249 = vld [vmem:[#allocation5 + $0x48] sm:$0xff]
    %v1250 = vld [vmem:[#allocation5 + $0x50] sm:$0xff]
    %v1251 = vld [vmem:[#allocation5 + $0x58] sm:$0xff]
    %v1252 = vld [vmem:[#allocation5 + $0x60] sm:$0xff]
    %v1253 = vld [vmem:[#allocation5 + $0x68] sm:$0xff]
    %v1254 = vld [vmem:[#allocation5 + $0x70] sm:$0xff]
    %v1255 = vld [vmem:[#allocation5 + $0x78] sm:$0xff]
    %v1256 = vld [vmem:[#allocation5 + $0x80] sm:$0xff]
    %v1257 = vld [vmem:[#allocation5 + $0x88] sm:$0xff]
    %v1258 = vld [vmem:[#allocation5 + $0x90] sm:$0xff]
    %v1259 = vld [vmem:[#allocation5 + $0x98] sm:$0xff]
    %v1260 = vld [vmem:[#allocation5 + $0xa0] sm:$0xff]
    %v1261 = vld [vmem:[#allocation5 + $0xa8] sm:$0xff]
    %v1262 = vld [vmem:[#allocation5 + $0xb0] sm:$0xff]
    %v1263 = vld [vmem:[#allocation5 + $0xb8] sm:$0xff]
    %v1264 = vld [vmem:[#allocation5 + $0xc0] sm:$0xff]
    %v1265 = vld [vmem:[#allocation5 + $0xc8] sm:$0xff]
    %v1266 = vld [vmem:[#allocation5 + $0xd0] sm:$0xff]
    %v1267 = vld [vmem:[#allocation5 + $0xd8] sm:$0xff]
    %v1268 = vld [vmem:[#allocation5 + $0xe0] sm:$0xff]
    %v1269 = vld [vmem:[#allocation5 + $0xe8] sm:$0xff]
    %v1270 = vld [vmem:[#allocation5 + $0xf0] sm:$0xff]
    %v1271 = vld [vmem:[#allocation5 + $0xf8] sm:$0xff]
    %v1272 = vld [vmem:[%s11] sm:$0x3]
    %v1274 = vlaneseq
    %v1275 = vshrl.u32 %v1274, 7
    %v1276 = vsub.s32 0, %v1275
    %v1277 = vrot.slane %v1272, %v1276
    %v1278 = vlaneseq
    %v1279 = vshrl.u32 %v1278, 7
    %v1280 = vsub.s32 1, %v1279
    %v1281 = vrot.slane %v1272, %v1280
    %1284 = vmatprep.subr.mxu0 %v1271
    %1285 = vmatpush1.msra.mxu0 %v1270
    %1286 = vmatprep.subr.mxu0 %v1269
    %1287 = vmatpush1.msra.mxu0 %v1268
    %1288 = vmatprep.subr.mxu0 %v1267
    %1289 = vmatpush1.msra.mxu0 %v1266
    %1290 = vmatprep.subr.mxu0 %v1265
    %1291 = vmatpush1.msra.mxu0 %v1264
    %1292 = vmatprep.subr.mxu0 %v1263
    %1293 = vmatpush1.msra.mxu0 %v1262
    %1294 = vmatprep.subr.mxu0 %v1261
    %1295 = vmatpush1.msra.mxu0 %v1260
    %1296 = vmatprep.subr.mxu0 %v1259
    %1297 = vmatpush1.msra.mxu0 %v1258
    %1298 = vmatprep.subr.mxu0 %v1257
    %1299 = vmatpush1.msra.mxu0 %v1256
    %1300 = vmatprep.subr.mxu0 %v1255
    %1301 = vmatpush1.msra.mxu0 %v1254
    %1302 = vmatprep.subr.mxu0 %v1253
    %1303 = vmatpush1.msra.mxu0 %v1252
    %1304 = vmatprep.subr.mxu0 %v1251
    %1305 = vmatpush1.msra.mxu0 %v1250
    %1306 = vmatprep.subr.mxu0 %v1249
    %1307 = vmatpush1.msra.mxu0 %v1248
    %1308 = vmatprep.subr.mxu0 %v1247
    %1309 = vmatpush1.msra.mxu0 %v1246
    %1310 = vmatprep.subr.mxu0 %v1245
    %1311 = vmatpush1.msra.mxu0 %v1244
    %1312 = vmatprep.subr.mxu0 %v1243
    %1313 = vmatpush1.msra.mxu0 %v1242
    %1314 = vmatprep.subr.mxu0 %v1241
    %1315 = vmatpush1.msra.mxu0 %v1240
    %1316 = vmatprep.subr.mxu0 0.0
    %1317 = vmatpush2.msra.mxu0 0.0
    %1318 = vmatprep.subr.mxu0 0.0
    %1319 = vmatpush2.msra.mxu0 0.0
    %1320 = vmatprep.subr.mxu0 0.0
    %1321 = vmatpush2.msra.mxu0 0.0
    %1322 = vmatprep.subr.mxu0 0.0
    %1323 = vmatpush2.msra.mxu0 0.0
    %1324 = vmatprep.subr.mxu0 0.0
    %1325 = vmatpush2.msra.mxu0 0.0
    %1326 = vmatprep.subr.mxu0 0.0
    %1327 = vmatpush2.msra.mxu0 0.0
    %1328 = vmatprep.subr.mxu0 0.0
    %1329 = vmatpush2.msra.mxu0 0.0
    %1330 = vmatprep.subr.mxu0 0.0
    %1331 = vmatpush2.msra.mxu0 0.0
    %1332 = vmatprep.subr.mxu0 0.0
    %1333 = vmatpush2.msra.mxu0 0.0
    %1334 = vmatprep.subr.mxu0 0.0
    %1335 = vmatpush2.msra.mxu0 0.0
    %1336 = vmatprep.subr.mxu0 0.0
    %1337 = vmatpush2.msra.mxu0 0.0
    %1338 = vmatprep.subr.mxu0 0.0
    %1339 = vmatpush2.msra.mxu0 0.0
    %1340 = vmatprep.subr.mxu0 0.0
    %1341 = vmatpush2.msra.mxu0 0.0
    %1342 = vmatprep.subr.mxu0 0.0
    %1343 = vmatpush2.msra.mxu0 0.0
    %1344 = vmatprep.subr.mxu0 0.0
    %1345 = vmatpush2.msra.mxu0 0.0
    %1346 = vmatprep.subr.mxu0 0.0
    %1347 = vmatpush2.msra.mxu0 0.0
    %1348 = vmatprep.mubr.f32.mxu0 0.0
    %1349 = vmatmul.mubr.f32.gmra.mxu0 %v1238
    %v1350 = vpop.f32.mrf.mxu0
    %v1351 = vadd.f32 %v1277, %v1350
    %v1352 = vpop.f32.mrf.mxu0
    %v1353 = vadd.f32 %v1281, %v1352
    %1354 = vmatprep.mubr.f32.mxu0 0.0
    %1355 = vmatmul.mubr.f32.gmra.mxu0 %v1239
    %v1356 = vpop.f32.mrf.mxu0
    %v1357 = vadd.f32 %v1277, %v1356
    %v1358 = vpop.f32.mrf.mxu0
    %v1359 = vadd.f32 %v1281, %v1358
    %1360 = vdwg.mxu0
    %v1361 = vmul.f32 %v1351, 0.5
    %v1362 = vmul.f32 %v1353, 0.5
    %v1363 = vmul.f32 %v1357, 0.5
    %v1364 = vmul.f32 %v1359, 0.5
    %v1365 = vmul.f32 %v1351, 0.044715
    %v1366 = vmul.f32 %v1353, 0.044715
    %v1367 = vmul.f32 %v1357, 0.044715
    %v1368 = vmul.f32 %v1359, 0.044715
    %v1369 = vmul.f32 %v1365, %v1351
    %v1370 = vmul.f32 %v1366, %v1353
    %v1371 = vmul.f32 %v1367, %v1357
    %v1372 = vmul.f32 %v1368, %v1359
    %v1373 = vmul.f32 %v1369, %v1351
    %v1374 = vmul.f32 %v1370, %v1353
    %v1375 = vmul.f32 %v1371, %v1357
    %v1376 = vmul.f32 %v1372, %v1359
    %v1377 = vadd.f32 %v1351, %v1373
    %v1378 = vadd.f32 %v1353, %v1374
    %v1379 = vadd.f32 %v1357, %v1375
    %v1380 = vadd.f32 %v1359, %v1376
    %v1381 = vmul.f32 %v1377, 0.7978846
    %v1382 = vmul.f32 %v1378, 0.7978846
    %v1383 = vmul.f32 %v1379, 0.7978846
    %v1384 = vmul.f32 %v1380, 0.7978846
    %v1385 = vtanh.pop %v1381
    %v1386 = vtanh.pop %v1382
    %v1387 = vtanh.pop %v1383
    %v1388 = vtanh.pop %v1384
    %v1389 = vadd.f32 %v1385, 1.0
    %v1390 = vadd.f32 %v1386, 1.0
    %v1391 = vadd.f32 %v1387, 1.0
    %v1392 = vadd.f32 %v1388, 1.0
    %v1393 = vmul.f32 %v1361, %v1389
    %v1394 = vmul.f32 %v1362, %v1390
    %v1395 = vmul.f32 %v1363, %v1391
    %v1396 = vmul.f32 %v1364, %v1392
    %v1397 = vld [vmem:[#allocation7] sm:$0xff]
    %v1398 = vld [vmem:[#allocation7 + $0x8] sm:$0xff]
    %v1399 = vld [vmem:[#allocation7 + $0x10] sm:$0xff]
    %v1400 = vld [vmem:[#allocation7 + $0x18] sm:$0xff]
    %v1401 = vld [vmem:[#allocation7 + $0x20] sm:$0xff]
    %v1402 = vld [vmem:[#allocation7 + $0x28] sm:$0xff]
    %v1403 = vld [vmem:[#allocation7 + $0x30] sm:$0xff]
    %v1404 = vld [vmem:[#allocation7 + $0x38] sm:$0xff]
    %v1405 = vld [vmem:[#allocation7 + $0x40] sm:$0xff]
    %v1406 = vld [vmem:[#allocation7 + $0x48] sm:$0xff]
    %v1407 = vld [vmem:[#allocation7 + $0x50] sm:$0xff]
    %v1408 = vld [vmem:[#allocation7 + $0x58] sm:$0xff]
    %v1409 = vld [vmem:[#allocation7 + $0x60] sm:$0xff]
    %v1410 = vld [vmem:[#allocation7 + $0x68] sm:$0xff]
    %v1411 = vld [vmem:[#allocation7 + $0x70] sm:$0xff]
    %v1412 = vld [vmem:[#allocation7 + $0x78] sm:$0xff]
    %v1413 = vld [vmem:[#allocation7 + $0x80] sm:$0xff]
    %v1414 = vld [vmem:[#allocation7 + $0x88] sm:$0xff]
    %v1415 = vld [vmem:[#allocation7 + $0x90] sm:$0xff]
    %v1416 = vld [vmem:[#allocation7 + $0x98] sm:$0xff]
    %v1417 = vld [vmem:[#allocation7 + $0xa0] sm:$0xff]
    %v1418 = vld [vmem:[#allocation7 + $0xa8] sm:$0xff]
    %v1419 = vld [vmem:[#allocation7 + $0xb0] sm:$0xff]
    %v1420 = vld [vmem:[#allocation7 + $0xb8] sm:$0xff]
    %v1421 = vld [vmem:[#allocation7 + $0xc0] sm:$0xff]
    %v1422 = vld [vmem:[#allocation7 + $0xc8] sm:$0xff]
    %v1423 = vld [vmem:[#allocation7 + $0xd0] sm:$0xff]
    %v1424 = vld [vmem:[#allocation7 + $0xd8] sm:$0xff]
    %v1425 = vld [vmem:[#allocation7 + $0xe0] sm:$0xff]
    %v1426 = vld [vmem:[#allocation7 + $0xe8] sm:$0xff]
    %v1427 = vld [vmem:[#allocation7 + $0xf0] sm:$0xff]
    %v1428 = vld [vmem:[#allocation7 + $0xf8] sm:$0xff]
    %v1429 = vld [vmem:[%s13] sm:$0x1]
    %v1431 = vlaneseq
    %v1432 = vshrl.u32 %v1431, 7
    %v1433 = vsub.s32 0, %v1432
    %v1434 = vrot.slane %v1429, %v1433
    %1436 = vmatprep.subr.mxu0 0.0
    %1437 = vmatpush1.msra.mxu0 %v1412
    %1438 = vmatprep.subr.mxu0 0.0
    %1439 = vmatpush1.msra.mxu0 %v1411
    %1440 = vmatprep.subr.mxu0 0.0
    %1441 = vmatpush1.msra.mxu0 %v1410
    %1442 = vmatprep.subr.mxu0 0.0
    %1443 = vmatpush1.msra.mxu0 %v1409
    %1444 = vmatprep.subr.mxu0 0.0
    %1445 = vmatpush1.msra.mxu0 %v1408
    %1446 = vmatprep.subr.mxu0 0.0
    %1447 = vmatpush1.msra.mxu0 %v1407
    %1448 = vmatprep.subr.mxu0 0.0
    %1449 = vmatpush1.msra.mxu0 %v1406
    %1450 = vmatprep.subr.mxu0 0.0
    %1451 = vmatpush1.msra.mxu0 %v1405
    %1452 = vmatprep.subr.mxu0 0.0
    %1453 = vmatpush1.msra.mxu0 %v1404
    %1454 = vmatprep.subr.mxu0 0.0
    %1455 = vmatpush1.msra.mxu0 %v1403
    %1456 = vmatprep.subr.mxu0 0.0
    %1457 = vmatpush1.msra.mxu0 %v1402
    %1458 = vmatprep.subr.mxu0 0.0
    %1459 = vmatpush1.msra.mxu0 %v1401
    %1460 = vmatprep.subr.mxu0 0.0
    %1461 = vmatpush1.msra.mxu0 %v1400
    %1462 = vmatprep.subr.mxu0 0.0
    %1463 = vmatpush1.msra.mxu0 %v1399
    %1464 = vmatprep.subr.mxu0 0.0
    %1465 = vmatpush1.msra.mxu0 %v1398
    %1466 = vmatprep.subr.mxu0 0.0
    %1467 = vmatpush1.msra.mxu0 %v1397
    %1468 = vmatprep.subr.mxu0 0.0
    %1469 = vmatpush2.msra.mxu0 %v1428
    %1470 = vmatprep.subr.mxu0 0.0
    %1471 = vmatpush2.msra.mxu0 %v1427
    %1472 = vmatprep.subr.mxu0 0.0
    %1473 = vmatpush2.msra.mxu0 %v1426
    %1474 = vmatprep.subr.mxu0 0.0
    %1475 = vmatpush2.msra.mxu0 %v1425
    %1476 = vmatprep.subr.mxu0 0.0
    %1477 = vmatpush2.msra.mxu0 %v1424
    %1478 = vmatprep.subr.mxu0 0.0
    %1479 = vmatpush2.msra.mxu0 %v1423
    %1480 = vmatprep.subr.mxu0 0.0
    %1481 = vmatpush2.msra.mxu0 %v1422
    %1482 = vmatprep.subr.mxu0 0.0
    %1483 = vmatpush2.msra.mxu0 %v1421
    %1484 = vmatprep.subr.mxu0 0.0
    %1485 = vmatpush2.msra.mxu0 %v1420
    %1486 = vmatprep.subr.mxu0 0.0
    %1487 = vmatpush2.msra.mxu0 %v1419
    %1488 = vmatprep.subr.mxu0 0.0
    %1489 = vmatpush2.msra.mxu0 %v1418
    %1490 = vmatprep.subr.mxu0 0.0
    %1491 = vmatpush2.msra.mxu0 %v1417
    %1492 = vmatprep.subr.mxu0 0.0
    %1493 = vmatpush2.msra.mxu0 %v1416
    %1494 = vmatprep.subr.mxu0 0.0
    %1495 = vmatpush2.msra.mxu0 %v1415
    %1496 = vmatprep.subr.mxu0 0.0
    %1497 = vmatpush2.msra.mxu0 %v1414
    %1498 = vmatprep.subr.mxu0 0.0
    %1499 = vmatpush2.msra.mxu0 %v1413
    %1500 = vmatprep.mubr.f32.mxu0 %v1394
    %1501 = vmatmul.mubr.f32.gmra.mxu0 %v1393
    %v1502 = vpop.f32.mrf.mxu0
    %v1503 = vadd.f32 %v1434, %v1502
    %v1504 = vpop.f32.mrf.mxu0
    %1505 = vmatprep.mubr.f32.mxu0 %v1396
    %1506 = vmatmul.mubr.f32.gmra.mxu0 %v1395
    %v1507 = vpop.f32.mrf.mxu0
    %v1508 = vadd.f32 %v1434, %v1507
    %v1509 = vpop.f32.mrf.mxu0
    %1510 = vdwg.mxu0
    %v1511 = vadd.f32 %v1503, %v1238
    %v1512 = vadd.f32 %v1508, %v1239
    %v1513 = vld [vmem:[#allocation8] sm:$0x1]
    %v1514 = vld [vmem:[#allocation10] sm:$0x1]
    %1515 = vadd.xlane.f32.xlu0 %v1511
    %v1516 = vpop.xlane.xlu0 %1515
    %1517 = vadd.xlane.f32.xlu0 %v1512
    %v1518 = vpop.xlane.xlu0 %1517
    %v1519 = vmul.f32 %v1516, %v167
    %v1520 = vmul.f32 %v1518, %v167
    %v1521 = vsub.f32 %v1511, %v1519
    %v1522 = vsub.f32 %v1512, %v1520
    %v1523 = vmul.f32 %v1521, %v1521
    %v1524 = vmul.f32 %v1522, %v1522
    %1525 = vadd.xlane.f32.xlu0 %v1523
    %v1526 = vpop.xlane.xlu0 %1525
    %1527 = vadd.xlane.f32.xlu0 %v1524
    %v1528 = vpop.xlane.xlu0 %1527
    %v1529 = vmul.f32 %v1526, %v167
    %v1530 = vmul.f32 %v1528, %v167
    %v1531 = vadd.f32 %v1529, 1e-12
    %v1532 = vadd.f32 %v1530, 1e-12
    %v1533 = vrsqrt.pop %v1531
    %v1534 = vrsqrt.pop %v1532
    %v1535 = vmul.f32 %v1521, %v1533
    %v1536 = vmul.f32 %v1522, %v1534
    %v1538 = vlaneseq
    %v1539 = vshrl.u32 %v1538, 7
    %v1540 = vsub.s32 0, %v1539
    %v1541 = vrot.slane %v1513, %v1540
    %v1543 = vmul.f32 %v1535, %v1541
    %v1544 = vmul.f32 %v1536, %v1541
    %v1546 = vlaneseq
    %v1547 = vshrl.u32 %v1546, 7
    %v1548 = vsub.s32 0, %v1547
    %v1549 = vrot.slane %v1514, %v1548
    %v1551 = vadd.f32 %v1543, %v1549
    %v1552 = vadd.f32 %v1544, %v1549
    %s1553 = scalar_lea.vmem [#allocation2], 384
    %v1554 = vld [vmem:[%s1553] sm:$0xff]
    %v1555 = vld [vmem:[%s1553 + $0x8] sm:$0xff]
    %v1556 = vld [vmem:[%s1553 + $0x10] sm:$0xff]
    %v1557 = vld [vmem:[%s1553 + $0x18] sm:$0xff]
    %v1558 = vld [vmem:[%s1553 + $0x20] sm:$0xff]
    %v1559 = vld [vmem:[%s1553 + $0x28] sm:$0xff]
    %v1560 = vld [vmem:[%s1553 + $0x30] sm:$0xff]
    %v1561 = vld [vmem:[%s1553 + $0x38] sm:$0xff]
    %v1562 = vld [vmem:[%s1553 + $0x40] sm:$0xff]
    %v1563 = vld [vmem:[%s1553 + $0x48] sm:$0xff]
    %v1564 = vld [vmem:[%s1553 + $0x50] sm:$0xff]
    %v1565 = vld [vmem:[%s1553 + $0x58] sm:$0xff]
    %v1566 = vld [vmem:[%s1553 + $0x60] sm:$0xff]
    %v1567 = vld [vmem:[%s1553 + $0x68] sm:$0xff]
    %v1568 = vld [vmem:[%s1553 + $0x70] sm:$0xff]
    %v1569 = vld [vmem:[%s1553 + $0x78] sm:$0xff]
    %v1570 = vld [vmem:[%s1553 + $0x80] sm:$0xff]
    %v1571 = vld [vmem:[%s1553 + $0x88] sm:$0xff]
    %v1572 = vld [vmem:[%s1553 + $0x90] sm:$0xff]
    %v1573 = vld [vmem:[%s1553 + $0x98] sm:$0xff]
    %v1574 = vld [vmem:[%s1553 + $0xa0] sm:$0xff]
    %v1575 = vld [vmem:[%s1553 + $0xa8] sm:$0xff]
    %v1576 = vld [vmem:[%s1553 + $0xb0] sm:$0xff]
    %v1577 = vld [vmem:[%s1553 + $0xb8] sm:$0xff]
    %v1578 = vld [vmem:[%s1553 + $0xc0] sm:$0xff]
    %v1579 = vld [vmem:[%s1553 + $0xc8] sm:$0xff]
    %v1580 = vld [vmem:[%s1553 + $0xd0] sm:$0xff]
    %v1581 = vld [vmem:[%s1553 + $0xd8] sm:$0xff]
    %v1582 = vld [vmem:[%s1553 + $0xe0] sm:$0xff]
    %v1583 = vld [vmem:[%s1553 + $0xe8] sm:$0xff]
    %v1584 = vld [vmem:[%s1553 + $0xf0] sm:$0xff]
    %v1585 = vld [vmem:[%s1553 + $0xf8] sm:$0xff]
    %v1586 = vld [vmem:[%s1553 + $0x100] sm:$0xff]
    %v1587 = vld [vmem:[%s1553 + $0x108] sm:$0xff]
    %v1588 = vld [vmem:[%s1553 + $0x110] sm:$0xff]
    %v1589 = vld [vmem:[%s1553 + $0x118] sm:$0xff]
    %v1590 = vld [vmem:[%s1553 + $0x120] sm:$0xff]
    %v1591 = vld [vmem:[%s1553 + $0x128] sm:$0xff]
    %v1592 = vld [vmem:[%s1553 + $0x130] sm:$0xff]
    %v1593 = vld [vmem:[%s1553 + $0x138] sm:$0xff]
    %v1594 = vld [vmem:[%s1553 + $0x140] sm:$0xff]
    %v1595 = vld [vmem:[%s1553 + $0x148] sm:$0xff]
    %v1596 = vld [vmem:[%s1553 + $0x150] sm:$0xff]
    %v1597 = vld [vmem:[%s1553 + $0x158] sm:$0xff]
    %v1598 = vld [vmem:[%s1553 + $0x160] sm:$0xff]
    %v1599 = vld [vmem:[%s1553 + $0x168] sm:$0xff]
    %v1600 = vld [vmem:[%s1553 + $0x170] sm:$0xff]
    %v1601 = vld [vmem:[%s1553 + $0x178] sm:$0xff]
    %s1602 = scalar_lea.vmem %s5, 3
    %v1603 = vld [vmem:[%s1602] sm:$0x7]
    %v1605 = vlaneseq
    %v1606 = vshrl.u32 %v1605, 7
    %v1607 = vsub.s32 0, %v1606
    %v1608 = vrot.slane %v1603, %v1607
    %v1609 = vlaneseq
    %v1610 = vshrl.u32 %v1609, 7
    %v1611 = vsub.s32 1, %v1610
    %v1612 = vrot.slane %v1603, %v1611
    %v1613 = vlaneseq
    %v1614 = vshrl.u32 %v1613, 7
    %v1615 = vsub.s32 2, %v1614
    %v1616 = vrot.slane %v1603, %v1615
    %1620 = vmatprep.subr.mxu0 %v1600
    %1621 = vmatpush1.msra.mxu0 %v1599
    %1622 = vmatprep.subr.mxu0 %v1597
    %1623 = vmatpush1.msra.mxu0 %v1596
    %1624 = vmatprep.subr.mxu0 %v1594
    %1625 = vmatpush1.msra.mxu0 %v1593
    %1626 = vmatprep.subr.mxu0 %v1591
    %1627 = vmatpush1.msra.mxu0 %v1590
    %1628 = vmatprep.subr.mxu0 %v1588
    %1629 = vmatpush1.msra.mxu0 %v1587
    %1630 = vmatprep.subr.mxu0 %v1585
    %1631 = vmatpush1.msra.mxu0 %v1584
    %1632 = vmatprep.subr.mxu0 %v1582
    %1633 = vmatpush1.msra.mxu0 %v1581
    %1634 = vmatprep.subr.mxu0 %v1579
    %1635 = vmatpush1.msra.mxu0 %v1578
    %1636 = vmatprep.subr.mxu0 %v1576
    %1637 = vmatpush1.msra.mxu0 %v1575
    %1638 = vmatprep.subr.mxu0 %v1573
    %1639 = vmatpush1.msra.mxu0 %v1572
    %1640 = vmatprep.subr.mxu0 %v1570
    %1641 = vmatpush1.msra.mxu0 %v1569
    %1642 = vmatprep.subr.mxu0 %v1567
    %1643 = vmatpush1.msra.mxu0 %v1566
    %1644 = vmatprep.subr.mxu0 %v1564
    %1645 = vmatpush1.msra.mxu0 %v1563
    %1646 = vmatprep.subr.mxu0 %v1561
    %1647 = vmatpush1.msra.mxu0 %v1560
    %1648 = vmatprep.subr.mxu0 %v1558
    %1649 = vmatpush1.msra.mxu0 %v1557
    %1650 = vmatprep.subr.mxu0 %v1555
    %1651 = vmatpush1.msra.mxu0 %v1554
    %1652 = vmatprep.subr.mxu0 0.0
    %1653 = vmatpush2.msra.mxu0 0.0
    %1654 = vmatprep.subr.mxu0 0.0
    %1655 = vmatpush2.msra.mxu0 0.0
    %1656 = vmatprep.subr.mxu0 0.0
    %1657 = vmatpush2.msra.mxu0 0.0
    %1658 = vmatprep.subr.mxu0 0.0
    %1659 = vmatpush2.msra.mxu0 0.0
    %1660 = vmatprep.subr.mxu0 0.0
    %1661 = vmatpush2.msra.mxu0 0.0
    %1662 = vmatprep.subr.mxu0 0.0
    %1663 = vmatpush2.msra.mxu0 0.0
    %1664 = vmatprep.subr.mxu0 0.0
    %1665 = vmatpush2.msra.mxu0 0.0
    %1666 = vmatprep.subr.mxu0 0.0
    %1667 = vmatpush2.msra.mxu0 0.0
    %1668 = vmatprep.subr.mxu0 0.0
    %1669 = vmatpush2.msra.mxu0 0.0
    %1670 = vmatprep.subr.mxu0 0.0
    %1671 = vmatpush2.msra.mxu0 0.0
    %1672 = vmatprep.subr.mxu0 0.0
    %1673 = vmatpush2.msra.mxu0 0.0
    %1674 = vmatprep.subr.mxu0 0.0
    %1675 = vmatpush2.msra.mxu0 0.0
    %1676 = vmatprep.subr.mxu0 0.0
    %1677 = vmatpush2.msra.mxu0 0.0
    %1678 = vmatprep.subr.mxu0 0.0
    %1679 = vmatpush2.msra.mxu0 0.0
    %1680 = vmatprep.subr.mxu0 0.0
    %1681 = vmatpush2.msra.mxu0 0.0
    %1682 = vmatprep.subr.mxu0 0.0
    %1683 = vmatpush2.msra.mxu0 0.0
    %1684 = vmatprep.mubr.f32.mxu0 0.0
    %1685 = vmatmul.mubr.f32.gmra.mxu0 %v1551
    %v1686 = vpop.f32.mrf.mxu0
    %v1687 = vadd.f32 %v1608, %v1686
    %v1688 = vpop.f32.mrf.mxu0
    %v1689 = vadd.f32 %v1612, %v1688
    %1690 = vmatprep.mubr.f32.mxu0 0.0
    %1691 = vmatmul.mubr.f32.gmra.mxu0 %v1552
    %v1692 = vpop.f32.mrf.mxu0
    %v1693 = vadd.f32 %v1608, %v1692
    %v1694 = vpop.f32.mrf.mxu0
    %v1695 = vadd.f32 %v1612, %v1694
    %1696 = vdwg.mxu0
    %1697 = vmatprep.subr.mxu0 0.0
    %1698 = vmatpush1.msra.mxu0 %v1601
    %1699 = vmatprep.subr.mxu0 0.0
    %1700 = vmatpush1.msra.mxu0 %v1598
    %1701 = vmatprep.subr.mxu0 0.0
    %1702 = vmatpush1.msra.mxu0 %v1595
    %1703 = vmatprep.subr.mxu0 0.0
    %1704 = vmatpush1.msra.mxu0 %v1592
    %1705 = vmatprep.subr.mxu0 0.0
    %1706 = vmatpush1.msra.mxu0 %v1589
    %1707 = vmatprep.subr.mxu0 0.0
    %1708 = vmatpush1.msra.mxu0 %v1586
    %1709 = vmatprep.subr.mxu0 0.0
    %1710 = vmatpush1.msra.mxu0 %v1583
    %1711 = vmatprep.subr.mxu0 0.0
    %1712 = vmatpush1.msra.mxu0 %v1580
    %1713 = vmatprep.subr.mxu0 0.0
    %1714 = vmatpush1.msra.mxu0 %v1577
    %1715 = vmatprep.subr.mxu0 0.0
    %1716 = vmatpush1.msra.mxu0 %v1574
    %1717 = vmatprep.subr.mxu0 0.0
    %1718 = vmatpush1.msra.mxu0 %v1571
    %1719 = vmatprep.subr.mxu0 0.0
    %1720 = vmatpush1.msra.mxu0 %v1568
    %1721 = vmatprep.subr.mxu0 0.0
    %1722 = vmatpush1.msra.mxu0 %v1565
    %1723 = vmatprep.subr.mxu0 0.0
    %1724 = vmatpush1.msra.mxu0 %v1562
    %1725 = vmatprep.subr.mxu0 0.0
    %1726 = vmatpush1.msra.mxu0 %v1559
    %1727 = vmatprep.subr.mxu0 0.0
    %1728 = vmatpush1.msra.mxu0 %v1556
    %1729 = vmatprep.subr.mxu0 0.0
    %1730 = vmatpush2.msra.mxu0 0.0
    %1731 = vmatprep.subr.mxu0 0.0
    %1732 = vmatpush2.msra.mxu0 0.0
    %1733 = vmatprep.subr.mxu0 0.0
    %1734 = vmatpush2.msra.mxu0 0.0
    %1735 = vmatprep.subr.mxu0 0.0
    %1736 = vmatpush2.msra.mxu0 0.0
    %1737 = vmatprep.subr.mxu0 0.0
    %1738 = vmatpush2.msra.mxu0 0.0
    %1739 = vmatprep.subr.mxu0 0.0
    %1740 = vmatpush2.msra.mxu0 0.0
    %1741 = vmatprep.subr.mxu0 0.0
    %1742 = vmatpush2.msra.mxu0 0.0
    %1743 = vmatprep.subr.mxu0 0.0
    %1744 = vmatpush2.msra.mxu0 0.0
    %1745 = vmatprep.subr.mxu0 0.0
    %1746 = vmatpush2.msra.mxu0 0.0
    %1747 = vmatprep.subr.mxu0 0.0
    %1748 = vmatpush2.msra.mxu0 0.0
    %1749 = vmatprep.subr.mxu0 0.0
    %1750 = vmatpush2.msra.mxu0 0.0
    %1751 = vmatprep.subr.mxu0 0.0
    %1752 = vmatpush2.msra.mxu0 0.0
    %1753 = vmatprep.subr.mxu0 0.0
    %1754 = vmatpush2.msra.mxu0 0.0
    %1755 = vmatprep.subr.mxu0 0.0
    %1756 = vmatpush2.msra.mxu0 0.0
    %1757 = vmatprep.subr.mxu0 0.0
    %1758 = vmatpush2.msra.mxu0 0.0
    %1759 = vmatprep.subr.mxu0 0.0
    %1760 = vmatpush2.msra.mxu0 0.0
    %1761 = vmatprep.mubr.f32.mxu0 0.0
    %1762 = vmatmul.mubr.f32.gmra.mxu0 %v1551
    %v1763 = vpop.f32.mrf.mxu0
    %v1764 = vadd.f32 %v1616, %v1763
    %v1765 = vpop.f32.mrf.mxu0
    %1766 = vmatprep.mubr.f32.mxu0 0.0
    %1767 = vmatmul.mubr.f32.gmra.mxu0 %v1552
    %v1768 = vpop.f32.mrf.mxu0
    %v1769 = vadd.f32 %v1616, %v1768
    %v1770 = vpop.f32.mrf.mxu0
    %1771 = vdwg.mxu0
    %v1773 = vsel %vm420, %v1687, 0
    %v1776 = vsel %vm420, %v1689, 0
    %1778 = vmatprep.subr.mxu0 0.0
    %1779 = vmatpush1.xpose.msra.mxu0 0.0
    %1780 = vmatprep.subr.mxu0 0.0
    %1781 = vmatpush1.xpose.msra.mxu0 0.0
    %1782 = vmatprep.subr.mxu0 0.0
    %1783 = vmatpush1.xpose.msra.mxu0 0.0
    %1784 = vmatprep.subr.mxu0 0.0
    %1785 = vmatpush1.xpose.msra.mxu0 0.0
    %1786 = vmatprep.subr.mxu0 0.0
    %1787 = vmatpush1.xpose.msra.mxu0 0.0
    %1788 = vmatprep.subr.mxu0 0.0
    %1789 = vmatpush1.xpose.msra.mxu0 0.0
    %1790 = vmatprep.subr.mxu0 0.0
    %1791 = vmatpush1.xpose.msra.mxu0 0.0
    %1792 = vmatprep.subr.mxu0 0.0
    %1793 = vmatpush1.xpose.msra.mxu0 0.0
    %1794 = vmatprep.subr.mxu0 0.0
    %1795 = vmatpush1.xpose.msra.mxu0 0.0
    %1796 = vmatprep.subr.mxu0 0.0
    %1797 = vmatpush1.xpose.msra.mxu0 0.0
    %1798 = vmatprep.subr.mxu0 0.0
    %1799 = vmatpush1.xpose.msra.mxu0 0.0
    %1800 = vmatprep.subr.mxu0 0.0
    %1801 = vmatpush1.xpose.msra.mxu0 0.0
    %1802 = vmatprep.subr.mxu0 0.0
    %1803 = vmatpush1.xpose.msra.mxu0 0.0
    %1804 = vmatprep.subr.mxu0 0.0
    %1805 = vmatpush1.xpose.msra.mxu0 0.0
    %1806 = vmatprep.subr.mxu0 0.0
    %1807 = vmatpush1.xpose.msra.mxu0 0.0
    %1808 = vmatprep.subr.mxu0 0.0
    %1809 = vmatpush1.xpose.msra.mxu0 %v1776
    %1810 = vmatprep.subr.mxu0 0.0
    %1811 = vmatpush2.xpose.msra.mxu0 0.0
    %1812 = vmatprep.subr.mxu0 0.0
    %1813 = vmatpush2.xpose.msra.mxu0 0.0
    %1814 = vmatprep.subr.mxu0 0.0
    %1815 = vmatpush2.xpose.msra.mxu0 0.0
    %1816 = vmatprep.subr.mxu0 0.0
    %1817 = vmatpush2.xpose.msra.mxu0 0.0
    %1818 = vmatprep.subr.mxu0 0.0
    %1819 = vmatpush2.xpose.msra.mxu0 0.0
    %1820 = vmatprep.subr.mxu0 0.0
    %1821 = vmatpush2.xpose.msra.mxu0 0.0
    %1822 = vmatprep.subr.mxu0 0.0
    %1823 = vmatpush2.xpose.msra.mxu0 0.0
    %1824 = vmatprep.subr.mxu0 0.0
    %1825 = vmatpush2.xpose.msra.mxu0 0.0
    %1826 = vmatprep.subr.mxu0 0.0
    %1827 = vmatpush2.xpose.msra.mxu0 0.0
    %1828 = vmatprep.subr.mxu0 0.0
    %1829 = vmatpush2.xpose.msra.mxu0 0.0
    %1830 = vmatprep.subr.mxu0 0.0
    %1831 = vmatpush2.xpose.msra.mxu0 0.0
    %1832 = vmatprep.subr.mxu0 0.0
    %1833 = vmatpush2.xpose.msra.mxu0 0.0
    %1834 = vmatprep.subr.mxu0 0.0
    %1835 = vmatpush2.xpose.msra.mxu0 0.0
    %1836 = vmatprep.subr.mxu0 0.0
    %1837 = vmatpush2.xpose.msra.mxu0 0.0
    %1838 = vmatprep.subr.mxu0 0.0
    %1839 = vmatpush2.xpose.msra.mxu0 0.0
    %1840 = vmatprep.subr.mxu0 0.0
    %1841 = vmatpush2.xpose.msra.mxu0 0.0
    %1842 = vmatprep.mubr.f32.mxu0 0.0
    %1843 = vmatmul.mubr.f32.gmra.mxu0 %v1773
    %v1844 = vpop.f32.mrf.mxu0
    %v1845 = vadd.f32 0.0, %v1844
    %v1846 = vpop.f32.mrf.mxu0
    %1847 = vdwg.mxu0
    %v1848 = vmul.f32 %v1845, 0.125
    %v1849 = vadd.f32 %v1848, %v501
    %v1850 = vsel %vm503, %v1849, -inf
    %1851 = vmax.xlane.f32.xlu0 %v1850
    %v1852 = vpop.xlane.xlu0 %1851
    %v1853 = vsub.f32 %v1849, %v1852
    %v1854 = vmul.f32 %v1853, 1.442695
    %v1855 = vpow.pop %v1854
    %v1856 = vsel %vm503, %v1855, 0.0
    %1857 = vadd.xlane.f32.xlu0 %v1856
    %v1858 = vpop.xlane.xlu0 %1857
    %v1859 = vrcp.pop %v1858
    %v1860 = vmul.f32 %v1855, %v1859
    %v1862 = vsel %vm503, %v1860, 0
    %1864 = vmatprep.subr.mxu0 0.0
    %1865 = vmatpush1.msra.mxu0 0.0
    %1866 = vmatprep.subr.mxu0 0.0
    %1867 = vmatpush1.msra.mxu0 0.0
    %1868 = vmatprep.subr.mxu0 0.0
    %1869 = vmatpush1.msra.mxu0 0.0
    %1870 = vmatprep.subr.mxu0 0.0
    %1871 = vmatpush1.msra.mxu0 0.0
    %1872 = vmatprep.subr.mxu0 0.0
    %1873 = vmatpush1.msra.mxu0 0.0
    %1874 = vmatprep.subr.mxu0 0.0
    %1875 = vmatpush1.msra.mxu0 0.0
    %1876 = vmatprep.subr.mxu0 0.0
    %1877 = vmatpush1.msra.mxu0 0.0
    %1878 = vmatprep.subr.mxu0 0.0
    %1879 = vmatpush1.msra.mxu0 0.0
    %1880 = vmatprep.subr.mxu0 0.0
    %1881 = vmatpush1.msra.mxu0 0.0
    %1882 = vmatprep.subr.mxu0 0.0
    %1883 = vmatpush1.msra.mxu0 0.0
    %1884 = vmatprep.subr.mxu0 0.0
    %1885 = vmatpush1.msra.mxu0 0.0
    %1886 = vmatprep.subr.mxu0 0.0
    %1887 = vmatpush1.msra.mxu0 0.0
    %1888 = vmatprep.subr.mxu0 0.0
    %1889 = vmatpush1.msra.mxu0 0.0
    %1890 = vmatprep.subr.mxu0 0.0
    %1891 = vmatpush1.msra.mxu0 0.0
    %1892 = vmatprep.subr.mxu0 0.0
    %1893 = vmatpush1.msra.mxu0 0.0
    %1894 = vmatprep.subr.mxu0 0.0
    %1895 = vmatpush1.msra.mxu0 %v1764
    %1896 = vmatprep.subr.mxu0 0.0
    %1897 = vmatpush2.msra.mxu0 0.0
    %1898 = vmatprep.subr.mxu0 0.0
    %1899 = vmatpush2.msra.mxu0 0.0
    %1900 = vmatprep.subr.mxu0 0.0
    %1901 = vmatpush2.msra.mxu0 0.0
    %1902 = vmatprep.subr.mxu0 0.0
    %1903 = vmatpush2.msra.mxu0 0.0
    %1904 = vmatprep.subr.mxu0 0.0
    %1905 = vmatpush2.msra.mxu0 0.0
    %1906 = vmatprep.subr.mxu0 0.0
    %1907 = vmatpush2.msra.mxu0 0.0
    %1908 = vmatprep.subr.mxu0 0.0
    %1909 = vmatpush2.msra.mxu0 0.0
    %1910 = vmatprep.subr.mxu0 0.0
    %1911 = vmatpush2.msra.mxu0 0.0
    %1912 = vmatprep.subr.mxu0 0.0
    %1913 = vmatpush2.msra.mxu0 0.0
    %1914 = vmatprep.subr.mxu0 0.0
    %1915 = vmatpush2.msra.mxu0 0.0
    %1916 = vmatprep.subr.mxu0 0.0
    %1917 = vmatpush2.msra.mxu0 0.0
    %1918 = vmatprep.subr.mxu0 0.0
    %1919 = vmatpush2.msra.mxu0 0.0
    %1920 = vmatprep.subr.mxu0 0.0
    %1921 = vmatpush2.msra.mxu0 0.0
    %1922 = vmatprep.subr.mxu0 0.0
    %1923 = vmatpush2.msra.mxu0 0.0
    %1924 = vmatprep.subr.mxu0 0.0
    %1925 = vmatpush2.msra.mxu0 0.0
    %1926 = vmatprep.subr.mxu0 0.0
    %1927 = vmatpush2.msra.mxu0 0.0
    %1928 = vmatprep.mubr.f32.mxu0 0.0
    %1929 = vmatmul.mubr.f32.gmra.mxu0 %v1862
    %v1930 = vpop.f32.mrf.mxu0
    %v1931 = vadd.f32 0.0, %v1930
    %v1932 = vpop.f32.mrf.mxu0
    %1933 = vdwg.mxu0
    %1934 = vrot.lane.b32.xlu0 %v1687, 64
    %v1935 = vpop.permute.xlu0 %1934
    %1936 = vrot.lane.b32.xlu0 %v1689, 64
    %v1937 = vpop.permute.xlu0 %1936
    %v1938 = vsel %vm420, %v1935, 0
    %v1940 = vsel %vm420, %v1937, 0
    %1942 = vmatprep.subr.mxu0 0.0
    %1943 = vmatpush1.xpose.msra.mxu0 0.0
    %1944 = vmatprep.subr.mxu0 0.0
    %1945 = vmatpush1.xpose.msra.mxu0 0.0
    %1946 = vmatprep.subr.mxu0 0.0
    %1947 = vmatpush1.xpose.msra.mxu0 0.0
    %1948 = vmatprep.subr.mxu0 0.0
    %1949 = vmatpush1.xpose.msra.mxu0 0.0
    %1950 = vmatprep.subr.mxu0 0.0
    %1951 = vmatpush1.xpose.msra.mxu0 0.0
    %1952 = vmatprep.subr.mxu0 0.0
    %1953 = vmatpush1.xpose.msra.mxu0 0.0
    %1954 = vmatprep.subr.mxu0 0.0
    %1955 = vmatpush1.xpose.msra.mxu0 0.0
    %1956 = vmatprep.subr.mxu0 0.0
    %1957 = vmatpush1.xpose.msra.mxu0 0.0
    %1958 = vmatprep.subr.mxu0 0.0
    %1959 = vmatpush1.xpose.msra.mxu0 0.0
    %1960 = vmatprep.subr.mxu0 0.0
    %1961 = vmatpush1.xpose.msra.mxu0 0.0
    %1962 = vmatprep.subr.mxu0 0.0
    %1963 = vmatpush1.xpose.msra.mxu0 0.0
    %1964 = vmatprep.subr.mxu0 0.0
    %1965 = vmatpush1.xpose.msra.mxu0 0.0
    %1966 = vmatprep.subr.mxu0 0.0
    %1967 = vmatpush1.xpose.msra.mxu0 0.0
    %1968 = vmatprep.subr.mxu0 0.0
    %1969 = vmatpush1.xpose.msra.mxu0 0.0
    %1970 = vmatprep.subr.mxu0 0.0
    %1971 = vmatpush1.xpose.msra.mxu0 0.0
    %1972 = vmatprep.subr.mxu0 0.0
    %1973 = vmatpush1.xpose.msra.mxu0 %v1940
    %1974 = vmatprep.subr.mxu0 0.0
    %1975 = vmatpush2.xpose.msra.mxu0 0.0
    %1976 = vmatprep.subr.mxu0 0.0
    %1977 = vmatpush2.xpose.msra.mxu0 0.0
    %1978 = vmatprep.subr.mxu0 0.0
    %1979 = vmatpush2.xpose.msra.mxu0 0.0
    %1980 = vmatprep.subr.mxu0 0.0
    %1981 = vmatpush2.xpose.msra.mxu0 0.0
    %1982 = vmatprep.subr.mxu0 0.0
    %1983 = vmatpush2.xpose.msra.mxu0 0.0
    %1984 = vmatprep.subr.mxu0 0.0
    %1985 = vmatpush2.xpose.msra.mxu0 0.0
    %1986 = vmatprep.subr.mxu0 0.0
    %1987 = vmatpush2.xpose.msra.mxu0 0.0
    %1988 = vmatprep.subr.mxu0 0.0
    %1989 = vmatpush2.xpose.msra.mxu0 0.0
    %1990 = vmatprep.subr.mxu0 0.0
    %1991 = vmatpush2.xpose.msra.mxu0 0.0
    %1992 = vmatprep.subr.mxu0 0.0
    %1993 = vmatpush2.xpose.msra.mxu0 0.0
    %1994 = vmatprep.subr.mxu0 0.0
    %1995 = vmatpush2.xpose.msra.mxu0 0.0
    %1996 = vmatprep.subr.mxu0 0.0
    %1997 = vmatpush2.xpose.msra.mxu0 0.0
    %1998 = vmatprep.subr.mxu0 0.0
    %1999 = vmatpush2.xpose.msra.mxu0 0.0
    %2000 = vmatprep.subr.mxu0 0.0
    %2001 = vmatpush2.xpose.msra.mxu0 0.0
    %2002 = vmatprep.subr.mxu0 0.0
    %2003 = vmatpush2.xpose.msra.mxu0 0.0
    %2004 = vmatprep.subr.mxu0 0.0
    %2005 = vmatpush2.xpose.msra.mxu0 0.0
    %2006 = vmatprep.mubr.f32.mxu0 0.0
    %2007 = vmatmul.mubr.f32.gmra.mxu0 %v1938
    %v2008 = vpop.f32.mrf.mxu0
    %v2009 = vadd.f32 0.0, %v2008
    %v2010 = vpop.f32.mrf.mxu0
    %2011 = vdwg.mxu0
    %v2012 = vmul.f32 %v2009, 0.125
    %v2013 = vadd.f32 %v2012, %v501
    %v2014 = vsel %vm503, %v2013, -inf
    %2015 = vmax.xlane.f32.xlu0 %v2014
    %v2016 = vpop.xlane.xlu0 %2015
    %v2017 = vsub.f32 %v2013, %v2016
    %v2018 = vmul.f32 %v2017, 1.442695
    %v2019 = vpow.pop %v2018
    %v2020 = vsel %vm503, %v2019, 0.0
    %2021 = vadd.xlane.f32.xlu0 %v2020
    %v2022 = vpop.xlane.xlu0 %2021
    %v2023 = vrcp.pop %v2022
    %v2024 = vmul.f32 %v2019, %v2023
    %2026 = vrot.lane.b32.xlu0 %v1764, 64
    %v2027 = vpop.permute.xlu0 %2026
    %v2030 = vsel %vm503, %v2024, 0
    %2032 = vmatprep.subr.mxu0 0.0
    %2033 = vmatpush1.msra.mxu0 0.0
    %2034 = vmatprep.subr.mxu0 0.0
    %2035 = vmatpush1.msra.mxu0 0.0
    %2036 = vmatprep.subr.mxu0 0.0
    %2037 = vmatpush1.msra.mxu0 0.0
    %2038 = vmatprep.subr.mxu0 0.0
    %2039 = vmatpush1.msra.mxu0 0.0
    %2040 = vmatprep.subr.mxu0 0.0
    %2041 = vmatpush1.msra.mxu0 0.0
    %2042 = vmatprep.subr.mxu0 0.0
    %2043 = vmatpush1.msra.mxu0 0.0
    %2044 = vmatprep.subr.mxu0 0.0
    %2045 = vmatpush1.msra.mxu0 0.0
    %2046 = vmatprep.subr.mxu0 0.0
    %2047 = vmatpush1.msra.mxu0 0.0
    %2048 = vmatprep.subr.mxu0 0.0
    %2049 = vmatpush1.msra.mxu0 0.0
    %2050 = vmatprep.subr.mxu0 0.0
    %2051 = vmatpush1.msra.mxu0 0.0
    %2052 = vmatprep.subr.mxu0 0.0
    %2053 = vmatpush1.msra.mxu0 0.0
    %2054 = vmatprep.subr.mxu0 0.0
    %2055 = vmatpush1.msra.mxu0 0.0
    %2056 = vmatprep.subr.mxu0 0.0
    %2057 = vmatpush1.msra.mxu0 0.0
    %2058 = vmatprep.subr.mxu0 0.0
    %2059 = vmatpush1.msra.mxu0 0.0
    %2060 = vmatprep.subr.mxu0 0.0
    %2061 = vmatpush1.msra.mxu0 0.0
    %2062 = vmatprep.subr.mxu0 0.0
    %2063 = vmatpush1.msra.mxu0 %v2027
    %2064 = vmatprep.subr.mxu0 0.0
    %2065 = vmatpush2.msra.mxu0 0.0
    %2066 = vmatprep.subr.mxu0 0.0
    %2067 = vmatpush2.msra.mxu0 0.0
    %2068 = vmatprep.subr.mxu0 0.0
    %2069 = vmatpush2.msra.mxu0 0.0
    %2070 = vmatprep.subr.mxu0 0.0
    %2071 = vmatpush2.msra.mxu0 0.0
    %2072 = vmatprep.subr.mxu0 0.0
    %2073 = vmatpush2.msra.mxu0 0.0
    %2074 = vmatprep.subr.mxu0 0.0
    %2075 = vmatpush2.msra.mxu0 0.0
    %2076 = vmatprep.subr.mxu0 0.0
    %2077 = vmatpush2.msra.mxu0 0.0
    %2078 = vmatprep.subr.mxu0 0.0
    %2079 = vmatpush2.msra.mxu0 0.0
    %2080 = vmatprep.subr.mxu0 0.0
    %2081 = vmatpush2.msra.mxu0 0.0
    %2082 = vmatprep.subr.mxu0 0.0
    %2083 = vmatpush2.msra.mxu0 0.0
    %2084 = vmatprep.subr.mxu0 0.0
    %2085 = vmatpush2.msra.mxu0 0.0
    %2086 = vmatprep.subr.mxu0 0.0
    %2087 = vmatpush2.msra.mxu0 0.0
    %2088 = vmatprep.subr.mxu0 0.0
    %2089 = vmatpush2.msra.mxu0 0.0
    %2090 = vmatprep.subr.mxu0 0.0
    %2091 = vmatpush2.msra.mxu0 0.0
    %2092 = vmatprep.subr.mxu0 0.0
    %2093 = vmatpush2.msra.mxu0 0.0
    %2094 = vmatprep.subr.mxu0 0.0
    %2095 = vmatpush2.msra.mxu0 0.0
    %2096 = vmatprep.mubr.f32.mxu0 0.0
    %2097 = vmatmul.mubr.f32.gmra.mxu0 %v2030
    %v2098 = vpop.f32.mrf.mxu0
    %v2099 = vadd.f32 0.0, %v2098
    %v2100 = vpop.f32.mrf.mxu0
    %2101 = vdwg.mxu0
    %2103 = vrot.lane.b32.xlu0 %v2099, 64
    %v2104 = vpop.permute.xlu0 %2103
    %v2106 = vsel %vm420, %v1931, %v2104
    %v2108 = vsel %vm420, %v1693, 0
    %v2111 = vsel %vm420, %v1695, 0
    %2113 = vmatprep.subr.mxu0 0.0
    %2114 = vmatpush1.xpose.msra.mxu0 0.0
    %2115 = vmatprep.subr.mxu0 0.0
    %2116 = vmatpush1.xpose.msra.mxu0 0.0
    %2117 = vmatprep.subr.mxu0 0.0
    %2118 = vmatpush1.xpose.msra.mxu0 0.0
    %2119 = vmatprep.subr.mxu0 0.0
    %2120 = vmatpush1.xpose.msra.mxu0 0.0
    %2121 = vmatprep.subr.mxu0 0.0
    %2122 = vmatpush1.xpose.msra.mxu0 0.0
    %2123 = vmatprep.subr.mxu0 0.0
    %2124 = vmatpush1.xpose.msra.mxu0 0.0
    %2125 = vmatprep.subr.mxu0 0.0
    %2126 = vmatpush1.xpose.msra.mxu0 0.0
    %2127 = vmatprep.subr.mxu0 0.0
    %2128 = vmatpush1.xpose.msra.mxu0 0.0
    %2129 = vmatprep.subr.mxu0 0.0
    %2130 = vmatpush1.xpose.msra.mxu0 0.0
    %2131 = vmatprep.subr.mxu0 0.0
    %2132 = vmatpush1.xpose.msra.mxu0 0.0
    %2133 = vmatprep.subr.mxu0 0.0
    %2134 = vmatpush1.xpose.msra.mxu0 0.0
    %2135 = vmatprep.subr.mxu0 0.0
    %2136 = vmatpush1.xpose.msra.mxu0 0.0
    %2137 = vmatprep.subr.mxu0 0.0
    %2138 = vmatpush1.xpose.msra.mxu0 0.0
    %2139 = vmatprep.subr.mxu0 0.0
    %2140 = vmatpush1.xpose.msra.mxu0 0.0
    %2141 = vmatprep.subr.mxu0 0.0
    %2142 = vmatpush1.xpose.msra.mxu0 0.0
    %2143 = vmatprep.subr.mxu0 0.0
    %2144 = vmatpush1.xpose.msra.mxu0 %v2111
    %2145 = vmatprep.subr.mxu0 0.0
    %2146 = vmatpush2.xpose.msra.mxu0 0.0
    %2147 = vmatprep.subr.mxu0 0.0
    %2148 = vmatpush2.xpose.msra.mxu0 0.0
    %2149 = vmatprep.subr.mxu0 0.0
    %2150 = vmatpush2.xpose.msra.mxu0 0.0
    %2151 = vmatprep.subr.mxu0 0.0
    %2152 = vmatpush2.xpose.msra.mxu0 0.0
    %2153 = vmatprep.subr.mxu0 0.0
    %2154 = vmatpush2.xpose.msra.mxu0 0.0
    %2155 = vmatprep.subr.mxu0 0.0
    %2156 = vmatpush2.xpose.msra.mxu0 0.0
    %2157 = vmatprep.subr.mxu0 0.0
    %2158 = vmatpush2.xpose.msra.mxu0 0.0
    %2159 = vmatprep.subr.mxu0 0.0
    %2160 = vmatpush2.xpose.msra.mxu0 0.0
    %2161 = vmatprep.subr.mxu0 0.0
    %2162 = vmatpush2.xpose.msra.mxu0 0.0
    %2163 = vmatprep.subr.mxu0 0.0
    %2164 = vmatpush2.xpose.msra.mxu0 0.0
    %2165 = vmatprep.subr.mxu0 0.0
    %2166 = vmatpush2.xpose.msra.mxu0 0.0
    %2167 = vmatprep.subr.mxu0 0.0
    %2168 = vmatpush2.xpose.msra.mxu0 0.0
    %2169 = vmatprep.subr.mxu0 0.0
    %2170 = vmatpush2.xpose.msra.mxu0 0.0
    %2171 = vmatprep.subr.mxu0 0.0
    %2172 = vmatpush2.xpose.msra.mxu0 0.0
    %2173 = vmatprep.subr.mxu0 0.0
    %2174 = vmatpush2.xpose.msra.mxu0 0.0
    %2175 = vmatprep.subr.mxu0 0.0
    %2176 = vmatpush2.xpose.msra.mxu0 0.0
    %2177 = vmatprep.mubr.f32.mxu0 0.0
    %2178 = vmatmul.mubr.f32.gmra.mxu0 %v2108
    %v2179 = vpop.f32.mrf.mxu0
    %v2180 = vadd.f32 0.0, %v2179
    %v2181 = vpop.f32.mrf.mxu0
    %2182 = vdwg.mxu0
    %v2183 = vmul.f32 %v2180, 0.125
    %v2184 = vadd.f32 %v2183, %v841
    %v2185 = vsel %vm503, %v2184, -inf
    %2186 = vmax.xlane.f32.xlu0 %v2185
    %v2187 = vpop.xlane.xlu0 %2186
    %v2188 = vsub.f32 %v2184, %v2187
    %v2189 = vmul.f32 %v2188, 1.442695
    %v2190 = vpow.pop %v2189
    %v2191 = vsel %vm503, %v2190, 0.0
    %2192 = vadd.xlane.f32.xlu0 %v2191
    %v2193 = vpop.xlane.xlu0 %2192
    %v2194 = vrcp.pop %v2193
    %v2195 = vmul.f32 %v2190, %v2194
    %v2197 = vsel %vm503, %v2195, 0
    %2199 = vmatprep.subr.mxu0 0.0
    %2200 = vmatpush1.msra.mxu0 0.0
    %2201 = vmatprep.subr.mxu0 0.0
    %2202 = vmatpush1.msra.mxu0 0.0
    %2203 = vmatprep.subr.mxu0 0.0
    %2204 = vmatpush1.msra.mxu0 0.0
    %2205 = vmatprep.subr.mxu0 0.0
    %2206 = vmatpush1.msra.mxu0 0.0
    %2207 = vmatprep.subr.mxu0 0.0
    %2208 = vmatpush1.msra.mxu0 0.0
    %2209 = vmatprep.subr.mxu0 0.0
    %2210 = vmatpush1.msra.mxu0 0.0
    %2211 = vmatprep.subr.mxu0 0.0
    %2212 = vmatpush1.msra.mxu0 0.0
    %2213 = vmatprep.subr.mxu0 0.0
    %2214 = vmatpush1.msra.mxu0 0.0
    %2215 = vmatprep.subr.mxu0 0.0
    %2216 = vmatpush1.msra.mxu0 0.0
    %2217 = vmatprep.subr.mxu0 0.0
    %2218 = vmatpush1.msra.mxu0 0.0
    %2219 = vmatprep.subr.mxu0 0.0
    %2220 = vmatpush1.msra.mxu0 0.0
    %2221 = vmatprep.subr.mxu0 0.0
    %2222 = vmatpush1.msra.mxu0 0.0
    %2223 = vmatprep.subr.mxu0 0.0
    %2224 = vmatpush1.msra.mxu0 0.0
    %2225 = vmatprep.subr.mxu0 0.0
    %2226 = vmatpush1.msra.mxu0 0.0
    %2227 = vmatprep.subr.mxu0 0.0
    %2228 = vmatpush1.msra.mxu0 0.0
    %2229 = vmatprep.subr.mxu0 0.0
    %2230 = vmatpush1.msra.mxu0 %v1769
    %2231 = vmatprep.subr.mxu0 0.0
    %2232 = vmatpush2.msra.mxu0 0.0
    %2233 = vmatprep.subr.mxu0 0.0
    %2234 = vmatpush2.msra.mxu0 0.0
    %2235 = vmatprep.subr.mxu0 0.0
    %2236 = vmatpush2.msra.mxu0 0.0
    %2237 = vmatprep.subr.mxu0 0.0
    %2238 = vmatpush2.msra.mxu0 0.0
    %2239 = vmatprep.subr.mxu0 0.0
    %2240 = vmatpush2.msra.mxu0 0.0
    %2241 = vmatprep.subr.mxu0 0.0
    %2242 = vmatpush2.msra.mxu0 0.0
    %2243 = vmatprep.subr.mxu0 0.0
    %2244 = vmatpush2.msra.mxu0 0.0
    %2245 = vmatprep.subr.mxu0 0.0
    %2246 = vmatpush2.msra.mxu0 0.0
    %2247 = vmatprep.subr.mxu0 0.0
    %2248 = vmatpush2.msra.mxu0 0.0
    %2249 = vmatprep.subr.mxu0 0.0
    %2250 = vmatpush2.msra.mxu0 0.0
    %2251 = vmatprep.subr.mxu0 0.0
    %2252 = vmatpush2.msra.mxu0 0.0
    %2253 = vmatprep.subr.mxu0 0.0
    %2254 = vmatpush2.msra.mxu0 0.0
    %2255 = vmatprep.subr.mxu0 0.0
    %2256 = vmatpush2.msra.mxu0 0.0
    %2257 = vmatprep.subr.mxu0 0.0
    %2258 = vmatpush2.msra.mxu0 0.0
    %2259 = vmatprep.subr.mxu0 0.0
    %2260 = vmatpush2.msra.mxu0 0.0
    %2261 = vmatprep.subr.mxu0 0.0
    %2262 = vmatpush2.msra.mxu0 0.0
    %2263 = vmatprep.mubr.f32.mxu0 0.0
    %2264 = vmatmul.mubr.f32.gmra.mxu0 %v2197
    %v2265 = vpop.f32.mrf.mxu0
    %v2266 = vadd.f32 0.0, %v2265
    %v2267 = vpop.f32.mrf.mxu0
    %2268 = vdwg.mxu0
    %2269 = vrot.lane.b32.xlu0 %v1693, 64
    %v2270 = vpop.permute.xlu0 %2269
    %2271 = vrot.lane.b32.xlu0 %v1695, 64
    %v2272 = vpop.permute.xlu0 %2271
    %v2273 = vsel %vm420, %v2270, 0
    %v2275 = vsel %vm420, %v2272, 0
    %2277 = vmatprep.subr.mxu0 0.0
    %2278 = vmatpush1.xpose.msra.mxu0 0.0
    %2279 = vmatprep.subr.mxu0 0.0
    %2280 = vmatpush1.xpose.msra.mxu0 0.0
    %2281 = vmatprep.subr.mxu0 0.0
    %2282 = vmatpush1.xpose.msra.mxu0 0.0
    %2283 = vmatprep.subr.mxu0 0.0
    %2284 = vmatpush1.xpose.msra.mxu0 0.0
    %2285 = vmatprep.subr.mxu0 0.0
    %2286 = vmatpush1.xpose.msra.mxu0 0.0
    %2287 = vmatprep.subr.mxu0 0.0
    %2288 = vmatpush1.xpose.msra.mxu0 0.0
    %2289 = vmatprep.subr.mxu0 0.0
    %2290 = vmatpush1.xpose.msra.mxu0 0.0
    %2291 = vmatprep.subr.mxu0 0.0
    %2292 = vmatpush1.xpose.msra.mxu0 0.0
    %2293 = vmatprep.subr.mxu0 0.0
    %2294 = vmatpush1.xpose.msra.mxu0 0.0
    %2295 = vmatprep.subr.mxu0 0.0
    %2296 = vmatpush1.xpose.msra.mxu0 0.0
    %2297 = vmatprep.subr.mxu0 0.0
    %2298 = vmatpush1.xpose.msra.mxu0 0.0
    %2299 = vmatprep.subr.mxu0 0.0
    %2300 = vmatpush1.xpose.msra.mxu0 0.0
    %2301 = vmatprep.subr.mxu0 0.0
    %2302 = vmatpush1.xpose.msra.mxu0 0.0
    %2303 = vmatprep.subr.mxu0 0.0
    %2304 = vmatpush1.xpose.msra.mxu0 0.0
    %2305 = vmatprep.subr.mxu0 0.0
    %2306 = vmatpush1.xpose.msra.mxu0 0.0
    %2307 = vmatprep.subr.mxu0 0.0
    %2308 = vmatpush1.xpose.msra.mxu0 %v2275
    %2309 = vmatprep.subr.mxu0 0.0
    %2310 = vmatpush2.xpose.msra.mxu0 0.0
    %2311 = vmatprep.subr.mxu0 0.0
    %2312 = vmatpush2.xpose.msra.mxu0 0.0
    %2313 = vmatprep.subr.mxu0 0.0
    %2314 = vmatpush2.xpose.msra.mxu0 0.0
    %2315 = vmatprep.subr.mxu0 0.0
    %2316 = vmatpush2.xpose.msra.mxu0 0.0
    %2317 = vmatprep.subr.mxu0 0.0
    %2318 = vmatpush2.xpose.msra.mxu0 0.0
    %2319 = vmatprep.subr.mxu0 0.0
    %2320 = vmatpush2.xpose.msra.mxu0 0.0
    %2321 = vmatprep.subr.mxu0 0.0
    %2322 = vmatpush2.xpose.msra.mxu0 0.0
    %2323 = vmatprep.subr.mxu0 0.0
    %2324 = vmatpush2.xpose.msra.mxu0 0.0
    %2325 = vmatprep.subr.mxu0 0.0
    %2326 = vmatpush2.xpose.msra.mxu0 0.0
    %2327 = vmatprep.subr.mxu0 0.0
    %2328 = vmatpush2.xpose.msra.mxu0 0.0
    %2329 = vmatprep.subr.mxu0 0.0
    %2330 = vmatpush2.xpose.msra.mxu0 0.0
    %2331 = vmatprep.subr.mxu0 0.0
    %2332 = vmatpush2.xpose.msra.mxu0 0.0
    %2333 = vmatprep.subr.mxu0 0.0
    %2334 = vmatpush2.xpose.msra.mxu0 0.0
    %2335 = vmatprep.subr.mxu0 0.0
    %2336 = vmatpush2.xpose.msra.mxu0 0.0
    %2337 = vmatprep.subr.mxu0 0.0
    %2338 = vmatpush2.xpose.msra.mxu0 0.0
    %2339 = vmatprep.subr.mxu0 0.0
    %2340 = vmatpush2.xpose.msra.mxu0 0.0
    %2341 = vmatprep.mubr.f32.mxu0 0.0
    %2342 = vmatmul.mubr.f32.gmra.mxu0 %v2273
    %v2343 = vpop.f32.mrf.mxu0
    %v2344 = vadd.f32 0.0, %v2343
    %v2345 = vpop.f32.mrf.mxu0
    %2346 = vdwg.mxu0
    %v2347 = vmul.f32 %v2344, 0.125
    %v2348 = vadd.f32 %v2347, %v841
    %v2349 = vsel %vm503, %v2348, -inf
    %2350 = vmax.xlane.f32.xlu0 %v2349
    %v2351 = vpop.xlane.xlu0 %2350
    %v2352 = vsub.f32 %v2348, %v2351
    %v2353 = vmul.f32 %v2352, 1.442695
    %v2354 = vpow.pop %v2353
    %v2355 = vsel %vm503, %v2354, 0.0
    %2356 = vadd.xlane.f32.xlu0 %v2355
    %v2357 = vpop.xlane.xlu0 %2356
    %v2358 = vrcp.pop %v2357
    %v2359 = vmul.f32 %v2354, %v2358
    %2361 = vrot.lane.b32.xlu0 %v1769, 64
    %v2362 = vpop.permute.xlu0 %2361
    %v2365 = vsel %vm503, %v2359, 0
    %2367 = vmatprep.subr.mxu0 0.0
    %2368 = vmatpush1.msra.mxu0 0.0
    %2369 = vmatprep.subr.mxu0 0.0
    %2370 = vmatpush1.msra.mxu0 0.0
    %2371 = vmatprep.subr.mxu0 0.0
    %2372 = vmatpush1.msra.mxu0 0.0
    %2373 = vmatprep.subr.mxu0 0.0
    %2374 = vmatpush1.msra.mxu0 0.0
    %2375 = vmatprep.subr.mxu0 0.0
    %2376 = vmatpush1.msra.mxu0 0.0
    %2377 = vmatprep.subr.mxu0 0.0
    %2378 = vmatpush1.msra.mxu0 0.0
    %2379 = vmatprep.subr.mxu0 0.0
    %2380 = vmatpush1.msra.mxu0 0.0
    %2381 = vmatprep.subr.mxu0 0.0
    %2382 = vmatpush1.msra.mxu0 0.0
    %2383 = vmatprep.subr.mxu0 0.0
    %2384 = vmatpush1.msra.mxu0 0.0
    %2385 = vmatprep.subr.mxu0 0.0
    %2386 = vmatpush1.msra.mxu0 0.0
    %2387 = vmatprep.subr.mxu0 0.0
    %2388 = vmatpush1.msra.mxu0 0.0
    %2389 = vmatprep.subr.mxu0 0.0
    %2390 = vmatpush1.msra.mxu0 0.0
    %2391 = vmatprep.subr.mxu0 0.0
    %2392 = vmatpush1.msra.mxu0 0.0
    %2393 = vmatprep.subr.mxu0 0.0
    %2394 = vmatpush1.msra.mxu0 0.0
    %2395 = vmatprep.subr.mxu0 0.0
    %2396 = vmatpush1.msra.mxu0 0.0
    %2397 = vmatprep.subr.mxu0 0.0
    %2398 = vmatpush1.msra.mxu0 %v2362
    %2399 = vmatprep.subr.mxu0 0.0
    %2400 = vmatpush2.msra.mxu0 0.0
    %2401 = vmatprep.subr.mxu0 0.0
    %2402 = vmatpush2.msra.mxu0 0.0
    %2403 = vmatprep.subr.mxu0 0.0
    %2404 = vmatpush2.msra.mxu0 0.0
    %2405 = vmatprep.subr.mxu0 0.0
    %2406 = vmatpush2.msra.mxu0 0.0
    %2407 = vmatprep.subr.mxu0 0.0
    %2408 = vmatpush2.msra.mxu0 0.0
    %2409 = vmatprep.subr.mxu0 0.0
    %2410 = vmatpush2.msra.mxu0 0.0
    %2411 = vmatprep.subr.mxu0 0.0
    %2412 = vmatpush2.msra.mxu0 0.0
    %2413 = vmatprep.subr.mxu0 0.0
    %2414 = vmatpush2.msra.mxu0 0.0
    %2415 = vmatprep.subr.mxu0 0.0
    %2416 = vmatpush2.msra.mxu0 0.0
    %2417 = vmatprep.subr.mxu0 0.0
    %2418 = vmatpush2.msra.mxu0 0.0
    %2419 = vmatprep.subr.mxu0 0.0
    %2420 = vmatpush2.msra.mxu0 0.0
    %2421 = vmatprep.subr.mxu0 0.0
    %2422 = vmatpush2.msra.mxu0 0.0
    %2423 = vmatprep.subr.mxu0 0.0
    %2424 = vmatpush2.msra.mxu0 0.0
    %2425 = vmatprep.subr.mxu0 0.0
    %2426 = vmatpush2.msra.mxu0 0.0
    %2427 = vmatprep.subr.mxu0 0.0
    %2428 = vmatpush2.msra.mxu0 0.0
    %2429 = vmatprep.subr.mxu0 0.0
    %2430 = vmatpush2.msra.mxu0 0.0
    %2431 = vmatprep.mubr.f32.mxu0 0.0
    %2432 = vmatmul.mubr.f32.gmra.mxu0 %v2365
    %v2433 = vpop.f32.mrf.mxu0
    %v2434 = vadd.f32 0.0, %v2433
    %v2435 = vpop.f32.mrf.mxu0
    %2436 = vdwg.mxu0
    %2438 = vrot.lane.b32.xlu0 %v2434, 64
    %v2439 = vpop.permute.xlu0 %2438
    %v2441 = vsel %vm420, %v2266, %v2439
    %s2442 = scalar_lea.vmem %s6, 128
    %v2443 = vld [vmem:[%s2442] sm:$0xff]
    %v2444 = vld [vmem:[%s2442 + $0x8] sm:$0xff]
    %v2445 = vld [vmem:[%s2442 + $0x10] sm:$0xff]
    %v2446 = vld [vmem:[%s2442 + $0x18] sm:$0xff]
    %v2447 = vld [vmem:[%s2442 + $0x20] sm:$0xff]
    %v2448 = vld [vmem:[%s2442 + $0x28] sm:$0xff]
    %v2449 = vld [vmem:[%s2442 + $0x30] sm:$0xff]
    %v2450 = vld [vmem:[%s2442 + $0x38] sm:$0xff]
    %v2451 = vld [vmem:[%s2442 + $0x40] sm:$0xff]
    %v2452 = vld [vmem:[%s2442 + $0x48] sm:$0xff]
    %v2453 = vld [vmem:[%s2442 + $0x50] sm:$0xff]
    %v2454 = vld [vmem:[%s2442 + $0x58] sm:$0xff]
    %v2455 = vld [vmem:[%s2442 + $0x60] sm:$0xff]
    %v2456 = vld [vmem:[%s2442 + $0x68] sm:$0xff]
    %v2457 = vld [vmem:[%s2442 + $0x70] sm:$0xff]
    %v2458 = vld [vmem:[%s2442 + $0x78] sm:$0xff]
    %s2459 = scalar_lea.vmem %s7, 1
    %v2460 = vld [vmem:[%s2459] sm:$0x1]
    %v2462 = vlaneseq
    %v2463 = vshrl.u32 %v2462, 7
    %v2464 = vsub.s32 0, %v2463
    %v2465 = vrot.slane %v2460, %v2464
    %2467 = vmatprep.subr.mxu0 0.0
    %2468 = vmatpush1.msra.mxu0 %v2458
    %2469 = vmatprep.subr.mxu0 0.0
    %2470 = vmatpush1.msra.mxu0 %v2457
    %2471 = vmatprep.subr.mxu0 0.0
    %2472 = vmatpush1.msra.mxu0 %v2456
    %2473 = vmatprep.subr.mxu0 0.0
    %2474 = vmatpush1.msra.mxu0 %v2455
    %2475 = vmatprep.subr.mxu0 0.0
    %2476 = vmatpush1.msra.mxu0 %v2454
    %2477 = vmatprep.subr.mxu0 0.0
    %2478 = vmatpush1.msra.mxu0 %v2453
    %2479 = vmatprep.subr.mxu0 0.0
    %2480 = vmatpush1.msra.mxu0 %v2452
    %2481 = vmatprep.subr.mxu0 0.0
    %2482 = vmatpush1.msra.mxu0 %v2451
    %2483 = vmatprep.subr.mxu0 0.0
    %2484 = vmatpush1.msra.mxu0 %v2450
    %2485 = vmatprep.subr.mxu0 0.0
    %2486 = vmatpush1.msra.mxu0 %v2449
    %2487 = vmatprep.subr.mxu0 0.0
    %2488 = vmatpush1.msra.mxu0 %v2448
    %2489 = vmatprep.subr.mxu0 0.0
    %2490 = vmatpush1.msra.mxu0 %v2447
    %2491 = vmatprep.subr.mxu0 0.0
    %2492 = vmatpush1.msra.mxu0 %v2446
    %2493 = vmatprep.subr.mxu0 0.0
    %2494 = vmatpush1.msra.mxu0 %v2445
    %2495 = vmatprep.subr.mxu0 0.0
    %2496 = vmatpush1.msra.mxu0 %v2444
    %2497 = vmatprep.subr.mxu0 0.0
    %2498 = vmatpush1.msra.mxu0 %v2443
    %2499 = vmatprep.subr.mxu0 0.0
    %2500 = vmatpush2.msra.mxu0 0.0
    %2501 = vmatprep.subr.mxu0 0.0
    %2502 = vmatpush2.msra.mxu0 0.0
    %2503 = vmatprep.subr.mxu0 0.0
    %2504 = vmatpush2.msra.mxu0 0.0
    %2505 = vmatprep.subr.mxu0 0.0
    %2506 = vmatpush2.msra.mxu0 0.0
    %2507 = vmatprep.subr.mxu0 0.0
    %2508 = vmatpush2.msra.mxu0 0.0
    %2509 = vmatprep.subr.mxu0 0.0
    %2510 = vmatpush2.msra.mxu0 0.0
    %2511 = vmatprep.subr.mxu0 0.0
    %2512 = vmatpush2.msra.mxu0 0.0
    %2513 = vmatprep.subr.mxu0 0.0
    %2514 = vmatpush2.msra.mxu0 0.0
    %2515 = vmatprep.subr.mxu0 0.0
    %2516 = vmatpush2.msra.mxu0 0.0
    %2517 = vmatprep.subr.mxu0 0.0
    %2518 = vmatpush2.msra.mxu0 0.0
    %2519 = vmatprep.subr.mxu0 0.0
    %2520 = vmatpush2.msra.mxu0 0.0
    %2521 = vmatprep.subr.mxu0 0.0
    %2522 = vmatpush2.msra.mxu0 0.0
    %2523 = vmatprep.subr.mxu0 0.0
    %2524 = vmatpush2.msra.mxu0 0.0
    %2525 = vmatprep.subr.mxu0 0.0
    %2526 = vmatpush2.msra.mxu0 0.0
    %2527 = vmatprep.subr.mxu0 0.0
    %2528 = vmatpush2.msra.mxu0 0.0
    %2529 = vmatprep.subr.mxu0 0.0
    %2530 = vmatpush2.msra.mxu0 0.0
    %2531 = vmatprep.mubr.f32.mxu0 0.0
    %2532 = vmatmul.mubr.f32.gmra.mxu0 %v2106
    %v2533 = vpop.f32.mrf.mxu0
    %v2534 = vadd.f32 %v2465, %v2533
    %v2535 = vpop.f32.mrf.mxu0
    %2536 = vmatprep.mubr.f32.mxu0 0.0
    %2537 = vmatmul.mubr.f32.gmra.mxu0 %v2441
    %v2538 = vpop.f32.mrf.mxu0
    %v2539 = vadd.f32 %v2465, %v2538
    %v2540 = vpop.f32.mrf.mxu0
    %2541 = vdwg.mxu0
    %v2542 = vadd.f32 %v2534, %v1551
    %v2543 = vadd.f32 %v2539, %v1552
    %s2544 = scalar_lea.vmem %s8, 1
    %v2545 = vld [vmem:[%s2544] sm:$0x1]
    %s2546 = scalar_lea.vmem %s9, 1
    %v2547 = vld [vmem:[%s2546] sm:$0x1]
    %2548 = vadd.xlane.f32.xlu0 %v2542
    %v2549 = vpop.xlane.xlu0 %2548
    %2550 = vadd.xlane.f32.xlu0 %v2543
    %v2551 = vpop.xlane.xlu0 %2550
    %v2552 = vmul.f32 %v2549, %v167
    %v2553 = vmul.f32 %v2551, %v167
    %v2554 = vsub.f32 %v2542, %v2552
    %v2555 = vsub.f32 %v2543, %v2553
    %v2556 = vmul.f32 %v2554, %v2554
    %v2557 = vmul.f32 %v2555, %v2555
    %2558 = vadd.xlane.f32.xlu0 %v2556
    %v2559 = vpop.xlane.xlu0 %2558
    %2560 = vadd.xlane.f32.xlu0 %v2557
    %v2561 = vpop.xlane.xlu0 %2560
    %v2562 = vmul.f32 %v2559, %v167
    %v2563 = vmul.f32 %v2561, %v167
    %v2564 = vadd.f32 %v2562, 1e-12
    %v2565 = vadd.f32 %v2563, 1e-12
    %v2566 = vrsqrt.pop %v2564
    %v2567 = vrsqrt.pop %v2565
    %v2568 = vmul.f32 %v2554, %v2566
    %v2569 = vmul.f32 %v2555, %v2567
    %v2571 = vlaneseq
    %v2572 = vshrl.u32 %v2571, 7
    %v2573 = vsub.s32 0, %v2572
    %v2574 = vrot.slane %v2545, %v2573
    %v2576 = vmul.f32 %v2568, %v2574
    %v2577 = vmul.f32 %v2569, %v2574
    %v2579 = vlaneseq
    %v2580 = vshrl.u32 %v2579, 7
    %v2581 = vsub.s32 0, %v2580
    %v2582 = vrot.slane %v2547, %v2581
    %v2584 = vadd.f32 %v2576, %v2582
    %v2585 = vadd.f32 %v2577, %v2582
    %s2586 = scalar_lea.vmem [#allocation5], 256
    %v2587 = vld [vmem:[%s2586] sm:$0xff]
    %v2588 = vld [vmem:[%s2586 + $0x8] sm:$0xff]
    %v2589 = vld [vmem:[%s2586 + $0x10] sm:$0xff]
    %v2590 = vld [vmem:[%s2586 + $0x18] sm:$0xff]
    %v2591 = vld [vmem:[%s2586 + $0x20] sm:$0xff]
    %v2592 = vld [vmem:[%s2586 + $0x28] sm:$0xff]
    %v2593 = vld [vmem:[%s2586 + $0x30] sm:$0xff]
    %v2594 = vld [vmem:[%s2586 + $0x38] sm:$0xff]
    %v2595 = vld [vmem:[%s2586 + $0x40] sm:$0xff]
    %v2596 = vld [vmem:[%s2586 + $0x48] sm:$0xff]
    %v2597 = vld [vmem:[%s2586 + $0x50] sm:$0xff]
    %v2598 = vld [vmem:[%s2586 + $0x58] sm:$0xff]
    %v2599 = vld [vmem:[%s2586 + $0x60] sm:$0xff]
    %v2600 = vld [vmem:[%s2586 + $0x68] sm:$0xff]
    %v2601 = vld [vmem:[%s2586 + $0x70] sm:$0xff]
    %v2602 = vld [vmem:[%s2586 + $0x78] sm:$0xff]
    %v2603 = vld [vmem:[%s2586 + $0x80] sm:$0xff]
    %v2604 = vld [vmem:[%s2586 + $0x88] sm:$0xff]
    %v2605 = vld [vmem:[%s2586 + $0x90] sm:$0xff]
    %v2606 = vld [vmem:[%s2586 + $0x98] sm:$0xff]
    %v2607 = vld [vmem:[%s2586 + $0xa0] sm:$0xff]
    %v2608 = vld [vmem:[%s2586 + $0xa8] sm:$0xff]
    %v2609 = vld [vmem:[%s2586 + $0xb0] sm:$0xff]
    %v2610 = vld [vmem:[%s2586 + $0xb8] sm:$0xff]
    %v2611 = vld [vmem:[%s2586 + $0xc0] sm:$0xff]
    %v2612 = vld [vmem:[%s2586 + $0xc8] sm:$0xff]
    %v2613 = vld [vmem:[%s2586 + $0xd0] sm:$0xff]
    %v2614 = vld [vmem:[%s2586 + $0xd8] sm:$0xff]
    %v2615 = vld [vmem:[%s2586 + $0xe0] sm:$0xff]
    %v2616 = vld [vmem:[%s2586 + $0xe8] sm:$0xff]
    %v2617 = vld [vmem:[%s2586 + $0xf0] sm:$0xff]
    %v2618 = vld [vmem:[%s2586 + $0xf8] sm:$0xff]
    %s2619 = scalar_lea.vmem %s11, 2
    %v2620 = vld [vmem:[%s2619] sm:$0x3]
    %v2622 = vlaneseq
    %v2623 = vshrl.u32 %v2622, 7
    %v2624 = vsub.s32 0, %v2623
    %v2625 = vrot.slane %v2620, %v2624
    %v2626 = vlaneseq
    %v2627 = vshrl.u32 %v2626, 7
    %v2628 = vsub.s32 1, %v2627
    %v2629 = vrot.slane %v2620, %v2628
    %2632 = vmatprep.subr.mxu0 %v2618
    %2633 = vmatpush1.msra.mxu0 %v2617
    %2634 = vmatprep.subr.mxu0 %v2616
    %2635 = vmatpush1.msra.mxu0 %v2615
    %2636 = vmatprep.subr.mxu0 %v2614
    %2637 = vmatpush1.msra.mxu0 %v2613
    %2638 = vmatprep.subr.mxu0 %v2612
    %2639 = vmatpush1.msra.mxu0 %v2611
    %2640 = vmatprep.subr.mxu0 %v2610
    %2641 = vmatpush1.msra.mxu0 %v2609
    %2642 = vmatprep.subr.mxu0 %v2608
    %2643 = vmatpush1.msra.mxu0 %v2607
    %2644 = vmatprep.subr.mxu0 %v2606
    %2645 = vmatpush1.msra.mxu0 %v2605
    %2646 = vmatprep.subr.mxu0 %v2604
    %2647 = vmatpush1.msra.mxu0 %v2603
    %2648 = vmatprep.subr.mxu0 %v2602
    %2649 = vmatpush1.msra.mxu0 %v2601
    %2650 = vmatprep.subr.mxu0 %v2600
    %2651 = vmatpush1.msra.mxu0 %v2599
    %2652 = vmatprep.subr.mxu0 %v2598
    %2653 = vmatpush1.msra.mxu0 %v2597
    %2654 = vmatprep.subr.mxu0 %v2596
    %2655 = vmatpush1.msra.mxu0 %v2595
    %2656 = vmatprep.subr.mxu0 %v2594
    %2657 = vmatpush1.msra.mxu0 %v2593
    %2658 = vmatprep.subr.mxu0 %v2592
    %2659 = vmatpush1.msra.mxu0 %v2591
    %2660 = vmatprep.subr.mxu0 %v2590
    %2661 = vmatpush1.msra.mxu0 %v2589
    %2662 = vmatprep.subr.mxu0 %v2588
    %2663 = vmatpush1.msra.mxu0 %v2587
    %2664 = vmatprep.subr.mxu0 0.0
    %2665 = vmatpush2.msra.mxu0 0.0
    %2666 = vmatprep.subr.mxu0 0.0
    %2667 = vmatpush2.msra.mxu0 0.0
    %2668 = vmatprep.subr.mxu0 0.0
    %2669 = vmatpush2.msra.mxu0 0.0
    %2670 = vmatprep.subr.mxu0 0.0
    %2671 = vmatpush2.msra.mxu0 0.0
    %2672 = vmatprep.subr.mxu0 0.0
    %2673 = vmatpush2.msra.mxu0 0.0
    %2674 = vmatprep.subr.mxu0 0.0
    %2675 = vmatpush2.msra.mxu0 0.0
    %2676 = vmatprep.subr.mxu0 0.0
    %2677 = vmatpush2.msra.mxu0 0.0
    %2678 = vmatprep.subr.mxu0 0.0
    %2679 = vmatpush2.msra.mxu0 0.0
    %2680 = vmatprep.subr.mxu0 0.0
    %2681 = vmatpush2.msra.mxu0 0.0
    %2682 = vmatprep.subr.mxu0 0.0
    %2683 = vmatpush2.msra.mxu0 0.0
    %2684 = vmatprep.subr.mxu0 0.0
    %2685 = vmatpush2.msra.mxu0 0.0
    %2686 = vmatprep.subr.mxu0 0.0
    %2687 = vmatpush2.msra.mxu0 0.0
    %2688 = vmatprep.subr.mxu0 0.0
    %2689 = vmatpush2.msra.mxu0 0.0
    %2690 = vmatprep.subr.mxu0 0.0
    %2691 = vmatpush2.msra.mxu0 0.0
    %2692 = vmatprep.subr.mxu0 0.0
    %2693 = vmatpush2.msra.mxu0 0.0
    %2694 = vmatprep.subr.mxu0 0.0
    %2695 = vmatpush2.msra.mxu0 0.0
    %2696 = vmatprep.mubr.f32.mxu0 0.0
    %2697 = vmatmul.mubr.f32.gmra.mxu0 %v2584
    %v2698 = vpop.f32.mrf.mxu0
    %v2699 = vadd.f32 %v2625, %v2698
    %v2700 = vpop.f32.mrf.mxu0
    %v2701 = vadd.f32 %v2629, %v2700
    %2702 = vmatprep.mubr.f32.mxu0 0.0
    %2703 = vmatmul.mubr.f32.gmra.mxu0 %v2585
    %v2704 = vpop.f32.mrf.mxu0
    %v2705 = vadd.f32 %v2625, %v2704
    %v2706 = vpop.f32.mrf.mxu0
    %v2707 = vadd.f32 %v2629, %v2706
    %2708 = vdwg.mxu0
    %v2709 = vmul.f32 %v2699, 0.5
    %v2710 = vmul.f32 %v2701, 0.5
    %v2711 = vmul.f32 %v2705, 0.5
    %v2712 = vmul.f32 %v2707, 0.5
    %v2713 = vmul.f32 %v2699, 0.044715
    %v2714 = vmul.f32 %v2701, 0.044715
    %v2715 = vmul.f32 %v2705, 0.044715
    %v2716 = vmul.f32 %v2707, 0.044715
    %v2717 = vmul.f32 %v2713, %v2699
    %v2718 = vmul.f32 %v2714, %v2701
    %v2719 = vmul.f32 %v2715, %v2705
    %v2720 = vmul.f32 %v2716, %v2707
    %v2721 = vmul.f32 %v2717, %v2699
    %v2722 = vmul.f32 %v2718, %v2701
    %v2723 = vmul.f32 %v2719, %v2705
    %v2724 = vmul.f32 %v2720, %v2707
    %v2725 = vadd.f32 %v2699, %v2721
    %v2726 = vadd.f32 %v2701, %v2722
    %v2727 = vadd.f32 %v2705, %v2723
    %v2728 = vadd.f32 %v2707, %v2724
    %v2729 = vmul.f32 %v2725, 0.7978846
    %v2730 = vmul.f32 %v2726, 0.7978846
    %v2731 = vmul.f32 %v2727, 0.7978846
    %v2732 = vmul.f32 %v2728, 0.7978846
    %v2733 = vtanh.pop %v2729
    %v2734 = vtanh.pop %v2730
    %v2735 = vtanh.pop %v2731
    %v2736 = vtanh.pop %v2732
    %v2737 = vadd.f32 %v2733, 1.0
    %v2738 = vadd.f32 %v2734, 1.0
    %v2739 = vadd.f32 %v2735, 1.0
    %v2740 = vadd.f32 %v2736, 1.0
    %v2741 = vmul.f32 %v2709, %v2737
    %v2742 = vmul.f32 %v2710, %v2738
    %v2743 = vmul.f32 %v2711, %v2739
    %v2744 = vmul.f32 %v2712, %v2740
    %s2745 = scalar_lea.vmem [#allocation7], 256
    %v2746 = vld [vmem:[%s2745] sm:$0xff]
    %v2747 = vld [vmem:[%s2745 + $0x8] sm:$0xff]
    %v2748 = vld [vmem:[%s2745 + $0x10] sm:$0xff]
    %v2749 = vld [vmem:[%s2745 + $0x18] sm:$0xff]
    %v2750 = vld [vmem:[%s2745 + $0x20] sm:$0xff]
    %v2751 = vld [vmem:[%s2745 + $0x28] sm:$0xff]
    %v2752 = vld [vmem:[%s2745 + $0x30] sm:$0xff]
    %v2753 = vld [vmem:[%s2745 + $0x38] sm:$0xff]
    %v2754 = vld [vmem:[%s2745 + $0x40] sm:$0xff]
    %v2755 = vld [vmem:[%s2745 + $0x48] sm:$0xff]
    %v2756 = vld [vmem:[%s2745 + $0x50] sm:$0xff]
    %v2757 = vld [vmem:[%s2745 + $0x58] sm:$0xff]
    %v2758 = vld [vmem:[%s2745 + $0x60] sm:$0xff]
    %v2759 = vld [vmem:[%s2745 + $0x68] sm:$0xff]
    %v2760 = vld [vmem:[%s2745 + $0x70] sm:$0xff]
    %v2761 = vld [vmem:[%s2745 + $0x78] sm:$0xff]
    %v2762 = vld [vmem:[%s2745 + $0x80] sm:$0xff]
    %v2763 = vld [vmem:[%s2745 + $0x88] sm:$0xff]
    %v2764 = vld [vmem:[%s2745 + $0x90] sm:$0xff]
    %v2765 = vld [vmem:[%s2745 + $0x98] sm:$0xff]
    %v2766 = vld [vmem:[%s2745 + $0xa0] sm:$0xff]
    %v2767 = vld [vmem:[%s2745 + $0xa8] sm:$0xff]
    %v2768 = vld [vmem:[%s2745 + $0xb0] sm:$0xff]
    %v2769 = vld [vmem:[%s2745 + $0xb8] sm:$0xff]
    %v2770 = vld [vmem:[%s2745 + $0xc0] sm:$0xff]
    %v2771 = vld [vmem:[%s2745 + $0xc8] sm:$0xff]
    %v2772 = vld [vmem:[%s2745 + $0xd0] sm:$0xff]
    %v2773 = vld [vmem:[%s2745 + $0xd8] sm:$0xff]
    %v2774 = vld [vmem:[%s2745 + $0xe0] sm:$0xff]
    %v2775 = vld [vmem:[%s2745 + $0xe8] sm:$0xff]
    %v2776 = vld [vmem:[%s2745 + $0xf0] sm:$0xff]
    %v2777 = vld [vmem:[%s2745 + $0xf8] sm:$0xff]
    %s2778 = scalar_lea.vmem %s13, 1
    %v2779 = vld [vmem:[%s2778] sm:$0x1]
    %v2781 = vlaneseq
    %v2782 = vshrl.u32 %v2781, 7
    %v2783 = vsub.s32 0, %v2782
    %v2784 = vrot.slane %v2779, %v2783
    %2786 = vmatprep.subr.mxu0 0.0
    %2787 = vmatpush1.msra.mxu0 %v2761
    %2788 = vmatprep.subr.mxu0 0.0
    %2789 = vmatpush1.msra.mxu0 %v2760
    %2790 = vmatprep.subr.mxu0 0.0
    %2791 = vmatpush1.msra.mxu0 %v2759
    %2792 = vmatprep.subr.mxu0 0.0
    %2793 = vmatpush1.msra.mxu0 %v2758
    %2794 = vmatprep.subr.mxu0 0.0
    %2795 = vmatpush1.msra.mxu0 %v2757
    %2796 = vmatprep.subr.mxu0 0.0
    %2797 = vmatpush1.msra.mxu0 %v2756
    %2798 = vmatprep.subr.mxu0 0.0
    %2799 = vmatpush1.msra.mxu0 %v2755
    %2800 = vmatprep.subr.mxu0 0.0
    %2801 = vmatpush1.msra.mxu0 %v2754
    %2802 = vmatprep.subr.mxu0 0.0
    %2803 = vmatpush1.msra.mxu0 %v2753
    %2804 = vmatprep.subr.mxu0 0.0
    %2805 = vmatpush1.msra.mxu0 %v2752
    %2806 = vmatprep.subr.mxu0 0.0
    %2807 = vmatpush1.msra.mxu0 %v2751
    %2808 = vmatprep.subr.mxu0 0.0
    %2809 = vmatpush1.msra.mxu0 %v2750
    %2810 = vmatprep.subr.mxu0 0.0
    %2811 = vmatpush1.msra.mxu0 %v2749
    %2812 = vmatprep.subr.mxu0 0.0
    %2813 = vmatpush1.msra.mxu0 %v2748
    %2814 = vmatprep.subr.mxu0 0.0
    %2815 = vmatpush1.msra.mxu0 %v2747
    %2816 = vmatprep.subr.mxu0 0.0
    %2817 = vmatpush1.msra.mxu0 %v2746
    %2818 = vmatprep.subr.mxu0 0.0
    %2819 = vmatpush2.msra.mxu0 %v2777
    %2820 = vmatprep.subr.mxu0 0.0
    %2821 = vmatpush2.msra.mxu0 %v2776
    %2822 = vmatprep.subr.mxu0 0.0
    %2823 = vmatpush2.msra.mxu0 %v2775
    %2824 = vmatprep.subr.mxu0 0.0
    %2825 = vmatpush2.msra.mxu0 %v2774
    %2826 = vmatprep.subr.mxu0 0.0
    %2827 = vmatpush2.msra.mxu0 %v2773
    %2828 = vmatprep.subr.mxu0 0.0
    %2829 = vmatpush2.msra.mxu0 %v2772
    %2830 = vmatprep.subr.mxu0 0.0
    %2831 = vmatpush2.msra.mxu0 %v2771
    %2832 = vmatprep.subr.mxu0 0.0
    %2833 = vmatpush2.msra.mxu0 %v2770
    %2834 = vmatprep.subr.mxu0 0.0
    %2835 = vmatpush2.msra.mxu0 %v2769
    %2836 = vmatprep.subr.mxu0 0.0
    %2837 = vmatpush2.msra.mxu0 %v2768
    %2838 = vmatprep.subr.mxu0 0.0
    %2839 = vmatpush2.msra.mxu0 %v2767
    %2840 = vmatprep.subr.mxu0 0.0
    %2841 = vmatpush2.msra.mxu0 %v2766
    %2842 = vmatprep.subr.mxu0 0.0
    %2843 = vmatpush2.msra.mxu0 %v2765
    %2844 = vmatprep.subr.mxu0 0.0
    %2845 = vmatpush2.msra.mxu0 %v2764
    %2846 = vmatprep.subr.mxu0 0.0
    %2847 = vmatpush2.msra.mxu0 %v2763
    %2848 = vmatprep.subr.mxu0 0.0
    %2849 = vmatpush2.msra.mxu0 %v2762
    %2850 = vmatprep.mubr.f32.mxu0 %v2742
    %2851 = vmatmul.mubr.f32.gmra.mxu0 %v2741
    %v2852 = vpop.f32.mrf.mxu0
    %v2853 = vadd.f32 %v2784, %v2852
    %v2854 = vpop.f32.mrf.mxu0
    %2855 = vmatprep.mubr.f32.mxu0 %v2744
    %2856 = vmatmul.mubr.f32.gmra.mxu0 %v2743
    %v2857 = vpop.f32.mrf.mxu0
    %v2858 = vadd.f32 %v2784, %v2857
    %v2859 = vpop.f32.mrf.mxu0
    %2860 = vdwg.mxu0
    %v2861 = vadd.f32 %v2853, %v2584
    %v2862 = vadd.f32 %v2858, %v2585
    %s2863 = scalar_lea.vmem [#allocation8], 1
    %v2864 = vld [vmem:[%s2863] sm:$0x1]
    %s2865 = scalar_lea.vmem [#allocation10], 1
    %v2866 = vld [vmem:[%s2865] sm:$0x1]
    %2867 = vadd.xlane.f32.xlu0 %v2861
    %v2868 = vpop.xlane.xlu0 %2867
    %2869 = vadd.xlane.f32.xlu0 %v2862
    %v2870 = vpop.xlane.xlu0 %2869
    %v2871 = vmul.f32 %v2868, %v167
    %v2872 = vmul.f32 %v2870, %v167
    %v2873 = vsub.f32 %v2861, %v2871
    %v2874 = vsub.f32 %v2862, %v2872
    %v2875 = vmul.f32 %v2873, %v2873
    %v2876 = vmul.f32 %v2874, %v2874
    %2877 = vadd.xlane.f32.xlu0 %v2875
    %v2878 = vpop.xlane.xlu0 %2877
    %2879 = vadd.xlane.f32.xlu0 %v2876
    %v2880 = vpop.xlane.xlu0 %2879
    %v2881 = vmul.f32 %v2878, %v167
    %v2882 = vmul.f32 %v2880, %v167
    %v2883 = vadd.f32 %v2881, 1e-12
    %v2884 = vadd.f32 %v2882, 1e-12
    %v2885 = vrsqrt.pop %v2883
    %v2886 = vrsqrt.pop %v2884
    %v2887 = vmul.f32 %v2873, %v2885
    %v2888 = vmul.f32 %v2874, %v2886
    %v2890 = vlaneseq
    %v2891 = vshrl.u32 %v2890, 7
    %v2892 = vsub.s32 0, %v2891
    %v2893 = vrot.slane %v2864, %v2892
    %v2895 = vmul.f32 %v2887, %v2893
    %v2896 = vmul.f32 %v2888, %v2893
    %v2898 = vlaneseq
    %v2899 = vshrl.u32 %v2898, 7
    %v2900 = vsub.s32 0, %v2899
    %v2901 = vrot.slane %v2866, %v2900
    %v2903 = vadd.f32 %v2895, %v2901
    %v2904 = vadd.f32 %v2896, %v2901
    %v2905 = vld [vmem:[%s16] sm:$0xff]
    %vm2906 = vcmask 130048
    %v2908 = vsel %vm2906, %v2905, 0
    %2910 = vmatprep.subr.mxu0 0.0
    %2911 = vmatpush1.msra.mxu0 0.0
    %2912 = vmatprep.subr.mxu0 0.0
    %2913 = vmatpush1.msra.mxu0 0.0
    %2914 = vmatprep.subr.mxu0 0.0
    %2915 = vmatpush1.msra.mxu0 0.0
    %2916 = vmatprep.subr.mxu0 0.0
    %2917 = vmatpush1.msra.mxu0 0.0
    %2918 = vmatprep.subr.mxu0 0.0
    %2919 = vmatpush1.msra.mxu0 0.0
    %2920 = vmatprep.subr.mxu0 0.0
    %2921 = vmatpush1.msra.mxu0 0.0
    %2922 = vmatprep.subr.mxu0 0.0
    %2923 = vmatpush1.msra.mxu0 0.0
    %2924 = vmatprep.subr.mxu0 0.0
    %2925 = vmatpush1.msra.mxu0 0.0
    %2926 = vmatprep.subr.mxu0 0.0
    %2927 = vmatpush1.msra.mxu0 0.0
    %2928 = vmatprep.subr.mxu0 0.0
    %2929 = vmatpush1.msra.mxu0 0.0
    %2930 = vmatprep.subr.mxu0 0.0
    %2931 = vmatpush1.msra.mxu0 0.0
    %2932 = vmatprep.subr.mxu0 0.0
    %2933 = vmatpush1.msra.mxu0 0.0
    %2934 = vmatprep.subr.mxu0 0.0
    %2935 = vmatpush1.msra.mxu0 0.0
    %2936 = vmatprep.subr.mxu0 0.0
    %2937 = vmatpush1.msra.mxu0 0.0
    %2938 = vmatprep.subr.mxu0 0.0
    %2939 = vmatpush1.msra.mxu0 %v2904
    %2940 = vmatprep.subr.mxu0 0.0
    %2941 = vmatpush1.msra.mxu0 %v2903
    %2942 = vmatprep.subr.mxu0 0.0
    %2943 = vmatpush2.msra.mxu0 0.0
    %2944 = vmatprep.subr.mxu0 0.0
    %2945 = vmatpush2.msra.mxu0 0.0
    %2946 = vmatprep.subr.mxu0 0.0
    %2947 = vmatpush2.msra.mxu0 0.0
    %2948 = vmatprep.subr.mxu0 0.0
    %2949 = vmatpush2.msra.mxu0 0.0
    %2950 = vmatprep.subr.mxu0 0.0
    %2951 = vmatpush2.msra.mxu0 0.0
    %2952 = vmatprep.subr.mxu0 0.0
    %2953 = vmatpush2.msra.mxu0 0.0
    %2954 = vmatprep.subr.mxu0 0.0
    %2955 = vmatpush2.msra.mxu0 0.0
    %2956 = vmatprep.subr.mxu0 0.0
    %2957 = vmatpush2.msra.mxu0 0.0
    %2958 = vmatprep.subr.mxu0 0.0
    %2959 = vmatpush2.msra.mxu0 0.0
    %2960 = vmatprep.subr.mxu0 0.0
    %2961 = vmatpush2.msra.mxu0 0.0
    %2962 = vmatprep.subr.mxu0 0.0
    %2963 = vmatpush2.msra.mxu0 0.0
    %2964 = vmatprep.subr.mxu0 0.0
    %2965 = vmatpush2.msra.mxu0 0.0
    %2966 = vmatprep.subr.mxu0 0.0
    %2967 = vmatpush2.msra.mxu0 0.0
    %2968 = vmatprep.subr.mxu0 0.0
    %2969 = vmatpush2.msra.mxu0 0.0
    %2970 = vmatprep.subr.mxu0 0.0
    %2971 = vmatpush2.msra.mxu0 0.0
    %2972 = vmatprep.subr.mxu0 0.0
    %2973 = vmatpush2.msra.mxu0 0.0
    %2974 = vmatprep.mubr.f32.mxu0 0.0
    %2975 = vmatmul.mubr.f32.gmra.mxu0 %v2908
    %v2976 = vpop.f32.mrf.mxu0
    %v2977 = vadd.f32 0.0, %v2976
    %v2978 = vpop.f32.mrf.mxu0
    %2979 = vdwg.mxu0
    %v2980 = vld [vmem:[#allocation11] sm:$0xff]
    %v2981 = vld [vmem:[#allocation11 + $0x8] sm:$0xff]
    %v2982 = vld [vmem:[#allocation11 + $0x10] sm:$0xff]
    %v2983 = vld [vmem:[#allocation11 + $0x18] sm:$0xff]
    %v2984 = vld [vmem:[#allocation11 + $0x20] sm:$0xff]
    %v2985 = vld [vmem:[#allocation11 + $0x28] sm:$0xff]
    %v2986 = vld [vmem:[#allocation11 + $0x30] sm:$0xff]
    %v2987 = vld [vmem:[#allocation11 + $0x38] sm:$0xff]
    %v2988 = vld [vmem:[#allocation11 + $0x40] sm:$0xff]
    %v2989 = vld [vmem:[#allocation11 + $0x48] sm:$0xff]
    %v2990 = vld [vmem:[#allocation11 + $0x50] sm:$0xff]
    %v2991 = vld [vmem:[#allocation11 + $0x58] sm:$0xff]
    %v2992 = vld [vmem:[#allocation11 + $0x60] sm:$0xff]
    %v2993 = vld [vmem:[#allocation11 + $0x68] sm:$0xff]
    %v2994 = vld [vmem:[#allocation11 + $0x70] sm:$0xff]
    %v2995 = vld [vmem:[#allocation11 + $0x78] sm:$0xff]
    %v2996 = vld [vmem:[#allocation13] sm:$0x1]
    %v2998 = vlaneseq
    %v2999 = vshrl.u32 %v2998, 7
    %v3000 = vsub.s32 0, %v2999
    %v3001 = vrot.slane %v2996, %v3000
    %3003 = vmatprep.subr.mxu0 0.0
    %3004 = vmatpush1.msra.mxu0 %v2995
    %3005 = vmatprep.subr.mxu0 0.0
    %3006 = vmatpush1.msra.mxu0 %v2994
    %3007 = vmatprep.subr.mxu0 0.0
    %3008 = vmatpush1.msra.mxu0 %v2993
    %3009 = vmatprep.subr.mxu0 0.0
    %3010 = vmatpush1.msra.mxu0 %v2992
    %3011 = vmatprep.subr.mxu0 0.0
    %3012 = vmatpush1.msra.mxu0 %v2991
    %3013 = vmatprep.subr.mxu0 0.0
    %3014 = vmatpush1.msra.mxu0 %v2990
    %3015 = vmatprep.subr.mxu0 0.0
    %3016 = vmatpush1.msra.mxu0 %v2989
    %3017 = vmatprep.subr.mxu0 0.0
    %3018 = vmatpush1.msra.mxu0 %v2988
    %3019 = vmatprep.subr.mxu0 0.0
    %3020 = vmatpush1.msra.mxu0 %v2987
    %3021 = vmatprep.subr.mxu0 0.0
    %3022 = vmatpush1.msra.mxu0 %v2986
    %3023 = vmatprep.subr.mxu0 0.0
    %3024 = vmatpush1.msra.mxu0 %v2985
    %3025 = vmatprep.subr.mxu0 0.0
    %3026 = vmatpush1.msra.mxu0 %v2984
    %3027 = vmatprep.subr.mxu0 0.0
    %3028 = vmatpush1.msra.mxu0 %v2983
    %3029 = vmatprep.subr.mxu0 0.0
    %3030 = vmatpush1.msra.mxu0 %v2982
    %3031 = vmatprep.subr.mxu0 0.0
    %3032 = vmatpush1.msra.mxu0 %v2981
    %3033 = vmatprep.subr.mxu0 0.0
    %3034 = vmatpush1.msra.mxu0 %v2980
    %3035 = vmatprep.subr.mxu0 0.0
    %3036 = vmatpush2.msra.mxu0 0.0
    %3037 = vmatprep.subr.mxu0 0.0
    %3038 = vmatpush2.msra.mxu0 0.0
    %3039 = vmatprep.subr.mxu0 0.0
    %3040 = vmatpush2.msra.mxu0 0.0
    %3041 = vmatprep.subr.mxu0 0.0
    %3042 = vmatpush2.msra.mxu0 0.0
    %3043 = vmatprep.subr.mxu0 0.0
    %3044 = vmatpush2.msra.mxu0 0.0
    %3045 = vmatprep.subr.mxu0 0.0
    %3046 = vmatpush2.msra.mxu0 0.0
    %3047 = vmatprep.subr.mxu0 0.0
    %3048 = vmatpush2.msra.mxu0 0.0
    %3049 = vmatprep.subr.mxu0 0.0
    %3050 = vmatpush2.msra.mxu0 0.0
    %3051 = vmatprep.subr.mxu0 0.0
    %3052 = vmatpush2.msra.mxu0 0.0
    %3053 = vmatprep.subr.mxu0 0.0
    %3054 = vmatpush2.msra.mxu0 0.0
    %3055 = vmatprep.subr.mxu0 0.0
    %3056 = vmatpush2.msra.mxu0 0.0
    %3057 = vmatprep.subr.mxu0 0.0
    %3058 = vmatpush2.msra.mxu0 0.0
    %3059 = vmatprep.subr.mxu0 0.0
    %3060 = vmatpush2.msra.mxu0 0.0
    %3061 = vmatprep.subr.mxu0 0.0
    %3062 = vmatpush2.msra.mxu0 0.0
    %3063 = vmatprep.subr.mxu0 0.0
    %3064 = vmatpush2.msra.mxu0 0.0
    %3065 = vmatprep.subr.mxu0 0.0
    %3066 = vmatpush2.msra.mxu0 0.0
    %3067 = vmatprep.mubr.f32.mxu0 0.0
    %3068 = vmatmul.mubr.f32.gmra.mxu0 %v2977
    %v3069 = vpop.f32.mrf.mxu0
    %v3070 = vadd.f32 %v3001, %v3069
    %v3071 = vpop.f32.mrf.mxu0
    %3072 = vdwg.mxu0
    %v3073 = vld [vmem:[%s19] sm:$0xff]
    %3074 = vmax.xlane.f32.xlu0 %v3070
    %v3075 = vpop.xlane.xlu0 %3074
    %v3076 = vsub.f32 %v3070, %v3075
    %v3077 = vmul.f32 %v3076, 1.442695
    %v3078 = vpow.pop %v3077
    %3079 = vadd.xlane.f32.xlu0 %v3078
    %v3080 = vpop.xlane.xlu0 %3079
    %v3081 = vlog2.pop %v3080
    %v3082 = vmul.f32 %v3081, 0.6931472
    %v3083 = vadd.f32 %v3082, %v3075
    %v3084 = vlaneseq
    %v3085 = vand.u32 %v3084, 127
    %3086 = vset.pattern.permute.xlu0 0
    %3087 = vperm.xlu0 %3086, %v3073
    %v3088 = vpop.permute.xlu0 %3087
    %vm3089 = vcmp.eq.s32.totalorder %v3085, %v3088
    %v3090 = vsel %vm3089, 1, 0
    %v3091 = vcvt.s32.f32 %v3090
    %v3092 = vmul.f32 %v3091, %v3070
    %3093 = vadd.xlane.f32.xlu0 %v3092
    %v3094 = vpop.xlane.xlu0 %3093
    %vm3095 = vcmp.ne.s32.totalorder %v3073, 4294967295
    %v3096 = vsel %vm3095, 1, 0
    %v3097 = vcvt.s32.f32 %v3096
    %v3098 = vsub.f32 %v3083, %v3094
    %v3099 = vmul.f32 %v3098, %v3097
    %vm3100 = vcmask 7168
    %v3101 = vsel %vm3100, %v3099, 0.0
    %3102 = vadd.xlane.f32.xlu0 %v3101
    %v3103 = vpop.xlane.xlu0 %3102
    %v3104 = vrot.slane %v3103, 4
    %v3105 = vadd.f32 %v3103, %v3104
    %v3106 = vrot.slane %v3105, 2
    %v3107 = vadd.f32 %v3105, %v3106
    %v3108 = vrot.slane %v3107, 1
    %v3109 = vadd.f32 %v3107, %v3108
    %s3110 = vtos %v3109
    %v3111 = vsel %vm3100, %v3097, 0.0
    %3112 = vadd.xlane.f32.xlu0 %v3111
    %v3113 = vpop.xlane.xlu0 %3112
    %v3114 = vrot.slane %v3113, 4
    %v3115 = vadd.f32 %v3113, %v3114
    %v3116 = vrot.slane %v3115, 2
    %v3117 = vadd.f32 %v3115, %v3116
    %v3118 = vrot.slane %v3117, 1
    %v3119 = vadd.f32 %v3117, %v3118
    %s3120 = vtos %v3119
    %v3121 = vstv %s3120
    %v3122 = vrcp.pop %v3121
    %s3123 = vtos %v3122
    %s3124 = smul.f32 %s3110, %s3123
    %s3125 = scalar_lea.smem [#allocation14], 0
    %3126 = sst [smem:[%s3125]] %s3124
    // Predicated region
    $region110: #{bert_ner_forward.1} parent=1 // pred_check
      _
    $region111: #{bert_ner_forward.1} parent=1 // pred_check_branch
      %3128 = sbr.rel (0) target = $region113
    $region112: #{bert_ner_forward.1} parent=1 // pred_region
      %s3130 = ssub.s32 16, 16
      %3131 = vsyncadd [#allocation4], %s3130
      %3134 = dma.smem_to_hbm [#allocation14], 16, %s20, [#allocation4]
    $region113: #{bert_ner_forward.1} parent=1 // pred_fallthru
      _
    // Predicated region
    $region114: #{bert_ner_forward.1} parent=1 // pred_check
      _
    $region115: #{bert_ner_forward.1} parent=1 // pred_check_branch
      %3136 = sbr.rel (0) target = $region117
    $region116: #{bert_ner_forward.1} parent=1 // pred_region
      %3137 = dma.done [#allocation4], 16
    $region117: #{bert_ner_forward.1} parent=1 // pred_fallthru
      _
    %3138 = sfence
    %3139 = vsyncpa [#allocation3], 1
    %3140 = vsyncpa [#allocation6], 1
    %3141 = vsyncpa [#allocation9], 1
    %3142 = vsyncpa [#allocation12], 1
    %3143 = vsyncpa [#allocation4], 1

</llo_original>
